<compile_context>
chip_gen: v7x
topology: tpu7x:2x2x1
jax: 0.10.0
libtpu: 0.0.40
codegen_flags: <defaults>
</compile_context>

<pallas_src>
import jax
import jax.numpy as jnp
from jax.experimental import pallas as pl
from jax.experimental.pallas import tpu as pltpu


def _round_up(n, m):
    return ((n + m - 1) // m) * m


# ------------------------------- kernel -------------------------------------
def _iwae_fwd_kernel(xc_ref, c_ref, eps_ref,
                     w1_ref, b1_ref, w2_ref, b2_ref,
                     w3132_ref, b3132_ref,
                     w3z_ref, w3c_ref, b3_ref,
                     w4_ref, b4_ref, w5_ref, b5_ref,
                     probs_ref, mulogvar_ref, z_ref):
    cd = w1_ref.dtype            # compute dtype for MXU inputs (bf16 or f32)
    f32 = jnp.float32
    L = w3z_ref.shape[0]
    F = w5_ref.shape[1]
    K = eps_ref.shape[1] // L

    # ---------------- encoder: fc1 -> relu -> fc2 -> relu -> fused fc31|fc32
    xc = xc_ref[...]                                             # (TB, F+C)
    h1 = jnp.maximum(
        jnp.dot(xc, w1_ref[...], preferred_element_type=f32) + b1_ref[...], 0.0)
    h2 = jnp.maximum(
        jnp.dot(h1.astype(cd), w2_ref[...], preferred_element_type=f32)
        + b2_ref[...], 0.0)
    ml = jnp.dot(h2.astype(cd), w3132_ref[...], preferred_element_type=f32) \
        + b3132_ref[...]                                         # (TB, 2L)
    mulogvar_ref[...] = ml       # single fused store; mu/logvar split in wrapper

    mu = ml[:, :L]                                               # (TB, L) f32
    std = jnp.exp(0.5 * ml[:, L:2 * L])                          # (TB, L) f32

    # class contribution to fc3: computed once per tile, reused for all K
    c_proj = jnp.dot(c_ref[...], w3c_ref[...], preferred_element_type=f32) \
        + b3_ref[...]                                            # (TB, H) f32

    eps = eps_ref[...]                                           # (TB, K*L) f32
    w3z = w3z_ref[...]
    w4 = w4_ref[...]
    b4 = b4_ref[...]
    w5 = w5_ref[...]
    b5 = b5_ref[...]

    # ---------------- reparameterize + decoder, one importance sample at a time
    # Keeps the decoder working set O(TB*H) instead of O(TB*K*H) and makes the
    # big z / probs outputs lane-dense (TB, K*L) / (TB, K*F) with no reshapes.
    for k in range(K):
        z_k = mu + std * eps[:, k * L:(k + 1) * L]               # (TB, L) f32
        z_ref[:, k * L:(k + 1) * L] = z_k
        h3 = jnp.maximum(
            jnp.dot(z_k.astype(cd), w3z, preferred_element_type=f32) + c_proj,
            0.0)
        h4 = jnp.maximum(
            jnp.dot(h3.astype(cd), w4, preferred_element_type=f32) + b4, 0.0)
        logits = jnp.dot(h4.astype(cd), w5, preferred_element_type=f32) + b5
        probs = 1.0 / (1.0 + jnp.exp(-logits))                   # exact sigmoid
        probs_ref[:, k * F:(k + 1) * F] = probs.astype(probs_ref.dtype)


# ------------------------------- wrapper -------------------------------------
def bernoulli_iwae_forward(params, x, c, eps, *, block_b=256,
                           compute_dtype=jnp.bfloat16,
                           probs_dtype=jnp.float32,
                           vmem_limit_bytes=None):
    """Returns (probs (B,K,F), mu_z (B,L), logvar_z (B,L), z (B,K,L)).

    q_z_g_x of the PyTorch module is fully described by (mu_z, exp(0.5*logvar_z));
    eps is the N(0,1) rsample noise, drawn in JAX and passed in.
    """
    f32 = jnp.float32
    B, F = x.shape
    C = c.shape[1]
    K, L = eps.shape[1], eps.shape[2]
    H = params["w1"].shape[1]

    cd = jnp.dtype(compute_dtype)
    pd = jnp.dtype(probs_dtype)

    # --- generation-aware VMEM budget (v7x has 64 MiB/TC, v5e/v6e 128 MiB) ----
    if vmem_limit_bytes is None:
        try:
            cap = int(pltpu.get_tpu_info().vmem_capacity_bytes)
        except Exception:
            cap = 128 * 1024 * 1024
        vmem_limit_bytes = min(int(0.7 * cap), 96 * 1024 * 1024)

    # weight footprint (Mosaic default pipeline may keep up to 2 copies)
    wbytes = 2 * ((F + C) * H + H * H + 2 * H * L + L * H + C * H
                  + H * H + H * F) * cd.itemsize
    wbytes += 2 * (H + H + 2 * L + H + H + F) * 4

    def _tile_bytes(tb):
        io = (tb * (F + 2 * C) * cd.itemsize          # xc + c tiles
              + tb * K * L * 4                        # eps tile
              + tb * K * F * pd.itemsize              # probs tile
              + tb * (K * L + 2 * L) * 4)             # z + mu|logvar tiles
        temps = 4 * tb * H * 4                        # h1/h2/c_proj/per-k temps
        return 2 * io + temps + wbytes                # double-buffered I/O

    # --- batch tile selection --------------------------------------------------
    B8 = _round_up(B, 8)
    TB = min(int(block_b), B8)
    if B8 >= 16 and TB >= B8:
        # guarantee >= 2 parallel grid steps so both TensorCores (v7x) get work
        TB = max(8, _round_up(-(-B8 // 2), 8))
    while TB > 8 and _tile_bytes(TB) > int(0.8 * vmem_limit_bytes):
        TB = max(8, _round_up(TB // 2, 8))

    B_pad = _round_up(B, TB)
    if B_pad != B:
        pad = B_pad - B
        x = jnp.pad(x, ((0, pad), (0, 0)))
        c = jnp.pad(c, ((0, pad), (0, 0)))
        eps = jnp.pad(eps, ((0, pad), (0, 0), (0, 0)))

    # --- wrapper-side layout plumbing (cheap XLA, keeps the kernel lane-dense)
    xc = jnp.concatenate([x, c], axis=1).astype(cd)              # (B, F+C)
    c_in = c.astype(cd)                                          # (B, C)
    eps_flat = eps.reshape(B_pad, K * L).astype(f32)             # (B, K*L)

    # fused fc31|fc32; weights in compute dtype, biases in f32
    w3132 = jnp.concatenate([params["w31"], params["w32"]], axis=1).astype(cd)
    b3132 = jnp.concatenate([params["b31"], params["b32"]], axis=1).astype(f32)
    W = dict(
        w1=params["w1"].astype(cd), b1=params["b1"].astype(f32),
        w2=params["w2"].astype(cd), b2=params["b2"].astype(f32),
        w3132=w3132, b3132=b3132,
        w3z=params["w3z"].astype(cd), w3c=params["w3c"].astype(cd),
        b3=params["b3"].astype(f32),
        w4=params["w4"].astype(cd), b4=params["b4"].astype(f32),
        w5=params["w5"].astype(cd), b5=params["b5"].astype(f32),
    )

    row = lambda i: (i, 0)       # batch-tiled operands
    const = lambda i: (0, 0)     # weights/biases: fetched once, VMEM-resident

    def wspec(p):
        return pl.BlockSpec(p.shape, const)

    grid = (B_pad // TB,)
    in_specs = [
        pl.BlockSpec((TB, F + C), row),          # xc
        pl.BlockSpec((TB, C), row),              # c (for the decoder's c-path)
        pl.BlockSpec((TB, K * L), row),          # eps, lane-dense
        wspec(W["w1"]), wspec(W["b1"]),
        wspec(W["w2"]), wspec(W["b2"]),
        wspec(W["w3132"]), wspec(W["b3132"]),
        wspec(W["w3z"]), wspec(W["w3c"]), wspec(W["b3"]),
        wspec(W["w4"]), wspec(W["b4"]),
        wspec(W["w5"]), wspec(W["b5"]),
    ]
    out_specs = (
        pl.BlockSpec((TB, K * F), row),          # probs, lane-dense
        pl.BlockSpec((TB, 2 * L), row),          # mu|logvar fused
        pl.BlockSpec((TB, K * L), row),          # z, lane-dense
    )
    out_shape = (
        jax.ShapeDtypeStruct((B_pad, K * F), pd),
        jax.ShapeDtypeStruct((B_pad, 2 * L), f32),
        jax.ShapeDtypeStruct((B_pad, K * L), f32),
    )

    probs_flat, mulogvar, z_flat = pl.pallas_call(
        _iwae_fwd_kernel,
        out_shape=out_shape,
        grid_spec=pltpu.PrefetchScalarGridSpec(
            num_scalar_prefetch=0,
            grid=grid,
            in_specs=in_specs,
            out_specs=out_specs,
        ),
        compiler_params=pltpu.CompilerParams(
            dimension_semantics=("parallel",),
            vmem_limit_bytes=int(vmem_limit_bytes)),
    )(xc, c_in, eps_flat,
      W["w1"], W["b1"], W["w2"], W["b2"],
      W["w3132"], W["b3132"],
      W["w3z"], W["w3c"], W["b3"],
      W["w4"], W["b4"], W["w5"], W["b5"])

    probs = probs_flat.reshape(B_pad, K, F)[:B]
    mu = mulogvar[:B, :L]
    logvar = mulogvar[:B, L:2 * L]
    z = z_flat.reshape(B_pad, K, L)[:B]
    return probs, mu, logvar, z


# ----------------------------- parameter setup ------------------------------
def _linear_init(key, fan_in, fan_out):
    """PyTorch nn.Linear default init: U(-1/sqrt(fan_in), 1/sqrt(fan_in))."""
    kw, kb = jax.random.split(key)
    bound = 1.0 / float(fan_in) ** 0.5
    w = jax.random.uniform(kw, (fan_in, fan_out), jnp.float32, -bound, bound)
    b = jax.random.uniform(kb, (1, fan_out), jnp.float32, -bound, bound)
    return w, b


def init_params(key, feature_size, class_size, latent_size, hidden_size):
    keys = jax.random.split(key, 7)
    w1, b1 = _linear_init(keys[0], feature_size + class_size, hidden_size)   # fc1
    w2, b2 = _linear_init(keys[1], hidden_size, hidden_size)                 # fc2
    w31, b31 = _linear_init(keys[2], hidden_size, latent_size)               # fc31
    w32, b32 = _linear_init(keys[3], hidden_size, latent_size)               # fc32
    w3, b3 = _linear_init(keys[4], latent_size + class_size, hidden_size)    # fc3
    w4, b4 = _linear_init(keys[5], hidden_size, hidden_size)                 # fc4
    w5, b5 = _linear_init(keys[6], hidden_size, feature_size)                # fc5
    return dict(
        w1=w1, b1=b1, w2=w2, b2=b2,
        w31=w31, b31=b31, w32=w32, b32=b32,
        w3z=w3[:latent_size], w3c=w3[latent_size:], b3=b3,
        w4=w4, b4=b4, w5=w5, b5=b5,
    )


# ----------------------------- pure-JAX reference ---------------------------
def reference_forward(params, x, c, eps, compute_dtype=jnp.float32):
    cd = compute_dtype
    f32 = jnp.float32
    B, K, _ = eps.shape
    xc = jnp.concatenate([x, c], axis=1).astype(cd)
    h1 = jax.nn.relu(jnp.dot(xc, params["w1"].astype(cd),
                             preferred_element_type=f32) + params["b1"])
    h2 = jax.nn.relu(jnp.dot(h1.astype(cd), params["w2"].astype(cd),
                             preferred_element_type=f32) + params["b2"])
    mu = jnp.dot(h2.astype(cd), params["w31"].astype(cd),
                 preferred_element_type=f32) + params["b31"]
    logvar = jnp.dot(h2.astype(cd), params["w32"].astype(cd),
                     preferred_element_type=f32) + params["b32"]
    std = jnp.exp(0.5 * logvar)
    z = mu[:, None, :] + std[:, None, :] * eps
    c_rep = jnp.broadcast_to(c[:, None, :], (B, K, c.shape[1]))
    w3 = jnp.concatenate([params["w3z"], params["w3c"]], axis=0).astype(cd)
    dec_in = jnp.concatenate([z, c_rep], axis=-1).astype(cd)
    h3 = jax.nn.relu(jnp.dot(dec_in, w3, preferred_element_type=f32) + params["b3"])
    h4 = jax.nn.relu(jnp.dot(h3.astype(cd), params["w4"].astype(cd),
                             preferred_element_type=f32) + params["b4"])
    probs = jax.nn.sigmoid(jnp.dot(h4.astype(cd), params["w5"].astype(cd),
                                   preferred_element_type=f32) + params["b5"])
    return probs, mu, logvar, z


if __name__ == "__main__":
    # small shapes consistent with the module's __init__
    # batch, feature, class, latent, hidden, num_samples (k)
    B, F, C, L, H, K = 12, 16, 4, 8, 32, 8
    key = jax.random.PRNGKey(0)
    k_params, k_x, k_c, k_eps = jax.random.split(key, 4)

    params = init_params(k_params, F, C, L, H)
    x = (jax.random.uniform(k_x, (B, F)) > 0.5).astype(jnp.float32)       # binary data
    c = jax.nn.one_hot(jax.random.randint(k_c, (B,), 0, C), C, dtype=jnp.float32)
    eps = jax.random.normal(k_eps, (B, K, L), dtype=jnp.float32)          # rsample noise

    # --- f32 compute path: small batch tile -> 2-step "parallel" grid + padding
    outs = jax.block_until_ready(
        bernoulli_iwae_forward(params, x, c, eps, block_b=8,
                               compute_dtype=jnp.float32))
    refs = reference_forward(params, x, c, eps, compute_dtype=jnp.float32)
    tols = (dict(atol=1e-4, rtol=1e-4),   # probs (exact sigmoid now)
            dict(atol=1e-4, rtol=1e-4),   # mu
            dict(atol=1e-4, rtol=1e-4),   # logvar
            dict(atol=1e-4, rtol=1e-4))   # z
    for o, r, t in zip(outs, refs, tols):
        assert o.shape == r.shape and o.dtype == r.dtype, (o.shape, r.shape)
        assert jnp.allclose(o, r, **t), float(jnp.max(jnp.abs(o - r)))

    # --- bf16 weights/activations on the MXU (f32 accumulation), default tile --
    outs_bf = jax.block_until_ready(
        bernoulli_iwae_forward(params, x, c, eps, compute_dtype=jnp.bfloat16))
    refs_bf = reference_forward(params, x, c, eps, compute_dtype=jnp.bfloat16)
    for o, r in zip(outs_bf, refs_bf):
        assert o.shape == r.shape and o.dtype == r.dtype
        assert jnp.allclose(o, r, atol=2e-2, rtol=2e-2), float(jnp.max(jnp.abs(o - r)))

    print("KERNEL_OK")
</pallas_src>

<mosaic_0001>
module attributes {stable_mosaic.version = 11 : i64} {
  func.func @_iwae_fwd_kernel(%arg0: i32, %arg1: memref<8x20xf32, #tpu.memory_space<vmem>>, %arg2: memref<8x4xf32, #tpu.memory_space<vmem>>, %arg3: memref<8x64xf32, #tpu.memory_space<vmem>>, %arg4: memref<20x32xf32, #tpu.memory_space<vmem>>, %arg5: memref<1x32xf32, #tpu.memory_space<vmem>>, %arg6: memref<32x32xf32, #tpu.memory_space<vmem>>, %arg7: memref<1x32xf32, #tpu.memory_space<vmem>>, %arg8: memref<32x16xf32, #tpu.memory_space<vmem>>, %arg9: memref<1x16xf32, #tpu.memory_space<vmem>>, %arg10: memref<8x32xf32, #tpu.memory_space<vmem>>, %arg11: memref<4x32xf32, #tpu.memory_space<vmem>>, %arg12: memref<1x32xf32, #tpu.memory_space<vmem>>, %arg13: memref<32x32xf32, #tpu.memory_space<vmem>>, %arg14: memref<1x32xf32, #tpu.memory_space<vmem>>, %arg15: memref<32x16xf32, #tpu.memory_space<vmem>>, %arg16: memref<1x16xf32, #tpu.memory_space<vmem>>, %arg17: memref<8x128xf32, #tpu.memory_space<vmem>>, %arg18: memref<8x16xf32, #tpu.memory_space<vmem>>, %arg19: memref<8x64xf32, #tpu.memory_space<vmem>>) attributes {dimension_semantics = [#tpu.dimension_semantics<parallel>], iteration_bounds = array<i64: 2>, scalar_prefetch = 0 : i64, scratch_operands = 0 : i64, tpu.core_type = #tpu.core_type<tc>, window_params = [{transform_indices = @transform_0, window_bounds = array<i64: 8, 20>}, {transform_indices = @transform_1, window_bounds = array<i64: 8, 4>}, {transform_indices = @transform_2, window_bounds = array<i64: 8, 64>}, {pipeline_mode = #tpu.pipeline_mode<synchronous>, transform_indices = @transform_3, window_bounds = array<i64: 20, 32>}, {pipeline_mode = #tpu.pipeline_mode<synchronous>, transform_indices = @transform_4, window_bounds = array<i64: 1, 32>}, {pipeline_mode = #tpu.pipeline_mode<synchronous>, transform_indices = @transform_5, window_bounds = array<i64: 32, 32>}, {pipeline_mode = #tpu.pipeline_mode<synchronous>, transform_indices = @transform_6, window_bounds = array<i64: 1, 32>}, {pipeline_mode = #tpu.pipeline_mode<synchronous>, transform_indices = @transform_7, window_bounds = array<i64: 32, 16>}, {pipeline_mode = #tpu.pipeline_mode<synchronous>, transform_indices = @transform_8, window_bounds = array<i64: 1, 16>}, {pipeline_mode = #tpu.pipeline_mode<synchronous>, transform_indices = @transform_9, window_bounds = array<i64: 8, 32>}, {pipeline_mode = #tpu.pipeline_mode<synchronous>, transform_indices = @transform_10, window_bounds = array<i64: 4, 32>}, {pipeline_mode = #tpu.pipeline_mode<synchronous>, transform_indices = @transform_11, window_bounds = array<i64: 1, 32>}, {pipeline_mode = #tpu.pipeline_mode<synchronous>, transform_indices = @transform_12, window_bounds = array<i64: 32, 32>}, {pipeline_mode = #tpu.pipeline_mode<synchronous>, transform_indices = @transform_13, window_bounds = array<i64: 1, 32>}, {pipeline_mode = #tpu.pipeline_mode<synchronous>, transform_indices = @transform_14, window_bounds = array<i64: 32, 16>}, {pipeline_mode = #tpu.pipeline_mode<synchronous>, transform_indices = @transform_15, window_bounds = array<i64: 1, 16>}, {transform_indices = @transform_16, window_bounds = array<i64: 8, 128>}, {transform_indices = @transform_17, window_bounds = array<i64: 8, 16>}, {transform_indices = @transform_18, window_bounds = array<i64: 8, 64>}]} {
    %c0 = arith.constant 0 : index
    %c0_0 = arith.constant 0 : index
    %0 = vector.load %arg1[%c0, %c0_0] : memref<8x20xf32, #tpu.memory_space<vmem>>, vector<8x20xf32>
    %c0_1 = arith.constant 0 : index
    %c0_2 = arith.constant 0 : index
    %1 = vector.load %arg4[%c0_1, %c0_2] : memref<20x32xf32, #tpu.memory_space<vmem>>, vector<20x32xf32>
    %cst = arith.constant dense<0.000000e+00> : vector<8x32xf32>
    %2 = tpu.matmul %0, %1, %cst {dimension_numbers = #tpu.dot_dimension_numbers<[1], [0], [0], [1], [0, 0, 1, 1], [], []>} : vector<8x20xf32>, vector<20x32xf32>, vector<8x32xf32> -> vector<8x32xf32>
    %c0_3 = arith.constant 0 : index
    %c0_4 = arith.constant 0 : index
    %3 = vector.load %arg5[%c0_3, %c0_4] : memref<1x32xf32, #tpu.memory_space<vmem>>, vector<1x32xf32>
    %4 = vector.broadcast %3 : vector<1x32xf32> to vector<8x32xf32>
    %5 = arith.addf %2, %4 : vector<8x32xf32>
    %cst_5 = arith.constant 0.000000e+00 : f32
    %6 = vector.broadcast %cst_5 : f32 to vector<8x32xf32>
    %7 = arith.maximumf %5, %6 : vector<8x32xf32>
    %c0_6 = arith.constant 0 : index
    %c0_7 = arith.constant 0 : index
    %8 = vector.load %arg6[%c0_6, %c0_7] : memref<32x32xf32, #tpu.memory_space<vmem>>, vector<32x32xf32>
    %cst_8 = arith.constant dense<0.000000e+00> : vector<8x32xf32>
    %9 = tpu.matmul %7, %8, %cst_8 {dimension_numbers = #tpu.dot_dimension_numbers<[1], [0], [0], [1], [0, 0, 1, 1], [], []>} : vector<8x32xf32>, vector<32x32xf32>, vector<8x32xf32> -> vector<8x32xf32>
    %c0_9 = arith.constant 0 : index
    %c0_10 = arith.constant 0 : index
    %10 = vector.load %arg7[%c0_9, %c0_10] : memref<1x32xf32, #tpu.memory_space<vmem>>, vector<1x32xf32>
    %11 = vector.broadcast %10 : vector<1x32xf32> to vector<8x32xf32>
    %12 = arith.addf %9, %11 : vector<8x32xf32>
    %cst_11 = arith.constant 0.000000e+00 : f32
    %13 = vector.broadcast %cst_11 : f32 to vector<8x32xf32>
    %14 = arith.maximumf %12, %13 : vector<8x32xf32>
    %c0_12 = arith.constant 0 : index
    %c0_13 = arith.constant 0 : index
    %15 = vector.load %arg8[%c0_12, %c0_13] : memref<32x16xf32, #tpu.memory_space<vmem>>, vector<32x16xf32>
    %cst_14 = arith.constant dense<0.000000e+00> : vector<8x16xf32>
    %16 = tpu.matmul %14, %15, %cst_14 {dimension_numbers = #tpu.dot_dimension_numbers<[1], [0], [0], [1], [0, 0, 1, 1], [], []>} : vector<8x32xf32>, vector<32x16xf32>, vector<8x16xf32> -> vector<8x16xf32>
    %c0_15 = arith.constant 0 : index
    %c0_16 = arith.constant 0 : index
    %17 = vector.load %arg9[%c0_15, %c0_16] : memref<1x16xf32, #tpu.memory_space<vmem>>, vector<1x16xf32>
    %18 = vector.broadcast %17 : vector<1x16xf32> to vector<8x16xf32>
    %19 = arith.addf %16, %18 : vector<8x16xf32>
    %c0_17 = arith.constant 0 : index
    %c0_18 = arith.constant 0 : index
    %20 = vector.load %arg18[%c0_17, %c0_18] : memref<8x16xf32, #tpu.memory_space<vmem>>, vector<8x16xf32>
    tpu.vector_store %arg18[%c0_17, %c0_18], %19 {strides = array<i32>} : memref<8x16xf32, #tpu.memory_space<vmem>>, vector<8x16xf32>,
    %21 = vector.extract_strided_slice %19 {offsets = [0, 0], sizes = [8, 8], strides = [1, 1]} : vector<8x16xf32> to vector<8x8xf32>
    %22 = vector.extract_strided_slice %19 {offsets = [0, 8], sizes = [8, 8], strides = [1, 1]} : vector<8x16xf32> to vector<8x8xf32>
    %cst_19 = arith.constant 5.000000e-01 : f32
    %23 = vector.broadcast %cst_19 : f32 to vector<8x8xf32>
    %24 = arith.mulf %23, %22 : vector<8x8xf32>
    %25 = math.exp %24 : vector<8x8xf32>
    %c0_20 = arith.constant 0 : index
    %c0_21 = arith.constant 0 : index
    %26 = vector.load %arg2[%c0_20, %c0_21] : memref<8x4xf32, #tpu.memory_space<vmem>>, vector<8x4xf32>
    %c0_22 = arith.constant 0 : index
    %c0_23 = arith.constant 0 : index
    %27 = vector.load %arg11[%c0_22, %c0_23] : memref<4x32xf32, #tpu.memory_space<vmem>>, vector<4x32xf32>
    %cst_24 = arith.constant dense<0.000000e+00> : vector<8x32xf32>
    %28 = tpu.matmul %26, %27, %cst_24 {dimension_numbers = #tpu.dot_dimension_numbers<[1], [0], [0], [1], [0, 0, 1, 1], [], []>} : vector<8x4xf32>, vector<4x32xf32>, vector<8x32xf32> -> vector<8x32xf32>
    %c0_25 = arith.constant 0 : index
    %c0_26 = arith.constant 0 : index
    %29 = vector.load %arg12[%c0_25, %c0_26] : memref<1x32xf32, #tpu.memory_space<vmem>>, vector<1x32xf32>
    %30 = vector.broadcast %29 : vector<1x32xf32> to vector<8x32xf32>
    %31 = arith.addf %28, %30 : vector<8x32xf32>
    %c0_27 = arith.constant 0 : index
    %c0_28 = arith.constant 0 : index
    %32 = vector.load %arg3[%c0_27, %c0_28] : memref<8x64xf32, #tpu.memory_space<vmem>>, vector<8x64xf32>
    %c0_29 = arith.constant 0 : index
    %c0_30 = arith.constant 0 : index
    %33 = vector.load %arg10[%c0_29, %c0_30] : memref<8x32xf32, #tpu.memory_space<vmem>>, vector<8x32xf32>
    %c0_31 = arith.constant 0 : index
    %c0_32 = arith.constant 0 : index
    %34 = vector.load %arg13[%c0_31, %c0_32] : memref<32x32xf32, #tpu.memory_space<vmem>>, vector<32x32xf32>
    %c0_33 = arith.constant 0 : index
    %c0_34 = arith.constant 0 : index
    %35 = vector.load %arg14[%c0_33, %c0_34] : memref<1x32xf32, #tpu.memory_space<vmem>>, vector<1x32xf32>
    %c0_35 = arith.constant 0 : index
    %c0_36 = arith.constant 0 : index
    %36 = vector.load %arg15[%c0_35, %c0_36] : memref<32x16xf32, #tpu.memory_space<vmem>>, vector<32x16xf32>
    %c0_37 = arith.constant 0 : index
    %c0_38 = arith.constant 0 : index
    %37 = vector.load %arg16[%c0_37, %c0_38] : memref<1x16xf32, #tpu.memory_space<vmem>>, vector<1x16xf32>
    %38 = vector.extract_strided_slice %32 {offsets = [0, 0], sizes = [8, 8], strides = [1, 1]} : vector<8x64xf32> to vector<8x8xf32>
    %39 = arith.mulf %25, %38 : vector<8x8xf32>
    %40 = arith.addf %21, %39 : vector<8x8xf32>
    %c0_39 = arith.constant 0 : index
    %c0_40 = arith.constant 0 : index
    %41 = vector.load %arg19[%c0_39, %c0_40] : memref<8x64xf32, #tpu.memory_space<vmem>>, vector<8x8xf32>
    tpu.vector_store %arg19[%c0_39, %c0_40], %40 {strides = array<i32>} : memref<8x64xf32, #tpu.memory_space<vmem>>, vector<8x8xf32>,
    %cst_41 = arith.constant dense<0.000000e+00> : vector<8x32xf32>
    %42 = tpu.matmul %40, %33, %cst_41 {dimension_numbers = #tpu.dot_dimension_numbers<[1], [0], [0], [1], [0, 0, 1, 1], [], []>} : vector<8x8xf32>, vector<8x32xf32>, vector<8x32xf32> -> vector<8x32xf32>
    %43 = arith.addf %42, %31 : vector<8x32xf32>
    %cst_42 = arith.constant 0.000000e+00 : f32
    %44 = vector.broadcast %cst_42 : f32 to vector<8x32xf32>
    %45 = arith.maximumf %43, %44 : vector<8x32xf32>
    %cst_43 = arith.constant dense<0.000000e+00> : vector<8x32xf32>
    %46 = tpu.matmul %45, %34, %cst_43 {dimension_numbers = #tpu.dot_dimension_numbers<[1], [0], [0], [1], [0, 0, 1, 1], [], []>} : vector<8x32xf32>, vector<32x32xf32>, vector<8x32xf32> -> vector<8x32xf32>
    %47 = vector.broadcast %35 : vector<1x32xf32> to vector<8x32xf32>
    %48 = arith.addf %46, %47 : vector<8x32xf32>
    %cst_44 = arith.constant 0.000000e+00 : f32
    %49 = vector.broadcast %cst_44 : f32 to vector<8x32xf32>
    %50 = arith.maximumf %48, %49 : vector<8x32xf32>
    %cst_45 = arith.constant dense<0.000000e+00> : vector<8x16xf32>
    %51 = tpu.matmul %50, %36, %cst_45 {dimension_numbers = #tpu.dot_dimension_numbers<[1], [0], [0], [1], [0, 0, 1, 1], [], []>} : vector<8x32xf32>, vector<32x16xf32>, vector<8x16xf32> -> vector<8x16xf32>
    %52 = vector.broadcast %37 : vector<1x16xf32> to vector<8x16xf32>
    %53 = arith.addf %51, %52 : vector<8x16xf32>
    %cst_46 = arith.constant 0.000000e+00 : f32
    %54 = vector.broadcast %cst_46 : f32 to vector<8x16xf32>
    %55 = arith.subf %54, %53 : vector<8x16xf32>
    %56 = math.exp %55 : vector<8x16xf32>
    %cst_47 = arith.constant 1.000000e+00 : f32
    %57 = vector.broadcast %cst_47 : f32 to vector<8x16xf32>
    %58 = arith.addf %57, %56 : vector<8x16xf32>
    %cst_48 = arith.constant 1.000000e+00 : f32
    %59 = vector.broadcast %cst_48 : f32 to vector<8x16xf32>
    %60 = arith.divf %59, %58 : vector<8x16xf32>
    %c0_49 = arith.constant 0 : index
    %c0_50 = arith.constant 0 : index
    %61 = vector.load %arg17[%c0_49, %c0_50] : memref<8x128xf32, #tpu.memory_space<vmem>>, vector<8x16xf32>
    tpu.vector_store %arg17[%c0_49, %c0_50], %60 {strides = array<i32>} : memref<8x128xf32, #tpu.memory_space<vmem>>, vector<8x16xf32>,
    %62 = vector.extract_strided_slice %32 {offsets = [0, 8], sizes = [8, 8], strides = [1, 1]} : vector<8x64xf32> to vector<8x8xf32>
    %63 = arith.mulf %25, %62 : vector<8x8xf32>
    %64 = arith.addf %21, %63 : vector<8x8xf32>
    %c0_51 = arith.constant 0 : index
    %c8 = arith.constant 8 : index
    %65 = vector.load %arg19[%c0_51, %c8] : memref<8x64xf32, #tpu.memory_space<vmem>>, vector<8x8xf32>
    tpu.vector_store %arg19[%c0_51, %c8], %64 {strides = array<i32>} : memref<8x64xf32, #tpu.memory_space<vmem>>, vector<8x8xf32>,
    %cst_52 = arith.constant dense<0.000000e+00> : vector<8x32xf32>
    %66 = tpu.matmul %64, %33, %cst_52 {dimension_numbers = #tpu.dot_dimension_numbers<[1], [0], [0], [1], [0, 0, 1, 1], [], []>} : vector<8x8xf32>, vector<8x32xf32>, vector<8x32xf32> -> vector<8x32xf32>
    %67 = arith.addf %66, %31 : vector<8x32xf32>
    %cst_53 = arith.constant 0.000000e+00 : f32
    %68 = vector.broadcast %cst_53 : f32 to vector<8x32xf32>
    %69 = arith.maximumf %67, %68 : vector<8x32xf32>
    %cst_54 = arith.constant dense<0.000000e+00> : vector<8x32xf32>
    %70 = tpu.matmul %69, %34, %cst_54 {dimension_numbers = #tpu.dot_dimension_numbers<[1], [0], [0], [1], [0, 0, 1, 1], [], []>} : vector<8x32xf32>, vector<32x32xf32>, vector<8x32xf32> -> vector<8x32xf32>
    %71 = vector.broadcast %35 : vector<1x32xf32> to vector<8x32xf32>
    %72 = arith.addf %70, %71 : vector<8x32xf32>
    %cst_55 = arith.constant 0.000000e+00 : f32
    %73 = vector.broadcast %cst_55 : f32 to vector<8x32xf32>
    %74 = arith.maximumf %72, %73 : vector<8x32xf32>
    %cst_56 = arith.constant dense<0.000000e+00> : vector<8x16xf32>
    %75 = tpu.matmul %74, %36, %cst_56 {dimension_numbers = #tpu.dot_dimension_numbers<[1], [0], [0], [1], [0, 0, 1, 1], [], []>} : vector<8x32xf32>, vector<32x16xf32>, vector<8x16xf32> -> vector<8x16xf32>
    %76 = vector.broadcast %37 : vector<1x16xf32> to vector<8x16xf32>
    %77 = arith.addf %75, %76 : vector<8x16xf32>
    %cst_57 = arith.constant 0.000000e+00 : f32
    %78 = vector.broadcast %cst_57 : f32 to vector<8x16xf32>
    %79 = arith.subf %78, %77 : vector<8x16xf32>
    %80 = math.exp %79 : vector<8x16xf32>
    %cst_58 = arith.constant 1.000000e+00 : f32
    %81 = vector.broadcast %cst_58 : f32 to vector<8x16xf32>
    %82 = arith.addf %81, %80 : vector<8x16xf32>
    %cst_59 = arith.constant 1.000000e+00 : f32
    %83 = vector.broadcast %cst_59 : f32 to vector<8x16xf32>
    %84 = arith.divf %83, %82 : vector<8x16xf32>
    %c0_60 = arith.constant 0 : index
    %c16 = arith.constant 16 : index
    %85 = vector.load %arg17[%c0_60, %c16] : memref<8x128xf32, #tpu.memory_space<vmem>>, vector<8x16xf32>
    tpu.vector_store %arg17[%c0_60, %c16], %84 {strides = array<i32>} : memref<8x128xf32, #tpu.memory_space<vmem>>, vector<8x16xf32>,
    %86 = vector.extract_strided_slice %32 {offsets = [0, 16], sizes = [8, 8], strides = [1, 1]} : vector<8x64xf32> to vector<8x8xf32>
    %87 = arith.mulf %25, %86 : vector<8x8xf32>
    %88 = arith.addf %21, %87 : vector<8x8xf32>
    %c0_61 = arith.constant 0 : index
    %c16_62 = arith.constant 16 : index
    %89 = vector.load %arg19[%c0_61, %c16_62] : memref<8x64xf32, #tpu.memory_space<vmem>>, vector<8x8xf32>
    tpu.vector_store %arg19[%c0_61, %c16_62], %88 {strides = array<i32>} : memref<8x64xf32, #tpu.memory_space<vmem>>, vector<8x8xf32>,
    %cst_63 = arith.constant dense<0.000000e+00> : vector<8x32xf32>
    %90 = tpu.matmul %88, %33, %cst_63 {dimension_numbers = #tpu.dot_dimension_numbers<[1], [0], [0], [1], [0, 0, 1, 1], [], []>} : vector<8x8xf32>, vector<8x32xf32>, vector<8x32xf32> -> vector<8x32xf32>
    %91 = arith.addf %90, %31 : vector<8x32xf32>
    %cst_64 = arith.constant 0.000000e+00 : f32
    %92 = vector.broadcast %cst_64 : f32 to vector<8x32xf32>
    %93 = arith.maximumf %91, %92 : vector<8x32xf32>
    %cst_65 = arith.constant dense<0.000000e+00> : vector<8x32xf32>
    %94 = tpu.matmul %93, %34, %cst_65 {dimension_numbers = #tpu.dot_dimension_numbers<[1], [0], [0], [1], [0, 0, 1, 1], [], []>} : vector<8x32xf32>, vector<32x32xf32>, vector<8x32xf32> -> vector<8x32xf32>
    %95 = vector.broadcast %35 : vector<1x32xf32> to vector<8x32xf32>
    %96 = arith.addf %94, %95 : vector<8x32xf32>
    %cst_66 = arith.constant 0.000000e+00 : f32
    %97 = vector.broadcast %cst_66 : f32 to vector<8x32xf32>
    %98 = arith.maximumf %96, %97 : vector<8x32xf32>
    %cst_67 = arith.constant dense<0.000000e+00> : vector<8x16xf32>
    %99 = tpu.matmul %98, %36, %cst_67 {dimension_numbers = #tpu.dot_dimension_numbers<[1], [0], [0], [1], [0, 0, 1, 1], [], []>} : vector<8x32xf32>, vector<32x16xf32>, vector<8x16xf32> -> vector<8x16xf32>
    %100 = vector.broadcast %37 : vector<1x16xf32> to vector<8x16xf32>
    %101 = arith.addf %99, %100 : vector<8x16xf32>
    %cst_68 = arith.constant 0.000000e+00 : f32
    %102 = vector.broadcast %cst_68 : f32 to vector<8x16xf32>
    %103 = arith.subf %102, %101 : vector<8x16xf32>
    %104 = math.exp %103 : vector<8x16xf32>
    %cst_69 = arith.constant 1.000000e+00 : f32
    %105 = vector.broadcast %cst_69 : f32 to vector<8x16xf32>
    %106 = arith.addf %105, %104 : vector<8x16xf32>
    %cst_70 = arith.constant 1.000000e+00 : f32
    %107 = vector.broadcast %cst_70 : f32 to vector<8x16xf32>
    %108 = arith.divf %107, %106 : vector<8x16xf32>
    %c0_71 = arith.constant 0 : index
    %c32 = arith.constant 32 : index
    %109 = vector.load %arg17[%c0_71, %c32] : memref<8x128xf32, #tpu.memory_space<vmem>>, vector<8x16xf32>
    tpu.vector_store %arg17[%c0_71, %c32], %108 {strides = array<i32>} : memref<8x128xf32, #tpu.memory_space<vmem>>, vector<8x16xf32>,
    %110 = vector.extract_strided_slice %32 {offsets = [0, 24], sizes = [8, 8], strides = [1, 1]} : vector<8x64xf32> to vector<8x8xf32>
    %111 = arith.mulf %25, %110 : vector<8x8xf32>
    %112 = arith.addf %21, %111 : vector<8x8xf32>
    %c0_72 = arith.constant 0 : index
    %c24 = arith.constant 24 : index
    %113 = vector.load %arg19[%c0_72, %c24] : memref<8x64xf32, #tpu.memory_space<vmem>>, vector<8x8xf32>
    tpu.vector_store %arg19[%c0_72, %c24], %112 {strides = array<i32>} : memref<8x64xf32, #tpu.memory_space<vmem>>, vector<8x8xf32>,
    %cst_73 = arith.constant dense<0.000000e+00> : vector<8x32xf32>
    %114 = tpu.matmul %112, %33, %cst_73 {dimension_numbers = #tpu.dot_dimension_numbers<[1], [0], [0], [1], [0, 0, 1, 1], [], []>} : vector<8x8xf32>, vector<8x32xf32>, vector<8x32xf32> -> vector<8x32xf32>
    %115 = arith.addf %114, %31 : vector<8x32xf32>
    %cst_74 = arith.constant 0.000000e+00 : f32
    %116 = vector.broadcast %cst_74 : f32 to vector<8x32xf32>
    %117 = arith.maximumf %115, %116 : vector<8x32xf32>
    %cst_75 = arith.constant dense<0.000000e+00> : vector<8x32xf32>
    %118 = tpu.matmul %117, %34, %cst_75 {dimension_numbers = #tpu.dot_dimension_numbers<[1], [0], [0], [1], [0, 0, 1, 1], [], []>} : vector<8x32xf32>, vector<32x32xf32>, vector<8x32xf32> -> vector<8x32xf32>
    %119 = vector.broadcast %35 : vector<1x32xf32> to vector<8x32xf32>
    %120 = arith.addf %118, %119 : vector<8x32xf32>
    %cst_76 = arith.constant 0.000000e+00 : f32
    %121 = vector.broadcast %cst_76 : f32 to vector<8x32xf32>
    %122 = arith.maximumf %120, %121 : vector<8x32xf32>
    %cst_77 = arith.constant dense<0.000000e+00> : vector<8x16xf32>
    %123 = tpu.matmul %122, %36, %cst_77 {dimension_numbers = #tpu.dot_dimension_numbers<[1], [0], [0], [1], [0, 0, 1, 1], [], []>} : vector<8x32xf32>, vector<32x16xf32>, vector<8x16xf32> -> vector<8x16xf32>
    %124 = vector.broadcast %37 : vector<1x16xf32> to vector<8x16xf32>
    %125 = arith.addf %123, %124 : vector<8x16xf32>
    %cst_78 = arith.constant 0.000000e+00 : f32
    %126 = vector.broadcast %cst_78 : f32 to vector<8x16xf32>
    %127 = arith.subf %126, %125 : vector<8x16xf32>
    %128 = math.exp %127 : vector<8x16xf32>
    %cst_79 = arith.constant 1.000000e+00 : f32
    %129 = vector.broadcast %cst_79 : f32 to vector<8x16xf32>
    %130 = arith.addf %129, %128 : vector<8x16xf32>
    %cst_80 = arith.constant 1.000000e+00 : f32
    %131 = vector.broadcast %cst_80 : f32 to vector<8x16xf32>
    %132 = arith.divf %131, %130 : vector<8x16xf32>
    %c0_81 = arith.constant 0 : index
    %c48 = arith.constant 48 : index
    %133 = vector.load %arg17[%c0_81, %c48] : memref<8x128xf32, #tpu.memory_space<vmem>>, vector<8x16xf32>
    tpu.vector_store %arg17[%c0_81, %c48], %132 {strides = array<i32>} : memref<8x128xf32, #tpu.memory_space<vmem>>, vector<8x16xf32>,
    %134 = vector.extract_strided_slice %32 {offsets = [0, 32], sizes = [8, 8], strides = [1, 1]} : vector<8x64xf32> to vector<8x8xf32>
    %135 = arith.mulf %25, %134 : vector<8x8xf32>
    %136 = arith.addf %21, %135 : vector<8x8xf32>
    %c0_82 = arith.constant 0 : index
    %c32_83 = arith.constant 32 : index
    %137 = vector.load %arg19[%c0_82, %c32_83] : memref<8x64xf32, #tpu.memory_space<vmem>>, vector<8x8xf32>
    tpu.vector_store %arg19[%c0_82, %c32_83], %136 {strides = array<i32>} : memref<8x64xf32, #tpu.memory_space<vmem>>, vector<8x8xf32>,
    %cst_84 = arith.constant dense<0.000000e+00> : vector<8x32xf32>
    %138 = tpu.matmul %136, %33, %cst_84 {dimension_numbers = #tpu.dot_dimension_numbers<[1], [0], [0], [1], [0, 0, 1, 1], [], []>} : vector<8x8xf32>, vector<8x32xf32>, vector<8x32xf32> -> vector<8x32xf32>
    %139 = arith.addf %138, %31 : vector<8x32xf32>
    %cst_85 = arith.constant 0.000000e+00 : f32
    %140 = vector.broadcast %cst_85 : f32 to vector<8x32xf32>
    %141 = arith.maximumf %139, %140 : vector<8x32xf32>
    %cst_86 = arith.constant dense<0.000000e+00> : vector<8x32xf32>
    %142 = tpu.matmul %141, %34, %cst_86 {dimension_numbers = #tpu.dot_dimension_numbers<[1], [0], [0], [1], [0, 0, 1, 1], [], []>} : vector<8x32xf32>, vector<32x32xf32>, vector<8x32xf32> -> vector<8x32xf32>
    %143 = vector.broadcast %35 : vector<1x32xf32> to vector<8x32xf32>
    %144 = arith.addf %142, %143 : vector<8x32xf32>
    %cst_87 = arith.constant 0.000000e+00 : f32
    %145 = vector.broadcast %cst_87 : f32 to vector<8x32xf32>
    %146 = arith.maximumf %144, %145 : vector<8x32xf32>
    %cst_88 = arith.constant dense<0.000000e+00> : vector<8x16xf32>
    %147 = tpu.matmul %146, %36, %cst_88 {dimension_numbers = #tpu.dot_dimension_numbers<[1], [0], [0], [1], [0, 0, 1, 1], [], []>} : vector<8x32xf32>, vector<32x16xf32>, vector<8x16xf32> -> vector<8x16xf32>
    %148 = vector.broadcast %37 : vector<1x16xf32> to vector<8x16xf32>
    %149 = arith.addf %147, %148 : vector<8x16xf32>
    %cst_89 = arith.constant 0.000000e+00 : f32
    %150 = vector.broadcast %cst_89 : f32 to vector<8x16xf32>
    %151 = arith.subf %150, %149 : vector<8x16xf32>
    %152 = math.exp %151 : vector<8x16xf32>
    %cst_90 = arith.constant 1.000000e+00 : f32
    %153 = vector.broadcast %cst_90 : f32 to vector<8x16xf32>
    %154 = arith.addf %153, %152 : vector<8x16xf32>
    %cst_91 = arith.constant 1.000000e+00 : f32
    %155 = vector.broadcast %cst_91 : f32 to vector<8x16xf32>
    %156 = arith.divf %155, %154 : vector<8x16xf32>
    %c0_92 = arith.constant 0 : index
    %c64 = arith.constant 64 : index
    %157 = vector.load %arg17[%c0_92, %c64] : memref<8x128xf32, #tpu.memory_space<vmem>>, vector<8x16xf32>
    tpu.vector_store %arg17[%c0_92, %c64], %156 {strides = array<i32>} : memref<8x128xf32, #tpu.memory_space<vmem>>, vector<8x16xf32>,
    %158 = vector.extract_strided_slice %32 {offsets = [0, 40], sizes = [8, 8], strides = [1, 1]} : vector<8x64xf32> to vector<8x8xf32>
    %159 = arith.mulf %25, %158 : vector<8x8xf32>
    %160 = arith.addf %21, %159 : vector<8x8xf32>
    %c0_93 = arith.constant 0 : index
    %c40 = arith.constant 40 : index
    %161 = vector.load %arg19[%c0_93, %c40] : memref<8x64xf32, #tpu.memory_space<vmem>>, vector<8x8xf32>
    tpu.vector_store %arg19[%c0_93, %c40], %160 {strides = array<i32>} : memref<8x64xf32, #tpu.memory_space<vmem>>, vector<8x8xf32>,
    %cst_94 = arith.constant dense<0.000000e+00> : vector<8x32xf32>
    %162 = tpu.matmul %160, %33, %cst_94 {dimension_numbers = #tpu.dot_dimension_numbers<[1], [0], [0], [1], [0, 0, 1, 1], [], []>} : vector<8x8xf32>, vector<8x32xf32>, vector<8x32xf32> -> vector<8x32xf32>
    %163 = arith.addf %162, %31 : vector<8x32xf32>
    %cst_95 = arith.constant 0.000000e+00 : f32
    %164 = vector.broadcast %cst_95 : f32 to vector<8x32xf32>
    %165 = arith.maximumf %163, %164 : vector<8x32xf32>
    %cst_96 = arith.constant dense<0.000000e+00> : vector<8x32xf32>
    %166 = tpu.matmul %165, %34, %cst_96 {dimension_numbers = #tpu.dot_dimension_numbers<[1], [0], [0], [1], [0, 0, 1, 1], [], []>} : vector<8x32xf32>, vector<32x32xf32>, vector<8x32xf32> -> vector<8x32xf32>
    %167 = vector.broadcast %35 : vector<1x32xf32> to vector<8x32xf32>
    %168 = arith.addf %166, %167 : vector<8x32xf32>
    %cst_97 = arith.constant 0.000000e+00 : f32
    %169 = vector.broadcast %cst_97 : f32 to vector<8x32xf32>
    %170 = arith.maximumf %168, %169 : vector<8x32xf32>
    %cst_98 = arith.constant dense<0.000000e+00> : vector<8x16xf32>
    %171 = tpu.matmul %170, %36, %cst_98 {dimension_numbers = #tpu.dot_dimension_numbers<[1], [0], [0], [1], [0, 0, 1, 1], [], []>} : vector<8x32xf32>, vector<32x16xf32>, vector<8x16xf32> -> vector<8x16xf32>
    %172 = vector.broadcast %37 : vector<1x16xf32> to vector<8x16xf32>
    %173 = arith.addf %171, %172 : vector<8x16xf32>
    %cst_99 = arith.constant 0.000000e+00 : f32
    %174 = vector.broadcast %cst_99 : f32 to vector<8x16xf32>
    %175 = arith.subf %174, %173 : vector<8x16xf32>
    %176 = math.exp %175 : vector<8x16xf32>
    %cst_100 = arith.constant 1.000000e+00 : f32
    %177 = vector.broadcast %cst_100 : f32 to vector<8x16xf32>
    %178 = arith.addf %177, %176 : vector<8x16xf32>
    %cst_101 = arith.constant 1.000000e+00 : f32
    %179 = vector.broadcast %cst_101 : f32 to vector<8x16xf32>
    %180 = arith.divf %179, %178 : vector<8x16xf32>
    %c0_102 = arith.constant 0 : index
    %c80 = arith.constant 80 : index
    %181 = vector.load %arg17[%c0_102, %c80] : memref<8x128xf32, #tpu.memory_space<vmem>>, vector<8x16xf32>
    tpu.vector_store %arg17[%c0_102, %c80], %180 {strides = array<i32>} : memref<8x128xf32, #tpu.memory_space<vmem>>, vector<8x16xf32>,
    %182 = vector.extract_strided_slice %32 {offsets = [0, 48], sizes = [8, 8], strides = [1, 1]} : vector<8x64xf32> to vector<8x8xf32>
    %183 = arith.mulf %25, %182 : vector<8x8xf32>
    %184 = arith.addf %21, %183 : vector<8x8xf32>
    %c0_103 = arith.constant 0 : index
    %c48_104 = arith.constant 48 : index
    %185 = vector.load %arg19[%c0_103, %c48_104] : memref<8x64xf32, #tpu.memory_space<vmem>>, vector<8x8xf32>
    tpu.vector_store %arg19[%c0_103, %c48_104], %184 {strides = array<i32>} : memref<8x64xf32, #tpu.memory_space<vmem>>, vector<8x8xf32>,
    %cst_105 = arith.constant dense<0.000000e+00> : vector<8x32xf32>
    %186 = tpu.matmul %184, %33, %cst_105 {dimension_numbers = #tpu.dot_dimension_numbers<[1], [0], [0], [1], [0, 0, 1, 1], [], []>} : vector<8x8xf32>, vector<8x32xf32>, vector<8x32xf32> -> vector<8x32xf32>
    %187 = arith.addf %186, %31 : vector<8x32xf32>
    %cst_106 = arith.constant 0.000000e+00 : f32
    %188 = vector.broadcast %cst_106 : f32 to vector<8x32xf32>
    %189 = arith.maximumf %187, %188 : vector<8x32xf32>
    %cst_107 = arith.constant dense<0.000000e+00> : vector<8x32xf32>
    %190 = tpu.matmul %189, %34, %cst_107 {dimension_numbers = #tpu.dot_dimension_numbers<[1], [0], [0], [1], [0, 0, 1, 1], [], []>} : vector<8x32xf32>, vector<32x32xf32>, vector<8x32xf32> -> vector<8x32xf32>
    %191 = vector.broadcast %35 : vector<1x32xf32> to vector<8x32xf32>
    %192 = arith.addf %190, %191 : vector<8x32xf32>
    %cst_108 = arith.constant 0.000000e+00 : f32
    %193 = vector.broadcast %cst_108 : f32 to vector<8x32xf32>
    %194 = arith.maximumf %192, %193 : vector<8x32xf32>
    %cst_109 = arith.constant dense<0.000000e+00> : vector<8x16xf32>
    %195 = tpu.matmul %194, %36, %cst_109 {dimension_numbers = #tpu.dot_dimension_numbers<[1], [0], [0], [1], [0, 0, 1, 1], [], []>} : vector<8x32xf32>, vector<32x16xf32>, vector<8x16xf32> -> vector<8x16xf32>
    %196 = vector.broadcast %37 : vector<1x16xf32> to vector<8x16xf32>
    %197 = arith.addf %195, %196 : vector<8x16xf32>
    %cst_110 = arith.constant 0.000000e+00 : f32
    %198 = vector.broadcast %cst_110 : f32 to vector<8x16xf32>
    %199 = arith.subf %198, %197 : vector<8x16xf32>
    %200 = math.exp %199 : vector<8x16xf32>
    %cst_111 = arith.constant 1.000000e+00 : f32
    %201 = vector.broadcast %cst_111 : f32 to vector<8x16xf32>
    %202 = arith.addf %201, %200 : vector<8x16xf32>
    %cst_112 = arith.constant 1.000000e+00 : f32
    %203 = vector.broadcast %cst_112 : f32 to vector<8x16xf32>
    %204 = arith.divf %203, %202 : vector<8x16xf32>
    %c0_113 = arith.constant 0 : index
    %c96 = arith.constant 96 : index
    %205 = vector.load %arg17[%c0_113, %c96] : memref<8x128xf32, #tpu.memory_space<vmem>>, vector<8x16xf32>
    tpu.vector_store %arg17[%c0_113, %c96], %204 {strides = array<i32>} : memref<8x128xf32, #tpu.memory_space<vmem>>, vector<8x16xf32>,
    %206 = vector.extract_strided_slice %32 {offsets = [0, 56], sizes = [8, 8], strides = [1, 1]} : vector<8x64xf32> to vector<8x8xf32>
    %207 = arith.mulf %25, %206 : vector<8x8xf32>
    %208 = arith.addf %21, %207 : vector<8x8xf32>
    %c0_114 = arith.constant 0 : index
    %c56 = arith.constant 56 : index
    %209 = vector.load %arg19[%c0_114, %c56] : memref<8x64xf32, #tpu.memory_space<vmem>>, vector<8x8xf32>
    tpu.vector_store %arg19[%c0_114, %c56], %208 {strides = array<i32>} : memref<8x64xf32, #tpu.memory_space<vmem>>, vector<8x8xf32>,
    %cst_115 = arith.constant dense<0.000000e+00> : vector<8x32xf32>
    %210 = tpu.matmul %208, %33, %cst_115 {dimension_numbers = #tpu.dot_dimension_numbers<[1], [0], [0], [1], [0, 0, 1, 1], [], []>} : vector<8x8xf32>, vector<8x32xf32>, vector<8x32xf32> -> vector<8x32xf32>
    %211 = arith.addf %210, %31 : vector<8x32xf32>
    %cst_116 = arith.constant 0.000000e+00 : f32
    %212 = vector.broadcast %cst_116 : f32 to vector<8x32xf32>
    %213 = arith.maximumf %211, %212 : vector<8x32xf32>
    %cst_117 = arith.constant dense<0.000000e+00> : vector<8x32xf32>
    %214 = tpu.matmul %213, %34, %cst_117 {dimension_numbers = #tpu.dot_dimension_numbers<[1], [0], [0], [1], [0, 0, 1, 1], [], []>} : vector<8x32xf32>, vector<32x32xf32>, vector<8x32xf32> -> vector<8x32xf32>
    %215 = vector.broadcast %35 : vector<1x32xf32> to vector<8x32xf32>
    %216 = arith.addf %214, %215 : vector<8x32xf32>
    %cst_118 = arith.constant 0.000000e+00 : f32
    %217 = vector.broadcast %cst_118 : f32 to vector<8x32xf32>
    %218 = arith.maximumf %216, %217 : vector<8x32xf32>
    %cst_119 = arith.constant dense<0.000000e+00> : vector<8x16xf32>
    %219 = tpu.matmul %218, %36, %cst_119 {dimension_numbers = #tpu.dot_dimension_numbers<[1], [0], [0], [1], [0, 0, 1, 1], [], []>} : vector<8x32xf32>, vector<32x16xf32>, vector<8x16xf32> -> vector<8x16xf32>
    %220 = vector.broadcast %37 : vector<1x16xf32> to vector<8x16xf32>
    %221 = arith.addf %219, %220 : vector<8x16xf32>
    %cst_120 = arith.constant 0.000000e+00 : f32
    %222 = vector.broadcast %cst_120 : f32 to vector<8x16xf32>
    %223 = arith.subf %222, %221 : vector<8x16xf32>
    %224 = math.exp %223 : vector<8x16xf32>
    %cst_121 = arith.constant 1.000000e+00 : f32
    %225 = vector.broadcast %cst_121 : f32 to vector<8x16xf32>
    %226 = arith.addf %225, %224 : vector<8x16xf32>
    %cst_122 = arith.constant 1.000000e+00 : f32
    %227 = vector.broadcast %cst_122 : f32 to vector<8x16xf32>
    %228 = arith.divf %227, %226 : vector<8x16xf32>
    %c0_123 = arith.constant 0 : index
    %c112 = arith.constant 112 : index
    %229 = vector.load %arg17[%c0_123, %c112] : memref<8x128xf32, #tpu.memory_space<vmem>>, vector<8x16xf32>
    tpu.vector_store %arg17[%c0_123, %c112], %228 {strides = array<i32>} : memref<8x128xf32, #tpu.memory_space<vmem>>, vector<8x16xf32>,
    return
  }
  func.func @transform_0(%arg0: i32) -> (i32, i32) {
    %c0_i32 = arith.constant 0 : i32
    %c0_i32_0 = arith.constant 0 : i32
    return %arg0, %c0_i32 : i32, i32
  }
  func.func @transform_1(%arg0: i32) -> (i32, i32) {
    %c0_i32 = arith.constant 0 : i32
    %c0_i32_0 = arith.constant 0 : i32
    return %arg0, %c0_i32 : i32, i32
  }
  func.func @transform_2(%arg0: i32) -> (i32, i32) {
    %c0_i32 = arith.constant 0 : i32
    %c0_i32_0 = arith.constant 0 : i32
    return %arg0, %c0_i32 : i32, i32
  }
  func.func @transform_3(%arg0: i32) -> (i32, i32) {
    %c0_i32 = arith.constant 0 : i32
    %c0_i32_0 = arith.constant 0 : i32
    %c0_i32_1 = arith.constant 0 : i32
    return %c0_i32, %c0_i32_0 : i32, i32
  }
  func.func @transform_4(%arg0: i32) -> (i32, i32) {
    %c0_i32 = arith.constant 0 : i32
    %c0_i32_0 = arith.constant 0 : i32
    %c0_i32_1 = arith.constant 0 : i32
    return %c0_i32, %c0_i32_0 : i32, i32
  }
  func.func @transform_5(%arg0: i32) -> (i32, i32) {
    %c0_i32 = arith.constant 0 : i32
    %c0_i32_0 = arith.constant 0 : i32
    %c0_i32_1 = arith.constant 0 : i32
    return %c0_i32, %c0_i32_0 : i32, i32
  }
  func.func @transform_6(%arg0: i32) -> (i32, i32) {
    %c0_i32 = arith.constant 0 : i32
    %c0_i32_0 = arith.constant 0 : i32
    %c0_i32_1 = arith.constant 0 : i32
    return %c0_i32, %c0_i32_0 : i32, i32
  }
  func.func @transform_7(%arg0: i32) -> (i32, i32) {
    %c0_i32 = arith.constant 0 : i32
    %c0_i32_0 = arith.constant 0 : i32
    %c0_i32_1 = arith.constant 0 : i32
    return %c0_i32, %c0_i32_0 : i32, i32
  }
  func.func @transform_8(%arg0: i32) -> (i32, i32) {
    %c0_i32 = arith.constant 0 : i32
    %c0_i32_0 = arith.constant 0 : i32
    %c0_i32_1 = arith.constant 0 : i32
    return %c0_i32, %c0_i32_0 : i32, i32
  }
  func.func @transform_9(%arg0: i32) -> (i32, i32) {
    %c0_i32 = arith.constant 0 : i32
    %c0_i32_0 = arith.constant 0 : i32
    %c0_i32_1 = arith.constant 0 : i32
    return %c0_i32, %c0_i32_0 : i32, i32
  }
  func.func @transform_10(%arg0: i32) -> (i32, i32) {
    %c0_i32 = arith.constant 0 : i32
    %c0_i32_0 = arith.constant 0 : i32
    %c0_i32_1 = arith.constant 0 : i32
    return %c0_i32, %c0_i32_0 : i32, i32
  }
  func.func @transform_11(%arg0: i32) -> (i32, i32) {
    %c0_i32 = arith.constant 0 : i32
    %c0_i32_0 = arith.constant 0 : i32
    %c0_i32_1 = arith.constant 0 : i32
    return %c0_i32, %c0_i32_0 : i32, i32
  }
  func.func @transform_12(%arg0: i32) -> (i32, i32) {
    %c0_i32 = arith.constant 0 : i32
    %c0_i32_0 = arith.constant 0 : i32
    %c0_i32_1 = arith.constant 0 : i32
    return %c0_i32, %c0_i32_0 : i32, i32
  }
  func.func @transform_13(%arg0: i32) -> (i32, i32) {
    %c0_i32 = arith.constant 0 : i32
    %c0_i32_0 = arith.constant 0 : i32
    %c0_i32_1 = arith.constant 0 : i32
    return %c0_i32, %c0_i32_0 : i32, i32
  }
  func.func @transform_14(%arg0: i32) -> (i32, i32) {
    %c0_i32 = arith.constant 0 : i32
    %c0_i32_0 = arith.constant 0 : i32
    %c0_i32_1 = arith.constant 0 : i32
    return %c0_i32, %c0_i32_0 : i32, i32
  }
  func.func @transform_15(%arg0: i32) -> (i32, i32) {
    %c0_i32 = arith.constant 0 : i32
    %c0_i32_0 = arith.constant 0 : i32
    %c0_i32_1 = arith.constant 0 : i32
    return %c0_i32, %c0_i32_0 : i32, i32
  }
  func.func @transform_16(%arg0: i32) -> (i32, i32) {
    %c0_i32 = arith.constant 0 : i32
    %c0_i32_0 = arith.constant 0 : i32
    return %arg0, %c0_i32 : i32, i32
  }
  func.func @transform_17(%arg0: i32) -> (i32, i32) {
    %c0_i32 = arith.constant 0 : i32
    %c0_i32_0 = arith.constant 0 : i32
    return %arg0, %c0_i32 : i32, i32
  }
  func.func @transform_18(%arg0: i32) -> (i32, i32) {
    %c0_i32 = arith.constant 0 : i32
    %c0_i32_0 = arith.constant 0 : i32
    return %arg0, %c0_i32 : i32, i32
  }
}

</mosaic_0001>

<llo_original>
// kernel: tpu_custom_call.1
$region0: #{tpu_custom_call.1}
  #allocation0 [shape = 'u32[]', space=smem, size = 0x4, offset = 0x4, fixed_abs, tag = 'smem constant byte address 0x4 - core index']
  #allocation1 [shape = 'u32[144,128]{1,0:T(1,128)}', space=vmem, size = 0x12000, scoped, tag = 'internal scratch']
  %s0 = inlined_call_operand.hbm [shape: f32[16,20], index: 0, kind: input, shape index: {}]
  %s1 = inlined_call_operand.hbm [shape: f32[16,4], index: 1, kind: input, shape index: {}]
  %s2 = inlined_call_operand.hbm [shape: f32[16,64], index: 2, kind: input, shape index: {}]
  %s3 = inlined_call_operand.hbm [shape: f32[20,32], index: 3, kind: input, shape index: {}]
  %s4 = inlined_call_operand.hbm [shape: f32[1,32], index: 4, kind: input, shape index: {}]
  %s5 = inlined_call_operand.hbm [shape: f32[32,32], index: 5, kind: input, shape index: {}]
  %s6 = inlined_call_operand.hbm [shape: f32[1,32], index: 6, kind: input, shape index: {}]
  %s7 = inlined_call_operand.hbm [shape: f32[32,16], index: 7, kind: input, shape index: {}]
  %s8 = inlined_call_operand.hbm [shape: f32[1,16], index: 8, kind: input, shape index: {}]
  %s9 = inlined_call_operand.hbm [shape: f32[8,32], index: 9, kind: input, shape index: {}]
  %s10 = inlined_call_operand.hbm [shape: f32[4,32], index: 10, kind: input, shape index: {}]
  %s11 = inlined_call_operand.hbm [shape: f32[1,32], index: 11, kind: input, shape index: {}]
  %s12 = inlined_call_operand.hbm [shape: f32[32,32], index: 12, kind: input, shape index: {}]
  %s13 = inlined_call_operand.hbm [shape: f32[1,32], index: 13, kind: input, shape index: {}]
  %s14 = inlined_call_operand.hbm [shape: f32[32,16], index: 14, kind: input, shape index: {}]
  %s15 = inlined_call_operand.hbm [shape: f32[1,16], index: 15, kind: input, shape index: {}]
  %s16 = inlined_call_operand.hbm [shape: f32[16,128], index: 16, kind: output, shape index: {0}]
  %s17 = inlined_call_operand.hbm [shape: f32[16,16], index: 17, kind: output, shape index: {1}]
  %s18 = inlined_call_operand.hbm [shape: f32[16,64], index: 18, kind: output, shape index: {2}]
  %19 = xla_tuple %s16, %s17, %s18
  %s20 = sld [smem:[#allocation0]]
  $region177: #{tpu_custom_call.1} parent=0
    _
  %s22 = ssub.s32 1, %s20
  %s23 = scalar_select 0, %s22, %s20
  $region1: #{tpu_custom_call.1} parent=0
    #allocation2 [shape = 'u8[8192]{0}', space=vmem, size = 0x2000, scoped, tag = 'input window, operand 0']
    #allocation3 [shape = 's32[2]{0}', space=sflag, size = 0x8, scoped, tag = 'scoped memory for tpu_custom_call.1']
    #allocation4 [shape = 's32[2]{0}', space=sflag, size = 0x8, scoped, tag = 'scoped memory for tpu_custom_call.1']
    #allocation5 [shape = 'u8[8192]{0}', space=vmem, size = 0x2000, scoped, tag = 'input window, operand 1']
    #allocation6 [shape = 's32[2]{0}', space=sflag, size = 0x8, scoped, tag = 'scoped memory for tpu_custom_call.1']
    #allocation7 [shape = 'u8[8192]{0}', space=vmem, size = 0x2000, scoped, tag = 'input window, operand 2']
    #allocation8 [shape = 'u8[12288]{0}', space=vmem, size = 0x3000, scoped, tag = 'input window, operand 3, single buffered']
    #allocation9 [shape = 's32[1]{0}', space=sflag, size = 0x4, scoped, tag = 'scoped memory for tpu_custom_call.1']
    #allocation10 [shape = 'u8[512]{0}', space=vmem, size = 0x400, scoped, tag = 'input window, operand 4, single buffered']
    #allocation11 [shape = 'u8[16384]{0}', space=vmem, size = 0x4000, scoped, tag = 'input window, operand 5, single buffered']
    #allocation12 [shape = 's32[1]{0}', space=sflag, size = 0x4, scoped, tag = 'scoped memory for tpu_custom_call.1']
    #allocation13 [shape = 'u8[512]{0}', space=vmem, size = 0x400, scoped, tag = 'input window, operand 6, single buffered']
    #allocation14 [shape = 'u8[16384]{0}', space=vmem, size = 0x4000, scoped, tag = 'input window, operand 7, single buffered']
    #allocation15 [shape = 's32[1]{0}', space=sflag, size = 0x4, scoped, tag = 'scoped memory for tpu_custom_call.1']
    #allocation16 [shape = 'u8[512]{0}', space=vmem, size = 0x400, scoped, tag = 'input window, operand 8, single buffered']
    #allocation17 [shape = 'u8[4096]{0}', space=vmem, size = 0x1000, scoped, tag = 'input window, operand 9, single buffered']
    #allocation18 [shape = 's32[1]{0}', space=sflag, size = 0x4, scoped, tag = 'scoped memory for tpu_custom_call.1']
    #allocation19 [shape = 'u8[2048]{0}', space=vmem, size = 0x800, scoped, tag = 'input window, operand 10, single buffered']
    #allocation20 [shape = 'u8[512]{0}', space=vmem, size = 0x400, scoped, tag = 'input window, operand 11, single buffered']
    #allocation21 [shape = 's32[1]{0}', space=sflag, size = 0x4, scoped, tag = 'scoped memory for tpu_custom_call.1']
    #allocation22 [shape = 'u8[16384]{0}', space=vmem, size = 0x4000, scoped, tag = 'input window, operand 12, single buffered']
    #allocation23 [shape = 'u8[512]{0}', space=vmem, size = 0x400, scoped, tag = 'input window, operand 13, single buffered']
    #allocation24 [shape = 's32[1]{0}', space=sflag, size = 0x4, scoped, tag = 'scoped memory for tpu_custom_call.1']
    #allocation25 [shape = 'u8[16384]{0}', space=vmem, size = 0x4000, scoped, tag = 'input window, operand 14, single buffered']
    #allocation26 [shape = 'u8[512]{0}', space=vmem, size = 0x400, scoped, tag = 'input window, operand 15, single buffered']
    #allocation27 [shape = 's32[1]{0}', space=sflag, size = 0x4, scoped, tag = 'scoped memory for tpu_custom_call.1']
    #allocation28 [shape = 'u8[8192]{0}', space=vmem, size = 0x2000, scoped, tag = 'output window, operand 0']
    #allocation29 [shape = 'u8[8192]{0}', space=vmem, size = 0x2000, scoped, tag = 'output window, operand 1']
    #allocation30 [shape = 's32[2]{0}', space=sflag, size = 0x8, scoped, tag = 'scoped memory for tpu_custom_call.1']
    #allocation31 [shape = 'u8[8192]{0}', space=vmem, size = 0x2000, scoped, tag = 'output window, operand 2']
    %24 = vsyncpa [#allocation3], 0
    %s25 = scalar_lea.sflag [#allocation3], 1
    %26 = vsyncpa %s25, 0
    %27 = vsyncpa [#allocation6], 0
    %s28 = scalar_lea.sflag [#allocation6], 1
    %29 = vsyncpa %s28, 0
    %30 = vsyncpa [#allocation9], 0
    %31 = vsyncpa [#allocation12], 0
    %32 = vsyncpa [#allocation15], 0
    %33 = vsyncpa [#allocation18], 0
    %34 = vsyncpa [#allocation21], 0
    %35 = vsyncpa [#allocation24], 0
    %36 = vsyncpa [#allocation27], 0
    %37 = vsyncpa [#allocation4], 0
    %s38 = scalar_lea.sflag [#allocation4], 1
    %39 = vsyncpa %s38, 0
    %40 = vsyncpa [#allocation30], 0
    %s41 = scalar_lea.sflag [#allocation30], 1
    %42 = vsyncpa %s41, 0
    loop: start=0, step=1, limit=4
    $region2: #{tpu_custom_call.1} parent=1 // loop_pre_header
      _
    $region3: #{tpu_custom_call.1} parent=1 // loop_header
      %s44 = sphi 0, %s48
      %p45 = scmp.ge.s32.totalorder %s44, 4
      %s54 = sphi 0, %s56
      %s57 = sphi 0, %s54
      %s58 = sphi 0, %s57
      %s74 = sphi 0, %s58
      %s80 = sphi 0, %s82
      %s83 = sphi 0, %s80
      %s84 = sphi 0, %s83
      %s100 = sphi 0, %s84
      %s106 = sphi 0, %s108
      %s109 = sphi 0, %s106
      %s110 = sphi 0, %s109
      %s126 = sphi 0, %s110
      %s130 = sphi 0, %s130
      %s132 = sphi 0, %s130
      %s133 = sphi 0, %s132
      %s147 = sphi 0, %s133
      %s151 = sphi 0, %s151
      %s153 = sphi 0, %s151
      %s154 = sphi 0, %s153
      %s168 = sphi 0, %s154
      %s172 = sphi 0, %s172
      %s174 = sphi 0, %s172
      %s175 = sphi 0, %s174
      %s189 = sphi 0, %s175
      %s193 = sphi 0, %s193
      %s195 = sphi 0, %s193
      %s196 = sphi 0, %s195
      %s210 = sphi 0, %s196
      %s214 = sphi 0, %s214
      %s216 = sphi 0, %s214
      %s217 = sphi 0, %s216
      %s231 = sphi 0, %s217
      %s235 = sphi 0, %s235
      %s237 = sphi 0, %s235
      %s238 = sphi 0, %s237
      %s252 = sphi 0, %s238
      %s256 = sphi 0, %s256
      %s258 = sphi 0, %s256
      %s259 = sphi 0, %s258
      %s273 = sphi 0, %s259
      %s277 = sphi 0, %s277
      %s279 = sphi 0, %s277
      %s280 = sphi 0, %s279
      %s294 = sphi 0, %s280
      %s298 = sphi 0, %s298
      %s300 = sphi 0, %s298
      %s301 = sphi 0, %s300
      %s315 = sphi 0, %s301
      %s319 = sphi 0, %s319
      %s321 = sphi 0, %s319
      %s322 = sphi 0, %s321
      %s336 = sphi 0, %s322
      %s340 = sphi 0, %s340
      %s342 = sphi 0, %s340
      %s343 = sphi 0, %s342
      %s357 = sphi 0, %s343
      %s361 = sphi 0, %s361
      %s363 = sphi 0, %s361
      %s364 = sphi 0, %s363
      %s378 = sphi 0, %s364
      %s382 = sphi 0, %s382
      %s384 = sphi 0, %s382
      %s385 = sphi 0, %s384
      %s399 = sphi 0, %s385
      %s405 = sphi 0, %s407
      %s408 = sphi 0, %s405
      %s409 = sphi 0, %s408
      %s425 = sphi 0, %s409
      %s431 = sphi 0, %s433
      %s434 = sphi 0, %s431
      %s435 = sphi 0, %s434
      %s451 = sphi 0, %s435
      %s457 = sphi 0, %s459
      %s460 = sphi 0, %s457
      %s461 = sphi 0, %s460
      %s477 = sphi 0, %s461
    $region4: #{tpu_custom_call.1} parent=1 // loop_header_branch
      %47 = sbr.rel (%p45) target = $region8
    $region5: #{tpu_custom_call.1} parent=1 // loop_body
      %s49 = ssub.s32 %s44, 1
      %s50 = ssub.s32 %s44, 2
      %s51 = sadd.s32 %s44, 1
      %s52 = ssub.s32 %s44, %s51
      %p53 = scmp.eq.s32.totalorder %s52, 0
      %s55 = sadd.s32 %s54, 1
      %s56 = scalar_select %p53, %s54, %s55
      %p59 = pneg %p53
      %p60 = scmp.eq.s32.totalorder %s44, 1
      %p61 = por %p59, %p60
      %p62 = scmp.ne.s32.totalorder %s54, %s57
      %p63 = scmp.eq.s32.totalorder %s44, 0
      %p64 = por %p62, %p63
      %p65 = scmp.ne.s32.totalorder %s54, %s57
      %p66 = scmp.eq.s32.totalorder %s49, 1
      %p67 = por %p65, %p66
      %p68 = scmp.ne.s32.totalorder %s57, %s58
      %p69 = scmp.eq.s32.totalorder %s49, 0
      %p70 = por %p68, %p69
      %p71 = scmp.ne.s32.totalorder %s57, %s58
      %p72 = scmp.eq.s32.totalorder %s50, 1
      %p73 = por %p71, %p72
      %p75 = scmp.ne.s32.totalorder %s58, %s74
      %p76 = scmp.eq.s32.totalorder %s50, 0
      %p77 = por %p75, %p76
      %s78 = ssub.s32 %s44, %s51
      %p79 = scmp.eq.s32.totalorder %s78, 0
      %s81 = sadd.s32 %s80, 1
      %s82 = scalar_select %p79, %s80, %s81
      %p85 = pneg %p79
      %p86 = scmp.eq.s32.totalorder %s44, 1
      %p87 = por %p85, %p86
      %p88 = scmp.ne.s32.totalorder %s80, %s83
      %p89 = scmp.eq.s32.totalorder %s44, 0
      %p90 = por %p88, %p89
      %p91 = scmp.ne.s32.totalorder %s80, %s83
      %p92 = scmp.eq.s32.totalorder %s49, 1
      %p93 = por %p91, %p92
      %p94 = scmp.ne.s32.totalorder %s83, %s84
      %p95 = scmp.eq.s32.totalorder %s49, 0
      %p96 = por %p94, %p95
      %p97 = scmp.ne.s32.totalorder %s83, %s84
      %p98 = scmp.eq.s32.totalorder %s50, 1
      %p99 = por %p97, %p98
      %p101 = scmp.ne.s32.totalorder %s84, %s100
      %p102 = scmp.eq.s32.totalorder %s50, 0
      %p103 = por %p101, %p102
      %s104 = ssub.s32 %s44, %s51
      %p105 = scmp.eq.s32.totalorder %s104, 0
      %s107 = sadd.s32 %s106, 1
      %s108 = scalar_select %p105, %s106, %s107
      %p111 = pneg %p105
      %p112 = scmp.eq.s32.totalorder %s44, 1
      %p113 = por %p111, %p112
      %p114 = scmp.ne.s32.totalorder %s106, %s109
      %p115 = scmp.eq.s32.totalorder %s44, 0
      %p116 = por %p114, %p115
      %p117 = scmp.ne.s32.totalorder %s106, %s109
      %p118 = scmp.eq.s32.totalorder %s49, 1
      %p119 = por %p117, %p118
      %p120 = scmp.ne.s32.totalorder %s109, %s110
      %p121 = scmp.eq.s32.totalorder %s49, 0
      %p122 = por %p120, %p121
      %p123 = scmp.ne.s32.totalorder %s109, %s110
      %p124 = scmp.eq.s32.totalorder %s50, 1
      %p125 = por %p123, %p124
      %p127 = scmp.ne.s32.totalorder %s110, %s126
      %p128 = scmp.eq.s32.totalorder %s50, 0
      %p129 = por %p127, %p128
      %s131 = sadd.s32 %s130, 1
      %p134 = scmp.eq.s32.totalorder %s44, 1
      %p135 = scmp.ne.s32.totalorder %s130, %s132
      %p136 = scmp.eq.s32.totalorder %s44, 0
      %p137 = por %p135, %p136
      %p138 = scmp.ne.s32.totalorder %s130, %s132
      %p139 = scmp.eq.s32.totalorder %s49, 1
      %p140 = por %p138, %p139
      %p141 = scmp.ne.s32.totalorder %s132, %s133
      %p142 = scmp.eq.s32.totalorder %s49, 0
      %p143 = por %p141, %p142
      %p144 = scmp.ne.s32.totalorder %s132, %s133
      %p145 = scmp.eq.s32.totalorder %s50, 1
      %p146 = por %p144, %p145
      %p148 = scmp.ne.s32.totalorder %s133, %s147
      %p149 = scmp.eq.s32.totalorder %s50, 0
      %p150 = por %p148, %p149
      %s152 = sadd.s32 %s151, 1
      %p155 = scmp.eq.s32.totalorder %s44, 1
      %p156 = scmp.ne.s32.totalorder %s151, %s153
      %p157 = scmp.eq.s32.totalorder %s44, 0
      %p158 = por %p156, %p157
      %p159 = scmp.ne.s32.totalorder %s151, %s153
      %p160 = scmp.eq.s32.totalorder %s49, 1
      %p161 = por %p159, %p160
      %p162 = scmp.ne.s32.totalorder %s153, %s154
      %p163 = scmp.eq.s32.totalorder %s49, 0
      %p164 = por %p162, %p163
      %p165 = scmp.ne.s32.totalorder %s153, %s154
      %p166 = scmp.eq.s32.totalorder %s50, 1
      %p167 = por %p165, %p166
      %p169 = scmp.ne.s32.totalorder %s154, %s168
      %p170 = scmp.eq.s32.totalorder %s50, 0
      %p171 = por %p169, %p170
      %s173 = sadd.s32 %s172, 1
      %p176 = scmp.eq.s32.totalorder %s44, 1
      %p177 = scmp.ne.s32.totalorder %s172, %s174
      %p178 = scmp.eq.s32.totalorder %s44, 0
      %p179 = por %p177, %p178
      %p180 = scmp.ne.s32.totalorder %s172, %s174
      %p181 = scmp.eq.s32.totalorder %s49, 1
      %p182 = por %p180, %p181
      %p183 = scmp.ne.s32.totalorder %s174, %s175
      %p184 = scmp.eq.s32.totalorder %s49, 0
      %p185 = por %p183, %p184
      %p186 = scmp.ne.s32.totalorder %s174, %s175
      %p187 = scmp.eq.s32.totalorder %s50, 1
      %p188 = por %p186, %p187
      %p190 = scmp.ne.s32.totalorder %s175, %s189
      %p191 = scmp.eq.s32.totalorder %s50, 0
      %p192 = por %p190, %p191
      %s194 = sadd.s32 %s193, 1
      %p197 = scmp.eq.s32.totalorder %s44, 1
      %p198 = scmp.ne.s32.totalorder %s193, %s195
      %p199 = scmp.eq.s32.totalorder %s44, 0
      %p200 = por %p198, %p199
      %p201 = scmp.ne.s32.totalorder %s193, %s195
      %p202 = scmp.eq.s32.totalorder %s49, 1
      %p203 = por %p201, %p202
      %p204 = scmp.ne.s32.totalorder %s195, %s196
      %p205 = scmp.eq.s32.totalorder %s49, 0
      %p206 = por %p204, %p205
      %p207 = scmp.ne.s32.totalorder %s195, %s196
      %p208 = scmp.eq.s32.totalorder %s50, 1
      %p209 = por %p207, %p208
      %p211 = scmp.ne.s32.totalorder %s196, %s210
      %p212 = scmp.eq.s32.totalorder %s50, 0
      %p213 = por %p211, %p212
      %s215 = sadd.s32 %s214, 1
      %p218 = scmp.eq.s32.totalorder %s44, 1
      %p219 = scmp.ne.s32.totalorder %s214, %s216
      %p220 = scmp.eq.s32.totalorder %s44, 0
      %p221 = por %p219, %p220
      %p222 = scmp.ne.s32.totalorder %s214, %s216
      %p223 = scmp.eq.s32.totalorder %s49, 1
      %p224 = por %p222, %p223
      %p225 = scmp.ne.s32.totalorder %s216, %s217
      %p226 = scmp.eq.s32.totalorder %s49, 0
      %p227 = por %p225, %p226
      %p228 = scmp.ne.s32.totalorder %s216, %s217
      %p229 = scmp.eq.s32.totalorder %s50, 1
      %p230 = por %p228, %p229
      %p232 = scmp.ne.s32.totalorder %s217, %s231
      %p233 = scmp.eq.s32.totalorder %s50, 0
      %p234 = por %p232, %p233
      %s236 = sadd.s32 %s235, 1
      %p239 = scmp.eq.s32.totalorder %s44, 1
      %p240 = scmp.ne.s32.totalorder %s235, %s237
      %p241 = scmp.eq.s32.totalorder %s44, 0
      %p242 = por %p240, %p241
      %p243 = scmp.ne.s32.totalorder %s235, %s237
      %p244 = scmp.eq.s32.totalorder %s49, 1
      %p245 = por %p243, %p244
      %p246 = scmp.ne.s32.totalorder %s237, %s238
      %p247 = scmp.eq.s32.totalorder %s49, 0
      %p248 = por %p246, %p247
      %p249 = scmp.ne.s32.totalorder %s237, %s238
      %p250 = scmp.eq.s32.totalorder %s50, 1
      %p251 = por %p249, %p250
      %p253 = scmp.ne.s32.totalorder %s238, %s252
      %p254 = scmp.eq.s32.totalorder %s50, 0
      %p255 = por %p253, %p254
      %s257 = sadd.s32 %s256, 1
      %p260 = scmp.eq.s32.totalorder %s44, 1
      %p261 = scmp.ne.s32.totalorder %s256, %s258
      %p262 = scmp.eq.s32.totalorder %s44, 0
      %p263 = por %p261, %p262
      %p264 = scmp.ne.s32.totalorder %s256, %s258
      %p265 = scmp.eq.s32.totalorder %s49, 1
      %p266 = por %p264, %p265
      %p267 = scmp.ne.s32.totalorder %s258, %s259
      %p268 = scmp.eq.s32.totalorder %s49, 0
      %p269 = por %p267, %p268
      %p270 = scmp.ne.s32.totalorder %s258, %s259
      %p271 = scmp.eq.s32.totalorder %s50, 1
      %p272 = por %p270, %p271
      %p274 = scmp.ne.s32.totalorder %s259, %s273
      %p275 = scmp.eq.s32.totalorder %s50, 0
      %p276 = por %p274, %p275
      %s278 = sadd.s32 %s277, 1
      %p281 = scmp.eq.s32.totalorder %s44, 1
      %p282 = scmp.ne.s32.totalorder %s277, %s279
      %p283 = scmp.eq.s32.totalorder %s44, 0
      %p284 = por %p282, %p283
      %p285 = scmp.ne.s32.totalorder %s277, %s279
      %p286 = scmp.eq.s32.totalorder %s49, 1
      %p287 = por %p285, %p286
      %p288 = scmp.ne.s32.totalorder %s279, %s280
      %p289 = scmp.eq.s32.totalorder %s49, 0
      %p290 = por %p288, %p289
      %p291 = scmp.ne.s32.totalorder %s279, %s280
      %p292 = scmp.eq.s32.totalorder %s50, 1
      %p293 = por %p291, %p292
      %p295 = scmp.ne.s32.totalorder %s280, %s294
      %p296 = scmp.eq.s32.totalorder %s50, 0
      %p297 = por %p295, %p296
      %s299 = sadd.s32 %s298, 1
      %p302 = scmp.eq.s32.totalorder %s44, 1
      %p303 = scmp.ne.s32.totalorder %s298, %s300
      %p304 = scmp.eq.s32.totalorder %s44, 0
      %p305 = por %p303, %p304
      %p306 = scmp.ne.s32.totalorder %s298, %s300
      %p307 = scmp.eq.s32.totalorder %s49, 1
      %p308 = por %p306, %p307
      %p309 = scmp.ne.s32.totalorder %s300, %s301
      %p310 = scmp.eq.s32.totalorder %s49, 0
      %p311 = por %p309, %p310
      %p312 = scmp.ne.s32.totalorder %s300, %s301
      %p313 = scmp.eq.s32.totalorder %s50, 1
      %p314 = por %p312, %p313
      %p316 = scmp.ne.s32.totalorder %s301, %s315
      %p317 = scmp.eq.s32.totalorder %s50, 0
      %p318 = por %p316, %p317
      %s320 = sadd.s32 %s319, 1
      %p323 = scmp.eq.s32.totalorder %s44, 1
      %p324 = scmp.ne.s32.totalorder %s319, %s321
      %p325 = scmp.eq.s32.totalorder %s44, 0
      %p326 = por %p324, %p325
      %p327 = scmp.ne.s32.totalorder %s319, %s321
      %p328 = scmp.eq.s32.totalorder %s49, 1
      %p329 = por %p327, %p328
      %p330 = scmp.ne.s32.totalorder %s321, %s322
      %p331 = scmp.eq.s32.totalorder %s49, 0
      %p332 = por %p330, %p331
      %p333 = scmp.ne.s32.totalorder %s321, %s322
      %p334 = scmp.eq.s32.totalorder %s50, 1
      %p335 = por %p333, %p334
      %p337 = scmp.ne.s32.totalorder %s322, %s336
      %p338 = scmp.eq.s32.totalorder %s50, 0
      %p339 = por %p337, %p338
      %s341 = sadd.s32 %s340, 1
      %p344 = scmp.eq.s32.totalorder %s44, 1
      %p345 = scmp.ne.s32.totalorder %s340, %s342
      %p346 = scmp.eq.s32.totalorder %s44, 0
      %p347 = por %p345, %p346
      %p348 = scmp.ne.s32.totalorder %s340, %s342
      %p349 = scmp.eq.s32.totalorder %s49, 1
      %p350 = por %p348, %p349
      %p351 = scmp.ne.s32.totalorder %s342, %s343
      %p352 = scmp.eq.s32.totalorder %s49, 0
      %p353 = por %p351, %p352
      %p354 = scmp.ne.s32.totalorder %s342, %s343
      %p355 = scmp.eq.s32.totalorder %s50, 1
      %p356 = por %p354, %p355
      %p358 = scmp.ne.s32.totalorder %s343, %s357
      %p359 = scmp.eq.s32.totalorder %s50, 0
      %p360 = por %p358, %p359
      %s362 = sadd.s32 %s361, 1
      %p365 = scmp.eq.s32.totalorder %s44, 1
      %p366 = scmp.ne.s32.totalorder %s361, %s363
      %p367 = scmp.eq.s32.totalorder %s44, 0
      %p368 = por %p366, %p367
      %p369 = scmp.ne.s32.totalorder %s361, %s363
      %p370 = scmp.eq.s32.totalorder %s49, 1
      %p371 = por %p369, %p370
      %p372 = scmp.ne.s32.totalorder %s363, %s364
      %p373 = scmp.eq.s32.totalorder %s49, 0
      %p374 = por %p372, %p373
      %p375 = scmp.ne.s32.totalorder %s363, %s364
      %p376 = scmp.eq.s32.totalorder %s50, 1
      %p377 = por %p375, %p376
      %p379 = scmp.ne.s32.totalorder %s364, %s378
      %p380 = scmp.eq.s32.totalorder %s50, 0
      %p381 = por %p379, %p380
      %s383 = sadd.s32 %s382, 1
      %p386 = scmp.eq.s32.totalorder %s44, 1
      %p387 = scmp.ne.s32.totalorder %s382, %s384
      %p388 = scmp.eq.s32.totalorder %s44, 0
      %p389 = por %p387, %p388
      %p390 = scmp.ne.s32.totalorder %s382, %s384
      %p391 = scmp.eq.s32.totalorder %s49, 1
      %p392 = por %p390, %p391
      %p393 = scmp.ne.s32.totalorder %s384, %s385
      %p394 = scmp.eq.s32.totalorder %s49, 0
      %p395 = por %p393, %p394
      %p396 = scmp.ne.s32.totalorder %s384, %s385
      %p397 = scmp.eq.s32.totalorder %s50, 1
      %p398 = por %p396, %p397
      %p400 = scmp.ne.s32.totalorder %s385, %s399
      %p401 = scmp.eq.s32.totalorder %s50, 0
      %p402 = por %p400, %p401
      %s403 = ssub.s32 %s44, %s51
      %p404 = scmp.eq.s32.totalorder %s403, 0
      %s406 = sadd.s32 %s405, 1
      %s407 = scalar_select %p404, %s405, %s406
      %p410 = pneg %p404
      %p411 = scmp.eq.s32.totalorder %s44, 1
      %p412 = por %p410, %p411
      %p413 = scmp.ne.s32.totalorder %s405, %s408
      %p414 = scmp.eq.s32.totalorder %s44, 0
      %p415 = por %p413, %p414
      %p416 = scmp.ne.s32.totalorder %s405, %s408
      %p417 = scmp.eq.s32.totalorder %s49, 1
      %p418 = por %p416, %p417
      %p419 = scmp.ne.s32.totalorder %s408, %s409
      %p420 = scmp.eq.s32.totalorder %s49, 0
      %p421 = por %p419, %p420
      %p422 = scmp.ne.s32.totalorder %s408, %s409
      %p423 = scmp.eq.s32.totalorder %s50, 1
      %p424 = por %p422, %p423
      %p426 = scmp.ne.s32.totalorder %s409, %s425
      %p427 = scmp.eq.s32.totalorder %s50, 0
      %p428 = por %p426, %p427
      %s429 = ssub.s32 %s44, %s51
      %p430 = scmp.eq.s32.totalorder %s429, 0
      %s432 = sadd.s32 %s431, 1
      %s433 = scalar_select %p430, %s431, %s432
      %p436 = pneg %p430
      %p437 = scmp.eq.s32.totalorder %s44, 1
      %p438 = por %p436, %p437
      %p439 = scmp.ne.s32.totalorder %s431, %s434
      %p440 = scmp.eq.s32.totalorder %s44, 0
      %p441 = por %p439, %p440
      %p442 = scmp.ne.s32.totalorder %s431, %s434
      %p443 = scmp.eq.s32.totalorder %s49, 1
      %p444 = por %p442, %p443
      %p445 = scmp.ne.s32.totalorder %s434, %s435
      %p446 = scmp.eq.s32.totalorder %s49, 0
      %p447 = por %p445, %p446
      %p448 = scmp.ne.s32.totalorder %s434, %s435
      %p449 = scmp.eq.s32.totalorder %s50, 1
      %p450 = por %p448, %p449
      %p452 = scmp.ne.s32.totalorder %s435, %s451
      %p453 = scmp.eq.s32.totalorder %s50, 0
      %p454 = por %p452, %p453
      %s455 = ssub.s32 %s44, %s51
      %p456 = scmp.eq.s32.totalorder %s455, 0
      %s458 = sadd.s32 %s457, 1
      %s459 = scalar_select %p456, %s457, %s458
      %p462 = pneg %p456
      %p463 = scmp.eq.s32.totalorder %s44, 1
      %p464 = por %p462, %p463
      %p465 = scmp.ne.s32.totalorder %s457, %s460
      %p466 = scmp.eq.s32.totalorder %s44, 0
      %p467 = por %p465, %p466
      %p468 = scmp.ne.s32.totalorder %s457, %s460
      %p469 = scmp.eq.s32.totalorder %s49, 1
      %p470 = por %p468, %p469
      %p471 = scmp.ne.s32.totalorder %s460, %s461
      %p472 = scmp.eq.s32.totalorder %s49, 0
      %p473 = por %p471, %p472
      %p474 = scmp.ne.s32.totalorder %s460, %s461
      %p475 = scmp.eq.s32.totalorder %s50, 1
      %p476 = por %p474, %p475
      %p478 = scmp.ne.s32.totalorder %s461, %s477
      %p479 = scmp.eq.s32.totalorder %s50, 0
      %p480 = por %p478, %p479
      %p481 = scmp.le.s32.totalorder 1, %s44
      %p482 = scmp.lt.s32.totalorder %s44, 3
      %p483 = pnand %p481, %p482
      %p484 = pneg %p483
      // Predicated region
      $region9: #{tpu_custom_call.1} parent=5 // pred_check
        _
      $region10: #{tpu_custom_call.1} parent=5 // pred_check_branch
        %486 = sbr.rel (%p483) target = $region12
      $region11: #{tpu_custom_call.1} parent=5 // pred_region
        %s487 = ssub.s32 %s44, 1
        // Predicated region
        $region13: #{tpu_custom_call.1} parent=11 // pred_check
          %p488 = pneg %p143
        $region14: #{tpu_custom_call.1} parent=11 // pred_check_branch
          %490 = sbr.rel (%p488) target = $region16
        $region15: #{tpu_custom_call.1} parent=11 // pred_region
          %s492 = ssub.s32 384, 384
          %493 = vsyncadd [#allocation9], %s492
          %s494 = sshll.u32 [#allocation8], 4
          %s495 = int_to_ptr.vmem [resolvable:$true] %s494
          %500 = dma.hbm_to_vmem [thread:$0]  %s3, 384, %s495, [#allocation9], 128, 128, 8
        $region16: #{tpu_custom_call.1} parent=11 // pred_fallthru
          _
        // Predicated region
        $region17: #{tpu_custom_call.1} parent=11 // pred_check
          %p501 = pneg %p164
        $region18: #{tpu_custom_call.1} parent=11 // pred_check_branch
          %503 = sbr.rel (%p501) target = $region20
        $region19: #{tpu_custom_call.1} parent=11 // pred_region
          %s505 = ssub.s32 16, 16
          %506 = vsyncadd [#allocation9], %s505
          %s508 = sshll.u32 [#allocation10], 4
          %s509 = int_to_ptr.vmem [resolvable:$true] %s508
          %511 = dma.hbm_to_vmem [thread:$0]  %s4, 16, %s509, [#allocation9]
        $region20: #{tpu_custom_call.1} parent=11 // pred_fallthru
          _
        // Predicated region
        $region21: #{tpu_custom_call.1} parent=11 // pred_check
          %p512 = pneg %p185
        $region22: #{tpu_custom_call.1} parent=11 // pred_check_branch
          %514 = sbr.rel (%p512) target = $region24
        $region23: #{tpu_custom_call.1} parent=11 // pred_region
          %s516 = ssub.s32 512, 512
          %517 = vsyncadd [#allocation12], %s516
          %s518 = sshll.u32 [#allocation11], 4
          %s519 = int_to_ptr.vmem [resolvable:$true] %s518
          %524 = dma.hbm_to_vmem [thread:$0]  %s5, 512, %s519, [#allocation12], 128, 128, 8
        $region24: #{tpu_custom_call.1} parent=11 // pred_fallthru
          _
        // Predicated region
        $region25: #{tpu_custom_call.1} parent=11 // pred_check
          %p525 = pneg %p206
        $region26: #{tpu_custom_call.1} parent=11 // pred_check_branch
          %527 = sbr.rel (%p525) target = $region28
        $region27: #{tpu_custom_call.1} parent=11 // pred_region
          %s529 = ssub.s32 16, 16
          %530 = vsyncadd [#allocation12], %s529
          %s532 = sshll.u32 [#allocation13], 4
          %s533 = int_to_ptr.vmem [resolvable:$true] %s532
          %535 = dma.hbm_to_vmem [thread:$0]  %s6, 16, %s533, [#allocation12]
        $region28: #{tpu_custom_call.1} parent=11 // pred_fallthru
          _
        // Predicated region
        $region29: #{tpu_custom_call.1} parent=11 // pred_check
          %p536 = pneg %p227
        $region30: #{tpu_custom_call.1} parent=11 // pred_check_branch
          %538 = sbr.rel (%p536) target = $region32
        $region31: #{tpu_custom_call.1} parent=11 // pred_region
          %s540 = ssub.s32 512, 512
          %541 = vsyncadd [#allocation15], %s540
          %s542 = sshll.u32 [#allocation14], 4
          %s543 = int_to_ptr.vmem [resolvable:$true] %s542
          %548 = dma.hbm_to_vmem [thread:$0]  %s7, 512, %s543, [#allocation15], 128, 128, 8
        $region32: #{tpu_custom_call.1} parent=11 // pred_fallthru
          _
        // Predicated region
        $region33: #{tpu_custom_call.1} parent=11 // pred_check
          %p549 = pneg %p248
        $region34: #{tpu_custom_call.1} parent=11 // pred_check_branch
          %551 = sbr.rel (%p549) target = $region36
        $region35: #{tpu_custom_call.1} parent=11 // pred_region
          %s553 = ssub.s32 16, 16
          %554 = vsyncadd [#allocation15], %s553
          %s556 = sshll.u32 [#allocation16], 4
          %s557 = int_to_ptr.vmem [resolvable:$true] %s556
          %559 = dma.hbm_to_vmem [thread:$0]  %s8, 16, %s557, [#allocation15]
        $region36: #{tpu_custom_call.1} parent=11 // pred_fallthru
          _
        // Predicated region
        $region37: #{tpu_custom_call.1} parent=11 // pred_check
          %p560 = pneg %p269
        $region38: #{tpu_custom_call.1} parent=11 // pred_check_branch
          %562 = sbr.rel (%p560) target = $region40
        $region39: #{tpu_custom_call.1} parent=11 // pred_region
          %s564 = ssub.s32 128, 128
          %565 = vsyncadd [#allocation18], %s564
          %s567 = sshll.u32 [#allocation17], 4
          %s568 = int_to_ptr.vmem [resolvable:$true] %s567
          %570 = dma.hbm_to_vmem [thread:$0]  %s9, 128, %s568, [#allocation18]
        $region40: #{tpu_custom_call.1} parent=11 // pred_fallthru
          _
        // Predicated region
        $region41: #{tpu_custom_call.1} parent=11 // pred_check
          %p571 = pneg %p290
        $region42: #{tpu_custom_call.1} parent=11 // pred_check_branch
          %573 = sbr.rel (%p571) target = $region44
        $region43: #{tpu_custom_call.1} parent=11 // pred_region
          %s575 = ssub.s32 64, 64
          %576 = vsyncadd [#allocation18], %s575
          %s578 = sshll.u32 [#allocation19], 4
          %s579 = int_to_ptr.vmem [resolvable:$true] %s578
          %581 = dma.hbm_to_vmem [thread:$0]  %s10, 64, %s579, [#allocation18]
        $region44: #{tpu_custom_call.1} parent=11 // pred_fallthru
          _
        // Predicated region
        $region45: #{tpu_custom_call.1} parent=11 // pred_check
          %p582 = pneg %p311
        $region46: #{tpu_custom_call.1} parent=11 // pred_check_branch
          %584 = sbr.rel (%p582) target = $region48
        $region47: #{tpu_custom_call.1} parent=11 // pred_region
          %s586 = ssub.s32 16, 16
          %587 = vsyncadd [#allocation21], %s586
          %s589 = sshll.u32 [#allocation20], 4
          %s590 = int_to_ptr.vmem [resolvable:$true] %s589
          %592 = dma.hbm_to_vmem [thread:$0]  %s11, 16, %s590, [#allocation21]
        $region48: #{tpu_custom_call.1} parent=11 // pred_fallthru
          _
        // Predicated region
        $region49: #{tpu_custom_call.1} parent=11 // pred_check
          %p593 = pneg %p332
        $region50: #{tpu_custom_call.1} parent=11 // pred_check_branch
          %595 = sbr.rel (%p593) target = $region52
        $region51: #{tpu_custom_call.1} parent=11 // pred_region
          %s597 = ssub.s32 512, 512
          %598 = vsyncadd [#allocation21], %s597
          %s599 = sshll.u32 [#allocation22], 4
          %s600 = int_to_ptr.vmem [resolvable:$true] %s599
          %605 = dma.hbm_to_vmem [thread:$0]  %s12, 512, %s600, [#allocation21], 128, 128, 8
        $region52: #{tpu_custom_call.1} parent=11 // pred_fallthru
          _
        // Predicated region
        $region53: #{tpu_custom_call.1} parent=11 // pred_check
          %p606 = pneg %p353
        $region54: #{tpu_custom_call.1} parent=11 // pred_check_branch
          %608 = sbr.rel (%p606) target = $region56
        $region55: #{tpu_custom_call.1} parent=11 // pred_region
          %s610 = ssub.s32 16, 16
          %611 = vsyncadd [#allocation24], %s610
          %s613 = sshll.u32 [#allocation23], 4
          %s614 = int_to_ptr.vmem [resolvable:$true] %s613
          %616 = dma.hbm_to_vmem [thread:$0]  %s13, 16, %s614, [#allocation24]
        $region56: #{tpu_custom_call.1} parent=11 // pred_fallthru
          _
        // Predicated region
        $region57: #{tpu_custom_call.1} parent=11 // pred_check
          %p617 = pneg %p374
        $region58: #{tpu_custom_call.1} parent=11 // pred_check_branch
          %619 = sbr.rel (%p617) target = $region60
        $region59: #{tpu_custom_call.1} parent=11 // pred_region
          %s621 = ssub.s32 512, 512
          %622 = vsyncadd [#allocation24], %s621
          %s623 = sshll.u32 [#allocation25], 4
          %s624 = int_to_ptr.vmem [resolvable:$true] %s623
          %629 = dma.hbm_to_vmem [thread:$0]  %s14, 512, %s624, [#allocation24], 128, 128, 8
        $region60: #{tpu_custom_call.1} parent=11 // pred_fallthru
          _
        // Predicated region
        $region61: #{tpu_custom_call.1} parent=11 // pred_check
          %p630 = pneg %p395
        $region62: #{tpu_custom_call.1} parent=11 // pred_check_branch
          %632 = sbr.rel (%p630) target = $region64
        $region63: #{tpu_custom_call.1} parent=11 // pred_region
          %s634 = ssub.s32 16, 16
          %635 = vsyncadd [#allocation27], %s634
          %s637 = sshll.u32 [#allocation26], 4
          %s638 = int_to_ptr.vmem [resolvable:$true] %s637
          %640 = dma.hbm_to_vmem [thread:$0]  %s15, 16, %s638, [#allocation27]
        $region64: #{tpu_custom_call.1} parent=11 // pred_fallthru
          _
      $region12: #{tpu_custom_call.1} parent=5 // pred_fallthru
        _
      %p641 = scmp.lt.s32.totalorder %s44, 2
      // Predicated region
      $region65: #{tpu_custom_call.1} parent=5 // pred_check
        %p642 = pneg %p641
      $region66: #{tpu_custom_call.1} parent=5 // pred_check_branch
        %644 = sbr.rel (%p642) target = $region68
      $region67: #{tpu_custom_call.1} parent=5 // pred_region
        // Predicated region
        $region69: #{tpu_custom_call.1} parent=67 // pred_check
          %p645 = pneg %p64
        $region70: #{tpu_custom_call.1} parent=67 // pred_check_branch
          %647 = sbr.rel (%p645) target = $region72
        $region71: #{tpu_custom_call.1} parent=67 // pred_region
          %s648 = sand.u32 %s54, 1
          %s649 = scalar_lea.sflag [#allocation3], %s648
          %s650 = sand.u32 %s54, 1
          %s651 = smul.addr %s650, 8
          %s652 = scalar_lea.vmem [#allocation2], %s651
          %s654 = ssub.s32 128, 128
          %655 = vsyncadd %s649, %s654
          %s656 = smul.addr %s44, 128
          %s657 = scalar_lea.hbm %s0, %s656
          %s659 = sshll.u32 %s652, 4
          %s660 = int_to_ptr.vmem [resolvable:$true] %s659
          %662 = dma.hbm_to_vmem [thread:$0]  %s657, 128, %s660, %s649
        $region72: #{tpu_custom_call.1} parent=67 // pred_fallthru
          _
        // Predicated region
        $region73: #{tpu_custom_call.1} parent=67 // pred_check
          %p663 = pneg %p90
        $region74: #{tpu_custom_call.1} parent=67 // pred_check_branch
          %665 = sbr.rel (%p663) target = $region76
        $region75: #{tpu_custom_call.1} parent=67 // pred_region
          %s666 = sand.u32 %s44, 1
          %s667 = scalar_lea.sflag [#allocation6], %s666
          %s668 = sand.u32 %s80, 1
          %s669 = smul.addr %s668, 8
          %s670 = scalar_lea.vmem [#allocation5], %s669
          %s672 = ssub.s32 128, 128
          %673 = vsyncadd %s667, %s672
          %s674 = smul.addr %s44, 128
          %s675 = scalar_lea.hbm %s1, %s674
          %s677 = sshll.u32 %s670, 4
          %s678 = int_to_ptr.vmem [resolvable:$true] %s677
          %680 = dma.hbm_to_vmem [thread:$0]  %s675, 128, %s678, %s667
        $region76: #{tpu_custom_call.1} parent=67 // pred_fallthru
          _
        // Predicated region
        $region77: #{tpu_custom_call.1} parent=67 // pred_check
          %p681 = pneg %p116
        $region78: #{tpu_custom_call.1} parent=67 // pred_check_branch
          %683 = sbr.rel (%p681) target = $region80
        $region79: #{tpu_custom_call.1} parent=67 // pred_region
          %s684 = sand.u32 %s44, 1
          %s685 = scalar_lea.sflag [#allocation6], %s684
          %s686 = sand.u32 %s106, 1
          %s687 = smul.addr %s686, 8
          %s688 = scalar_lea.vmem [#allocation7], %s687
          %s690 = ssub.s32 128, 128
          %691 = vsyncadd %s685, %s690
          %s692 = smul.addr %s44, 128
          %s693 = scalar_lea.hbm %s2, %s692
          %s695 = sshll.u32 %s688, 4
          %s696 = int_to_ptr.vmem [resolvable:$true] %s695
          %698 = dma.hbm_to_vmem [thread:$0]  %s693, 128, %s696, %s685
        $region80: #{tpu_custom_call.1} parent=67 // pred_fallthru
          _
      $region68: #{tpu_custom_call.1} parent=5 // pred_fallthru
        _
      %p699 = scmp.le.s32.totalorder 1, %s44
      %p700 = scmp.lt.s32.totalorder %s44, 3
      %p701 = pnand %p699, %p700
      %p702 = pneg %p701
      // Predicated region
      $region81: #{tpu_custom_call.1} parent=5 // pred_check
        _
      $region82: #{tpu_custom_call.1} parent=5 // pred_check_branch
        %704 = sbr.rel (%p701) target = $region84
      $region83: #{tpu_custom_call.1} parent=5 // pred_region
        %s705 = ssub.s32 %s44, 1
        %s706 = sand.u32 %s57, 1
        %s707 = scalar_lea.sflag [#allocation3], %s706
        %s708 = sand.u32 %s57, 1
        %s709 = smul.addr %s708, 8
        %s710 = scalar_lea.vmem [#allocation2], %s709
        // Predicated region
        $region85: #{tpu_custom_call.1} parent=83 // pred_check
          %p711 = pneg %p70
        $region86: #{tpu_custom_call.1} parent=83 // pred_check_branch
          %713 = sbr.rel (%p711) target = $region88
        $region87: #{tpu_custom_call.1} parent=83 // pred_region
          %714 = dma.done %s707, 128
        $region88: #{tpu_custom_call.1} parent=83 // pred_fallthru
          _
        %s715 = sand.u32 %s49, 1
        %s716 = scalar_lea.sflag [#allocation6], %s715
        %s717 = sand.u32 %s83, 1
        %s718 = smul.addr %s717, 8
        %s719 = scalar_lea.vmem [#allocation5], %s718
        // Predicated region
        $region89: #{tpu_custom_call.1} parent=83 // pred_check
          %p720 = pneg %p96
        $region90: #{tpu_custom_call.1} parent=83 // pred_check_branch
          %722 = sbr.rel (%p720) target = $region92
        $region91: #{tpu_custom_call.1} parent=83 // pred_region
          %723 = dma.done %s716, 128
        $region92: #{tpu_custom_call.1} parent=83 // pred_fallthru
          _
        %s724 = sand.u32 %s49, 1
        %s725 = scalar_lea.sflag [#allocation6], %s724
        %s726 = sand.u32 %s109, 1
        %s727 = smul.addr %s726, 8
        %s728 = scalar_lea.vmem [#allocation7], %s727
        // Predicated region
        $region93: #{tpu_custom_call.1} parent=83 // pred_check
          %p729 = pneg %p122
        $region94: #{tpu_custom_call.1} parent=83 // pred_check_branch
          %731 = sbr.rel (%p729) target = $region96
        $region95: #{tpu_custom_call.1} parent=83 // pred_region
          %732 = dma.done %s725, 128
        $region96: #{tpu_custom_call.1} parent=83 // pred_fallthru
          _
        // Predicated region
        $region97: #{tpu_custom_call.1} parent=83 // pred_check
          %p733 = pneg %p143
        $region98: #{tpu_custom_call.1} parent=83 // pred_check_branch
          %735 = sbr.rel (%p733) target = $region100
        $region99: #{tpu_custom_call.1} parent=83 // pred_region
          %736 = dma.done [#allocation9], 384
        $region100: #{tpu_custom_call.1} parent=83 // pred_fallthru
          _
        // Predicated region
        $region101: #{tpu_custom_call.1} parent=83 // pred_check
          %p737 = pneg %p164
        $region102: #{tpu_custom_call.1} parent=83 // pred_check_branch
          %739 = sbr.rel (%p737) target = $region104
        $region103: #{tpu_custom_call.1} parent=83 // pred_region
          %740 = dma.done [#allocation9], 16
        $region104: #{tpu_custom_call.1} parent=83 // pred_fallthru
          _
        // Predicated region
        $region105: #{tpu_custom_call.1} parent=83 // pred_check
          %p741 = pneg %p185
        $region106: #{tpu_custom_call.1} parent=83 // pred_check_branch
          %743 = sbr.rel (%p741) target = $region108
        $region107: #{tpu_custom_call.1} parent=83 // pred_region
          %744 = dma.done [#allocation12], 512
        $region108: #{tpu_custom_call.1} parent=83 // pred_fallthru
          _
        // Predicated region
        $region109: #{tpu_custom_call.1} parent=83 // pred_check
          %p745 = pneg %p206
        $region110: #{tpu_custom_call.1} parent=83 // pred_check_branch
          %747 = sbr.rel (%p745) target = $region112
        $region111: #{tpu_custom_call.1} parent=83 // pred_region
          %748 = dma.done [#allocation12], 16
        $region112: #{tpu_custom_call.1} parent=83 // pred_fallthru
          _
        // Predicated region
        $region113: #{tpu_custom_call.1} parent=83 // pred_check
          %p749 = pneg %p227
        $region114: #{tpu_custom_call.1} parent=83 // pred_check_branch
          %751 = sbr.rel (%p749) target = $region116
        $region115: #{tpu_custom_call.1} parent=83 // pred_region
          %752 = dma.done [#allocation15], 512
        $region116: #{tpu_custom_call.1} parent=83 // pred_fallthru
          _
        // Predicated region
        $region117: #{tpu_custom_call.1} parent=83 // pred_check
          %p753 = pneg %p248
        $region118: #{tpu_custom_call.1} parent=83 // pred_check_branch
          %755 = sbr.rel (%p753) target = $region120
        $region119: #{tpu_custom_call.1} parent=83 // pred_region
          %756 = dma.done [#allocation15], 16
        $region120: #{tpu_custom_call.1} parent=83 // pred_fallthru
          _
        // Predicated region
        $region121: #{tpu_custom_call.1} parent=83 // pred_check
          %p757 = pneg %p269
        $region122: #{tpu_custom_call.1} parent=83 // pred_check_branch
          %759 = sbr.rel (%p757) target = $region124
        $region123: #{tpu_custom_call.1} parent=83 // pred_region
          %760 = dma.done [#allocation18], 128
        $region124: #{tpu_custom_call.1} parent=83 // pred_fallthru
          _
        // Predicated region
        $region125: #{tpu_custom_call.1} parent=83 // pred_check
          %p761 = pneg %p290
        $region126: #{tpu_custom_call.1} parent=83 // pred_check_branch
          %763 = sbr.rel (%p761) target = $region128
        $region127: #{tpu_custom_call.1} parent=83 // pred_region
          %764 = dma.done [#allocation18], 64
        $region128: #{tpu_custom_call.1} parent=83 // pred_fallthru
          _
        // Predicated region
        $region129: #{tpu_custom_call.1} parent=83 // pred_check
          %p765 = pneg %p311
        $region130: #{tpu_custom_call.1} parent=83 // pred_check_branch
          %767 = sbr.rel (%p765) target = $region132
        $region131: #{tpu_custom_call.1} parent=83 // pred_region
          %768 = dma.done [#allocation21], 16
        $region132: #{tpu_custom_call.1} parent=83 // pred_fallthru
          _
        // Predicated region
        $region133: #{tpu_custom_call.1} parent=83 // pred_check
          %p769 = pneg %p332
        $region134: #{tpu_custom_call.1} parent=83 // pred_check_branch
          %771 = sbr.rel (%p769) target = $region136
        $region135: #{tpu_custom_call.1} parent=83 // pred_region
          %772 = dma.done [#allocation21], 512
        $region136: #{tpu_custom_call.1} parent=83 // pred_fallthru
          _
        // Predicated region
        $region137: #{tpu_custom_call.1} parent=83 // pred_check
          %p773 = pneg %p353
        $region138: #{tpu_custom_call.1} parent=83 // pred_check_branch
          %775 = sbr.rel (%p773) target = $region140
        $region139: #{tpu_custom_call.1} parent=83 // pred_region
          %776 = dma.done [#allocation24], 16
        $region140: #{tpu_custom_call.1} parent=83 // pred_fallthru
          _
        // Predicated region
        $region141: #{tpu_custom_call.1} parent=83 // pred_check
          %p777 = pneg %p374
        $region142: #{tpu_custom_call.1} parent=83 // pred_check_branch
          %779 = sbr.rel (%p777) target = $region144
        $region143: #{tpu_custom_call.1} parent=83 // pred_region
          %780 = dma.done [#allocation24], 512
        $region144: #{tpu_custom_call.1} parent=83 // pred_fallthru
          _
        // Predicated region
        $region145: #{tpu_custom_call.1} parent=83 // pred_check
          %p781 = pneg %p395
        $region146: #{tpu_custom_call.1} parent=83 // pred_check_branch
          %783 = sbr.rel (%p781) target = $region148
        $region147: #{tpu_custom_call.1} parent=83 // pred_region
          %784 = dma.done [#allocation27], 16
        $region148: #{tpu_custom_call.1} parent=83 // pred_fallthru
          _
        %s785 = sand.u32 %s57, 1
        %s786 = scalar_lea.sflag [#allocation3], %s785
        %s787 = sand.u32 %s57, 1
        %s788 = smul.addr %s787, 8
        %s789 = scalar_lea.vmem [#allocation2], %s788
        %p790 = pneg %p70
        %p791 = pneg %p67
        %s792 = sand.u32 %s49, 1
        %s793 = scalar_lea.sflag [#allocation6], %s792
        %s794 = sand.u32 %s83, 1
        %s795 = smul.addr %s794, 8
        %s796 = scalar_lea.vmem [#allocation5], %s795
        %p797 = pneg %p96
        %p798 = pneg %p93
        %s799 = sand.u32 %s49, 1
        %s800 = scalar_lea.sflag [#allocation6], %s799
        %s801 = sand.u32 %s109, 1
        %s802 = smul.addr %s801, 8
        %s803 = scalar_lea.vmem [#allocation7], %s802
        %p804 = pneg %p122
        %p805 = pneg %p119
        %p806 = pneg %p143
        %p807 = pneg %p140
        %p808 = pneg %p164
        %p809 = pneg %p161
        %p810 = pneg %p185
        %p811 = pneg %p182
        %p812 = pneg %p206
        %p813 = pneg %p203
        %p814 = pneg %p227
        %p815 = pneg %p224
        %p816 = pneg %p248
        %p817 = pneg %p245
        %p818 = pneg %p269
        %p819 = pneg %p266
        %p820 = pneg %p290
        %p821 = pneg %p287
        %p822 = pneg %p311
        %p823 = pneg %p308
        %p824 = pneg %p332
        %p825 = pneg %p329
        %p826 = pneg %p353
        %p827 = pneg %p350
        %p828 = pneg %p374
        %p829 = pneg %p371
        %p830 = pneg %p395
        %p831 = pneg %p392
        %p832 = pneg %p421
        %p833 = pneg %p418
        %s834 = sand.u32 %s408, 1
        %s835 = scalar_lea.sflag [#allocation4], %s834
        %s836 = sand.u32 %s408, 1
        %s837 = smul.addr %s836, 8
        %s838 = scalar_lea.vmem [#allocation28], %s837
        %p839 = pneg %p447
        %p840 = pneg %p444
        %s841 = sand.u32 %s49, 1
        %s842 = scalar_lea.sflag [#allocation30], %s841
        %s843 = sand.u32 %s434, 1
        %s844 = smul.addr %s843, 8
        %s845 = scalar_lea.vmem [#allocation29], %s844
        %p846 = pneg %p473
        %p847 = pneg %p470
        %s848 = sand.u32 %s49, 1
        %s849 = scalar_lea.sflag [#allocation30], %s848
        %s850 = sand.u32 %s460, 1
        %s851 = smul.addr %s850, 8
        %s852 = scalar_lea.vmem [#allocation31], %s851
        %v853 = vld [vmem:[%s710] sm:$0xff]
        %v854 = vld [vmem:[#allocation8] sm:$0xff]
        %v855 = vld [vmem:[#allocation8 + $0x8] sm:$0xff]
        %v856 = vld [vmem:[#allocation8 + $0x10] sm:$0xf]
        %v857 = vld [vmem:[#allocation10] sm:$0x1]
        %v859 = vlaneseq
        %v860 = vshrl.u32 %v859, 7
        %v861 = vsub.s32 0, %v860
        %v862 = vrot.slane %v857, %v861
        %vm864 = vcmask 162816
        %v866 = vsel %vm864, %v853, 0
        %vm868 = vcmask 1043456
        %v870 = vsel %vm868, %v856, 0
        %872 = vmatprep.subr.mxu0 0.0
        %873 = vmatpush1.msra.mxu0 %v854
        %874 = vmatprep.subr.mxu0 0.0
        %875 = vmatpush1.msra.mxu0 %v855
        %876 = vmatprep.subr.mxu0 0.0
        %877 = vmatpush1.msra.mxu0 %v870
        %878 = vmatprep.subr.mxu0 0.0
        %879 = vmatpush1.msra.mxu0 0.0
        %880 = vmatprep.subr.mxu0 0.0
        %881 = vmatpush1.msra.mxu0 0.0
        %882 = vmatprep.subr.mxu0 0.0
        %883 = vmatpush1.msra.mxu0 0.0
        %884 = vmatprep.subr.mxu0 0.0
        %885 = vmatpush1.msra.mxu0 0.0
        %886 = vmatprep.subr.mxu0 0.0
        %887 = vmatpush1.msra.mxu0 0.0
        %888 = vmatprep.subr.mxu0 0.0
        %889 = vmatpush1.msra.mxu0 0.0
        %890 = vmatprep.subr.mxu0 0.0
        %891 = vmatpush1.msra.mxu0 0.0
        %892 = vmatprep.subr.mxu0 0.0
        %893 = vmatpush1.msra.mxu0 0.0
        %894 = vmatprep.subr.mxu0 0.0
        %895 = vmatpush1.msra.mxu0 0.0
        %896 = vmatprep.subr.mxu0 0.0
        %897 = vmatpush1.msra.mxu0 0.0
        %898 = vmatprep.subr.mxu0 0.0
        %899 = vmatpush1.msra.mxu0 0.0
        %900 = vmatprep.subr.mxu0 0.0
        %901 = vmatpush1.msra.mxu0 0.0
        %902 = vmatprep.subr.mxu0 0.0
        %903 = vmatpush1.msra.mxu0 0.0
        %904 = vmatprep.subr.mxu0 0.0
        %905 = vmatpush1.msra.mxu0 0.0
        %906 = vmatprep.subr.mxu0 0.0
        %907 = vmatpush1.msra.mxu0 0.0
        %908 = vmatprep.subr.mxu0 0.0
        %909 = vmatpush1.msra.mxu0 0.0
        %910 = vmatprep.subr.mxu0 0.0
        %911 = vmatpush1.msra.mxu0 0.0
        %912 = vmatprep.subr.mxu0 0.0
        %913 = vmatpush1.msra.mxu0 0.0
        %914 = vmatprep.subr.mxu0 0.0
        %915 = vmatpush1.msra.mxu0 0.0
        %916 = vmatprep.subr.mxu0 0.0
        %917 = vmatpush1.msra.mxu0 0.0
        %918 = vmatprep.subr.mxu0 0.0
        %919 = vmatpush1.msra.mxu0 0.0
        %920 = vmatprep.subr.mxu0 0.0
        %921 = vmatpush1.msra.mxu0 0.0
        %922 = vmatprep.subr.mxu0 0.0
        %923 = vmatpush1.msra.mxu0 0.0
        %924 = vmatprep.subr.mxu0 0.0
        %925 = vmatpush1.msra.mxu0 0.0
        %926 = vmatprep.subr.mxu0 0.0
        %927 = vmatpush1.msra.mxu0 0.0
        %928 = vmatprep.subr.mxu0 0.0
        %929 = vmatpush1.msra.mxu0 0.0
        %930 = vmatprep.subr.mxu0 0.0
        %931 = vmatpush1.msra.mxu0 0.0
        %932 = vmatprep.subr.mxu0 0.0
        %933 = vmatpush1.msra.mxu0 0.0
        %934 = vmatprep.subr.mxu0 0.0
        %935 = vmatpush1.msra.mxu0 0.0
        %936 = vmatprep.mubr.f32.mxu0 0.0
        %937 = vmatmul.mubr.f32.gmra.mrb[0].mxu0 %v866
        %v938 = vpop.f32.mrb[0].mxu0
        %v939 = vadd.f32 %v862, %v938
        %v940 = vpop.f32.mrb[0].mxu0
        %941 = vdwg.mxu0
        %v942 = vmax.f32 %v939, 0.0
        %v943 = vld [vmem:[#allocation11] sm:$0xff]
        %v944 = vld [vmem:[#allocation11 + $0x8] sm:$0xff]
        %v945 = vld [vmem:[#allocation11 + $0x10] sm:$0xff]
        %v946 = vld [vmem:[#allocation11 + $0x18] sm:$0xff]
        %v947 = vld [vmem:[#allocation13] sm:$0x1]
        %v949 = vlaneseq
        %v950 = vshrl.u32 %v949, 7
        %v951 = vsub.s32 0, %v950
        %v952 = vrot.slane %v947, %v951
        %vm954 = vcmask 261120
        %v956 = vsel %vm954, %v942, 0
        %958 = vmatprep.subr.mxu0 0.0
        %959 = vmatpush1.msra.mxu0 %v943
        %960 = vmatprep.subr.mxu0 0.0
        %961 = vmatpush1.msra.mxu0 %v944
        %962 = vmatprep.subr.mxu0 0.0
        %963 = vmatpush1.msra.mxu0 %v945
        %964 = vmatprep.subr.mxu0 0.0
        %965 = vmatpush1.msra.mxu0 %v946
        %966 = vmatprep.subr.mxu0 0.0
        %967 = vmatpush1.msra.mxu0 0.0
        %968 = vmatprep.subr.mxu0 0.0
        %969 = vmatpush1.msra.mxu0 0.0
        %970 = vmatprep.subr.mxu0 0.0
        %971 = vmatpush1.msra.mxu0 0.0
        %972 = vmatprep.subr.mxu0 0.0
        %973 = vmatpush1.msra.mxu0 0.0
        %974 = vmatprep.subr.mxu0 0.0
        %975 = vmatpush1.msra.mxu0 0.0
        %976 = vmatprep.subr.mxu0 0.0
        %977 = vmatpush1.msra.mxu0 0.0
        %978 = vmatprep.subr.mxu0 0.0
        %979 = vmatpush1.msra.mxu0 0.0
        %980 = vmatprep.subr.mxu0 0.0
        %981 = vmatpush1.msra.mxu0 0.0
        %982 = vmatprep.subr.mxu0 0.0
        %983 = vmatpush1.msra.mxu0 0.0
        %984 = vmatprep.subr.mxu0 0.0
        %985 = vmatpush1.msra.mxu0 0.0
        %986 = vmatprep.subr.mxu0 0.0
        %987 = vmatpush1.msra.mxu0 0.0
        %988 = vmatprep.subr.mxu0 0.0
        %989 = vmatpush1.msra.mxu0 0.0
        %990 = vmatprep.subr.mxu0 0.0
        %991 = vmatpush1.msra.mxu0 0.0
        %992 = vmatprep.subr.mxu0 0.0
        %993 = vmatpush1.msra.mxu0 0.0
        %994 = vmatprep.subr.mxu0 0.0
        %995 = vmatpush1.msra.mxu0 0.0
        %996 = vmatprep.subr.mxu0 0.0
        %997 = vmatpush1.msra.mxu0 0.0
        %998 = vmatprep.subr.mxu0 0.0
        %999 = vmatpush1.msra.mxu0 0.0
        %1000 = vmatprep.subr.mxu0 0.0
        %1001 = vmatpush1.msra.mxu0 0.0
        %1002 = vmatprep.subr.mxu0 0.0
        %1003 = vmatpush1.msra.mxu0 0.0
        %1004 = vmatprep.subr.mxu0 0.0
        %1005 = vmatpush1.msra.mxu0 0.0
        %1006 = vmatprep.subr.mxu0 0.0
        %1007 = vmatpush1.msra.mxu0 0.0
        %1008 = vmatprep.subr.mxu0 0.0
        %1009 = vmatpush1.msra.mxu0 0.0
        %1010 = vmatprep.subr.mxu0 0.0
        %1011 = vmatpush1.msra.mxu0 0.0
        %1012 = vmatprep.subr.mxu0 0.0
        %1013 = vmatpush1.msra.mxu0 0.0
        %1014 = vmatprep.subr.mxu0 0.0
        %1015 = vmatpush1.msra.mxu0 0.0
        %1016 = vmatprep.subr.mxu0 0.0
        %1017 = vmatpush1.msra.mxu0 0.0
        %1018 = vmatprep.subr.mxu0 0.0
        %1019 = vmatpush1.msra.mxu0 0.0
        %1020 = vmatprep.subr.mxu0 0.0
        %1021 = vmatpush1.msra.mxu0 0.0
        %1022 = vmatprep.mubr.f32.mxu0 0.0
        %1023 = vmatmul.mubr.f32.gmra.mrb[0].mxu0 %v956
        %v1024 = vpop.f32.mrb[0].mxu0
        %v1025 = vadd.f32 %v952, %v1024
        %v1026 = vpop.f32.mrb[0].mxu0
        %1027 = vdwg.mxu0
        %v1028 = vmax.f32 %v1025, 0.0
        %v1029 = vld [vmem:[#allocation14] sm:$0xff]
        %v1030 = vld [vmem:[#allocation14 + $0x8] sm:$0xff]
        %v1031 = vld [vmem:[#allocation14 + $0x10] sm:$0xff]
        %v1032 = vld [vmem:[#allocation14 + $0x18] sm:$0xff]
        %v1033 = vld [vmem:[#allocation16] sm:$0x1]
        %v1035 = vlaneseq
        %v1036 = vshrl.u32 %v1035, 7
        %v1037 = vsub.s32 0, %v1036
        %v1038 = vrot.slane %v1033, %v1037
        %v1041 = vsel %vm954, %v1028, 0
        %1043 = vmatprep.subr.mxu0 0.0
        %1044 = vmatpush1.msra.mxu0 %v1029
        %1045 = vmatprep.subr.mxu0 0.0
        %1046 = vmatpush1.msra.mxu0 %v1030
        %1047 = vmatprep.subr.mxu0 0.0
        %1048 = vmatpush1.msra.mxu0 %v1031
        %1049 = vmatprep.subr.mxu0 0.0
        %1050 = vmatpush1.msra.mxu0 %v1032
        %1051 = vmatprep.subr.mxu0 0.0
        %1052 = vmatpush1.msra.mxu0 0.0
        %1053 = vmatprep.subr.mxu0 0.0
        %1054 = vmatpush1.msra.mxu0 0.0
        %1055 = vmatprep.subr.mxu0 0.0
        %1056 = vmatpush1.msra.mxu0 0.0
        %1057 = vmatprep.subr.mxu0 0.0
        %1058 = vmatpush1.msra.mxu0 0.0
        %1059 = vmatprep.subr.mxu0 0.0
        %1060 = vmatpush1.msra.mxu0 0.0
        %1061 = vmatprep.subr.mxu0 0.0
        %1062 = vmatpush1.msra.mxu0 0.0
        %1063 = vmatprep.subr.mxu0 0.0
        %1064 = vmatpush1.msra.mxu0 0.0
        %1065 = vmatprep.subr.mxu0 0.0
        %1066 = vmatpush1.msra.mxu0 0.0
        %1067 = vmatprep.subr.mxu0 0.0
        %1068 = vmatpush1.msra.mxu0 0.0
        %1069 = vmatprep.subr.mxu0 0.0
        %1070 = vmatpush1.msra.mxu0 0.0
        %1071 = vmatprep.subr.mxu0 0.0
        %1072 = vmatpush1.msra.mxu0 0.0
        %1073 = vmatprep.subr.mxu0 0.0
        %1074 = vmatpush1.msra.mxu0 0.0
        %1075 = vmatprep.subr.mxu0 0.0
        %1076 = vmatpush1.msra.mxu0 0.0
        %1077 = vmatprep.subr.mxu0 0.0
        %1078 = vmatpush1.msra.mxu0 0.0
        %1079 = vmatprep.subr.mxu0 0.0
        %1080 = vmatpush1.msra.mxu0 0.0
        %1081 = vmatprep.subr.mxu0 0.0
        %1082 = vmatpush1.msra.mxu0 0.0
        %1083 = vmatprep.subr.mxu0 0.0
        %1084 = vmatpush1.msra.mxu0 0.0
        %1085 = vmatprep.subr.mxu0 0.0
        %1086 = vmatpush1.msra.mxu0 0.0
        %1087 = vmatprep.subr.mxu0 0.0
        %1088 = vmatpush1.msra.mxu0 0.0
        %1089 = vmatprep.subr.mxu0 0.0
        %1090 = vmatpush1.msra.mxu0 0.0
        %1091 = vmatprep.subr.mxu0 0.0
        %1092 = vmatpush1.msra.mxu0 0.0
        %1093 = vmatprep.subr.mxu0 0.0
        %1094 = vmatpush1.msra.mxu0 0.0
        %1095 = vmatprep.subr.mxu0 0.0
        %1096 = vmatpush1.msra.mxu0 0.0
        %1097 = vmatprep.subr.mxu0 0.0
        %1098 = vmatpush1.msra.mxu0 0.0
        %1099 = vmatprep.subr.mxu0 0.0
        %1100 = vmatpush1.msra.mxu0 0.0
        %1101 = vmatprep.subr.mxu0 0.0
        %1102 = vmatpush1.msra.mxu0 0.0
        %1103 = vmatprep.subr.mxu0 0.0
        %1104 = vmatpush1.msra.mxu0 0.0
        %1105 = vmatprep.subr.mxu0 0.0
        %1106 = vmatpush1.msra.mxu0 0.0
        %1107 = vmatprep.mubr.f32.mxu0 0.0
        %1108 = vmatmul.mubr.f32.gmra.mrb[0].mxu0 %v1041
        %v1109 = vpop.f32.mrb[0].mxu0
        %v1110 = vadd.f32 %v1038, %v1109
        %v1111 = vpop.f32.mrb[0].mxu0
        %1112 = vdwg.mxu0
        %vm1113 = vcmask 130048
        %1114 = vst.msk [vmem:[%s845] sm:$0xff] %vm1113, %v1110
        %v1115 = vmul.f32 %v1110, 0.5
        %v1116 = vmul.f32 %v1115, 1.442695
        %v1117 = vpow.pop %v1116
        %v1118 = vld [vmem:[%s719] sm:$0xff]
        %v1119 = vld [vmem:[#allocation19] sm:$0xf]
        %v1120 = vld [vmem:[#allocation20] sm:$0x1]
        %v1122 = vlaneseq
        %v1123 = vshrl.u32 %v1122, 7
        %v1124 = vsub.s32 0, %v1123
        %v1125 = vrot.slane %v1120, %v1124
        %vm1127 = vcmask 31744
        %v1129 = vsel %vm1127, %v1118, 0
        %v1132 = vsel %vm868, %v1119, 0
        %1134 = vmatprep.subr.mxu0 0.0
        %1135 = vmatpush1.msra.mxu0 %v1132
        %1136 = vmatprep.subr.mxu0 0.0
        %1137 = vmatpush1.msra.mxu0 0.0
        %1138 = vmatprep.subr.mxu0 0.0
        %1139 = vmatpush1.msra.mxu0 0.0
        %1140 = vmatprep.subr.mxu0 0.0
        %1141 = vmatpush1.msra.mxu0 0.0
        %1142 = vmatprep.subr.mxu0 0.0
        %1143 = vmatpush1.msra.mxu0 0.0
        %1144 = vmatprep.subr.mxu0 0.0
        %1145 = vmatpush1.msra.mxu0 0.0
        %1146 = vmatprep.subr.mxu0 0.0
        %1147 = vmatpush1.msra.mxu0 0.0
        %1148 = vmatprep.subr.mxu0 0.0
        %1149 = vmatpush1.msra.mxu0 0.0
        %1150 = vmatprep.subr.mxu0 0.0
        %1151 = vmatpush1.msra.mxu0 0.0
        %1152 = vmatprep.subr.mxu0 0.0
        %1153 = vmatpush1.msra.mxu0 0.0
        %1154 = vmatprep.subr.mxu0 0.0
        %1155 = vmatpush1.msra.mxu0 0.0
        %1156 = vmatprep.subr.mxu0 0.0
        %1157 = vmatpush1.msra.mxu0 0.0
        %1158 = vmatprep.subr.mxu0 0.0
        %1159 = vmatpush1.msra.mxu0 0.0
        %1160 = vmatprep.subr.mxu0 0.0
        %1161 = vmatpush1.msra.mxu0 0.0
        %1162 = vmatprep.subr.mxu0 0.0
        %1163 = vmatpush1.msra.mxu0 0.0
        %1164 = vmatprep.subr.mxu0 0.0
        %1165 = vmatpush1.msra.mxu0 0.0
        %1166 = vmatprep.subr.mxu0 0.0
        %1167 = vmatpush1.msra.mxu0 0.0
        %1168 = vmatprep.subr.mxu0 0.0
        %1169 = vmatpush1.msra.mxu0 0.0
        %1170 = vmatprep.subr.mxu0 0.0
        %1171 = vmatpush1.msra.mxu0 0.0
        %1172 = vmatprep.subr.mxu0 0.0
        %1173 = vmatpush1.msra.mxu0 0.0
        %1174 = vmatprep.subr.mxu0 0.0
        %1175 = vmatpush1.msra.mxu0 0.0
        %1176 = vmatprep.subr.mxu0 0.0
        %1177 = vmatpush1.msra.mxu0 0.0
        %1178 = vmatprep.subr.mxu0 0.0
        %1179 = vmatpush1.msra.mxu0 0.0
        %1180 = vmatprep.subr.mxu0 0.0
        %1181 = vmatpush1.msra.mxu0 0.0
        %1182 = vmatprep.subr.mxu0 0.0
        %1183 = vmatpush1.msra.mxu0 0.0
        %1184 = vmatprep.subr.mxu0 0.0
        %1185 = vmatpush1.msra.mxu0 0.0
        %1186 = vmatprep.subr.mxu0 0.0
        %1187 = vmatpush1.msra.mxu0 0.0
        %1188 = vmatprep.subr.mxu0 0.0
        %1189 = vmatpush1.msra.mxu0 0.0
        %1190 = vmatprep.subr.mxu0 0.0
        %1191 = vmatpush1.msra.mxu0 0.0
        %1192 = vmatprep.subr.mxu0 0.0
        %1193 = vmatpush1.msra.mxu0 0.0
        %1194 = vmatprep.subr.mxu0 0.0
        %1195 = vmatpush1.msra.mxu0 0.0
        %1196 = vmatprep.subr.mxu0 0.0
        %1197 = vmatpush1.msra.mxu0 0.0
        %1198 = vmatprep.mubr.f32.mxu0 0.0
        %1199 = vmatmul.mubr.f32.gmra.mrb[0].mxu0 %v1129
        %v1200 = vpop.f32.mrb[0].mxu0
        %v1201 = vadd.f32 %v1125, %v1200
        %v1202 = vpop.f32.mrb[0].mxu0
        %1203 = vdwg.mxu0
        %v1204 = vld [vmem:[%s728] sm:$0xff]
        %v1205 = vld [vmem:[#allocation17] sm:$0xff]
        %v1206 = vld [vmem:[#allocation22] sm:$0xff]
        %v1207 = vld [vmem:[#allocation22 + $0x8] sm:$0xff]
        %v1208 = vld [vmem:[#allocation22 + $0x10] sm:$0xff]
        %v1209 = vld [vmem:[#allocation22 + $0x18] sm:$0xff]
        %v1210 = vld [vmem:[#allocation23] sm:$0x1]
        %v1211 = vld [vmem:[#allocation25] sm:$0xff]
        %v1212 = vld [vmem:[#allocation25 + $0x8] sm:$0xff]
        %v1213 = vld [vmem:[#allocation25 + $0x10] sm:$0xff]
        %v1214 = vld [vmem:[#allocation25 + $0x18] sm:$0xff]
        %v1215 = vld [vmem:[#allocation26] sm:$0x1]
        %1217 = vrot.lane.b32.xlu0 %v1204, 8
        %v1218 = vpop.permute.xlu0 %1217
        %v1220 = vmul.f32 %v1117, %v1218
        %1222 = vrot.lane.b32.xlu0 %v1220, 120
        %v1223 = vpop.permute.xlu0 %1222
        %v1225 = vadd.f32 %v1110, %v1223
        %vm1226 = vcmask 64512
        %1227 = vst.msk [vmem:[%s852] sm:$0xff] %vm1226, %v1225
        %v1229 = vsel %vm1226, %v1225, 0
        %1231 = vmatprep.subr.mxu0 0.0
        %1232 = vmatpush1.msra.mxu0 %v1205
        %1233 = vmatprep.subr.mxu0 0.0
        %1234 = vmatpush1.msra.mxu0 0.0
        %1235 = vmatprep.subr.mxu0 0.0
        %1236 = vmatpush1.msra.mxu0 0.0
        %1237 = vmatprep.subr.mxu0 0.0
        %1238 = vmatpush1.msra.mxu0 0.0
        %1239 = vmatprep.subr.mxu0 0.0
        %1240 = vmatpush1.msra.mxu0 0.0
        %1241 = vmatprep.subr.mxu0 0.0
        %1242 = vmatpush1.msra.mxu0 0.0
        %1243 = vmatprep.subr.mxu0 0.0
        %1244 = vmatpush1.msra.mxu0 0.0
        %1245 = vmatprep.subr.mxu0 0.0
        %1246 = vmatpush1.msra.mxu0 0.0
        %1247 = vmatprep.subr.mxu0 0.0
        %1248 = vmatpush1.msra.mxu0 0.0
        %1249 = vmatprep.subr.mxu0 0.0
        %1250 = vmatpush1.msra.mxu0 0.0
        %1251 = vmatprep.subr.mxu0 0.0
        %1252 = vmatpush1.msra.mxu0 0.0
        %1253 = vmatprep.subr.mxu0 0.0
        %1254 = vmatpush1.msra.mxu0 0.0
        %1255 = vmatprep.subr.mxu0 0.0
        %1256 = vmatpush1.msra.mxu0 0.0
        %1257 = vmatprep.subr.mxu0 0.0
        %1258 = vmatpush1.msra.mxu0 0.0
        %1259 = vmatprep.subr.mxu0 0.0
        %1260 = vmatpush1.msra.mxu0 0.0
        %1261 = vmatprep.subr.mxu0 0.0
        %1262 = vmatpush1.msra.mxu0 0.0
        %1263 = vmatprep.subr.mxu0 0.0
        %1264 = vmatpush1.msra.mxu0 0.0
        %1265 = vmatprep.subr.mxu0 0.0
        %1266 = vmatpush1.msra.mxu0 0.0
        %1267 = vmatprep.subr.mxu0 0.0
        %1268 = vmatpush1.msra.mxu0 0.0
        %1269 = vmatprep.subr.mxu0 0.0
        %1270 = vmatpush1.msra.mxu0 0.0
        %1271 = vmatprep.subr.mxu0 0.0
        %1272 = vmatpush1.msra.mxu0 0.0
        %1273 = vmatprep.subr.mxu0 0.0
        %1274 = vmatpush1.msra.mxu0 0.0
        %1275 = vmatprep.subr.mxu0 0.0
        %1276 = vmatpush1.msra.mxu0 0.0
        %1277 = vmatprep.subr.mxu0 0.0
        %1278 = vmatpush1.msra.mxu0 0.0
        %1279 = vmatprep.subr.mxu0 0.0
        %1280 = vmatpush1.msra.mxu0 0.0
        %1281 = vmatprep.subr.mxu0 0.0
        %1282 = vmatpush1.msra.mxu0 0.0
        %1283 = vmatprep.subr.mxu0 0.0
        %1284 = vmatpush1.msra.mxu0 0.0
        %1285 = vmatprep.subr.mxu0 0.0
        %1286 = vmatpush1.msra.mxu0 0.0
        %1287 = vmatprep.subr.mxu0 0.0
        %1288 = vmatpush1.msra.mxu0 0.0
        %1289 = vmatprep.subr.mxu0 0.0
        %1290 = vmatpush1.msra.mxu0 0.0
        %1291 = vmatprep.subr.mxu0 0.0
        %1292 = vmatpush1.msra.mxu0 0.0
        %1293 = vmatprep.subr.mxu0 0.0
        %1294 = vmatpush1.msra.mxu0 0.0
        %1295 = vmatprep.mubr.f32.mxu0 0.0
        %1296 = vmatmul.mubr.f32.gmra.mrb[0].mxu0 %v1229
        %v1297 = vpop.f32.mrb[0].mxu0
        %v1298 = vadd.f32 %v1201, %v1297
        %v1299 = vpop.f32.mrb[0].mxu0
        %1300 = vdwg.mxu0
        %v1301 = vmax.f32 %v1298, 0.0
        %v1303 = vlaneseq
        %v1304 = vshrl.u32 %v1303, 7
        %v1305 = vsub.s32 0, %v1304
        %v1306 = vrot.slane %v1210, %v1305
        %v1309 = vsel %vm954, %v1301, 0
        %1311 = vmatprep.subr.mxu0 0.0
        %1312 = vmatpush1.msra.mxu0 %v1206
        %1313 = vmatprep.subr.mxu0 0.0
        %1314 = vmatpush1.msra.mxu0 %v1207
        %1315 = vmatprep.subr.mxu0 0.0
        %1316 = vmatpush1.msra.mxu0 %v1208
        %1317 = vmatprep.subr.mxu0 0.0
        %1318 = vmatpush1.msra.mxu0 %v1209
        %1319 = vmatprep.subr.mxu0 0.0
        %1320 = vmatpush1.msra.mxu0 0.0
        %1321 = vmatprep.subr.mxu0 0.0
        %1322 = vmatpush1.msra.mxu0 0.0
        %1323 = vmatprep.subr.mxu0 0.0
        %1324 = vmatpush1.msra.mxu0 0.0
        %1325 = vmatprep.subr.mxu0 0.0
        %1326 = vmatpush1.msra.mxu0 0.0
        %1327 = vmatprep.subr.mxu0 0.0
        %1328 = vmatpush1.msra.mxu0 0.0
        %1329 = vmatprep.subr.mxu0 0.0
        %1330 = vmatpush1.msra.mxu0 0.0
        %1331 = vmatprep.subr.mxu0 0.0
        %1332 = vmatpush1.msra.mxu0 0.0
        %1333 = vmatprep.subr.mxu0 0.0
        %1334 = vmatpush1.msra.mxu0 0.0
        %1335 = vmatprep.subr.mxu0 0.0
        %1336 = vmatpush1.msra.mxu0 0.0
        %1337 = vmatprep.subr.mxu0 0.0
        %1338 = vmatpush1.msra.mxu0 0.0
        %1339 = vmatprep.subr.mxu0 0.0
        %1340 = vmatpush1.msra.mxu0 0.0
        %1341 = vmatprep.subr.mxu0 0.0
        %1342 = vmatpush1.msra.mxu0 0.0
        %1343 = vmatprep.subr.mxu0 0.0
        %1344 = vmatpush1.msra.mxu0 0.0
        %1345 = vmatprep.subr.mxu0 0.0
        %1346 = vmatpush1.msra.mxu0 0.0
        %1347 = vmatprep.subr.mxu0 0.0
        %1348 = vmatpush1.msra.mxu0 0.0
        %1349 = vmatprep.subr.mxu0 0.0
        %1350 = vmatpush1.msra.mxu0 0.0
        %1351 = vmatprep.subr.mxu0 0.0
        %1352 = vmatpush1.msra.mxu0 0.0
        %1353 = vmatprep.subr.mxu0 0.0
        %1354 = vmatpush1.msra.mxu0 0.0
        %1355 = vmatprep.subr.mxu0 0.0
        %1356 = vmatpush1.msra.mxu0 0.0
        %1357 = vmatprep.subr.mxu0 0.0
        %1358 = vmatpush1.msra.mxu0 0.0
        %1359 = vmatprep.subr.mxu0 0.0
        %1360 = vmatpush1.msra.mxu0 0.0
        %1361 = vmatprep.subr.mxu0 0.0
        %1362 = vmatpush1.msra.mxu0 0.0
        %1363 = vmatprep.subr.mxu0 0.0
        %1364 = vmatpush1.msra.mxu0 0.0
        %1365 = vmatprep.subr.mxu0 0.0
        %1366 = vmatpush1.msra.mxu0 0.0
        %1367 = vmatprep.subr.mxu0 0.0
        %1368 = vmatpush1.msra.mxu0 0.0
        %1369 = vmatprep.subr.mxu0 0.0
        %1370 = vmatpush1.msra.mxu0 0.0
        %1371 = vmatprep.subr.mxu0 0.0
        %1372 = vmatpush1.msra.mxu0 0.0
        %1373 = vmatprep.subr.mxu0 0.0
        %1374 = vmatpush1.msra.mxu0 0.0
        %1375 = vmatprep.mubr.f32.mxu0 0.0
        %1376 = vmatmul.mubr.f32.gmra.mrb[0].mxu0 %v1309
        %v1377 = vpop.f32.mrb[0].mxu0
        %v1378 = vadd.f32 %v1306, %v1377
        %v1379 = vpop.f32.mrb[0].mxu0
        %1380 = vdwg.mxu0
        %v1381 = vmax.f32 %v1378, 0.0
        %v1383 = vlaneseq
        %v1384 = vshrl.u32 %v1383, 7
        %v1385 = vsub.s32 0, %v1384
        %v1386 = vrot.slane %v1215, %v1385
        %v1389 = vsel %vm954, %v1381, 0
        %1391 = vmatprep.subr.mxu0 0.0
        %1392 = vmatpush1.msra.mxu0 %v1211
        %1393 = vmatprep.subr.mxu0 0.0
        %1394 = vmatpush1.msra.mxu0 %v1212
        %1395 = vmatprep.subr.mxu0 0.0
        %1396 = vmatpush1.msra.mxu0 %v1213
        %1397 = vmatprep.subr.mxu0 0.0
        %1398 = vmatpush1.msra.mxu0 %v1214
        %1399 = vmatprep.subr.mxu0 0.0
        %1400 = vmatpush1.msra.mxu0 0.0
        %1401 = vmatprep.subr.mxu0 0.0
        %1402 = vmatpush1.msra.mxu0 0.0
        %1403 = vmatprep.subr.mxu0 0.0
        %1404 = vmatpush1.msra.mxu0 0.0
        %1405 = vmatprep.subr.mxu0 0.0
        %1406 = vmatpush1.msra.mxu0 0.0
        %1407 = vmatprep.subr.mxu0 0.0
        %1408 = vmatpush1.msra.mxu0 0.0
        %1409 = vmatprep.subr.mxu0 0.0
        %1410 = vmatpush1.msra.mxu0 0.0
        %1411 = vmatprep.subr.mxu0 0.0
        %1412 = vmatpush1.msra.mxu0 0.0
        %1413 = vmatprep.subr.mxu0 0.0
        %1414 = vmatpush1.msra.mxu0 0.0
        %1415 = vmatprep.subr.mxu0 0.0
        %1416 = vmatpush1.msra.mxu0 0.0
        %1417 = vmatprep.subr.mxu0 0.0
        %1418 = vmatpush1.msra.mxu0 0.0
        %1419 = vmatprep.subr.mxu0 0.0
        %1420 = vmatpush1.msra.mxu0 0.0
        %1421 = vmatprep.subr.mxu0 0.0
        %1422 = vmatpush1.msra.mxu0 0.0
        %1423 = vmatprep.subr.mxu0 0.0
        %1424 = vmatpush1.msra.mxu0 0.0
        %1425 = vmatprep.subr.mxu0 0.0
        %1426 = vmatpush1.msra.mxu0 0.0
        %1427 = vmatprep.subr.mxu0 0.0
        %1428 = vmatpush1.msra.mxu0 0.0
        %1429 = vmatprep.subr.mxu0 0.0
        %1430 = vmatpush1.msra.mxu0 0.0
        %1431 = vmatprep.subr.mxu0 0.0
        %1432 = vmatpush1.msra.mxu0 0.0
        %1433 = vmatprep.subr.mxu0 0.0
        %1434 = vmatpush1.msra.mxu0 0.0
        %1435 = vmatprep.subr.mxu0 0.0
        %1436 = vmatpush1.msra.mxu0 0.0
        %1437 = vmatprep.subr.mxu0 0.0
        %1438 = vmatpush1.msra.mxu0 0.0
        %1439 = vmatprep.subr.mxu0 0.0
        %1440 = vmatpush1.msra.mxu0 0.0
        %1441 = vmatprep.subr.mxu0 0.0
        %1442 = vmatpush1.msra.mxu0 0.0
        %1443 = vmatprep.subr.mxu0 0.0
        %1444 = vmatpush1.msra.mxu0 0.0
        %1445 = vmatprep.subr.mxu0 0.0
        %1446 = vmatpush1.msra.mxu0 0.0
        %1447 = vmatprep.subr.mxu0 0.0
        %1448 = vmatpush1.msra.mxu0 0.0
        %1449 = vmatprep.subr.mxu0 0.0
        %1450 = vmatpush1.msra.mxu0 0.0
        %1451 = vmatprep.subr.mxu0 0.0
        %1452 = vmatpush1.msra.mxu0 0.0
        %1453 = vmatprep.subr.mxu0 0.0
        %1454 = vmatpush1.msra.mxu0 0.0
        %1455 = vmatprep.mubr.f32.mxu0 0.0
        %1456 = vmatmul.mubr.f32.gmra.mrb[0].mxu0 %v1389
        %v1457 = vpop.f32.mrb[0].mxu0
        %v1458 = vadd.f32 %v1386, %v1457
        %v1459 = vpop.f32.mrb[0].mxu0
        %1460 = vdwg.mxu0
        %v1461 = vsub.f32 0.0, %v1458
        %v1462 = vmul.f32 %v1461, 1.442695
        %v1463 = vpow.pop %v1462
        %v1464 = vadd.f32 %v1463, 1.0
        %v1465 = vrcp.pop %v1464
        %v1466 = vmul.f32 1.0, %v1465
        %1467 = vst.msk [vmem:[%s838] sm:$0xff] %vm1113, %v1466
        %v1468 = vmul.f32 %v1117, %v1204
        %1470 = vrot.lane.b32.xlu0 %v1468, 120
        %v1471 = vpop.permute.xlu0 %1470
        %v1473 = vadd.f32 %v1110, %v1471
        %1475 = vrot.lane.b32.xlu0 %v1473, 8
        %v1476 = vpop.permute.xlu0 %1475
        %vm1478 = vcmask 130112
        %1479 = vst.msk [vmem:[%s852] sm:$0xff] %vm1478, %v1476
        %v1480 = vsel %vm1226, %v1473, 0
        %1482 = vmatprep.subr.mxu0 0.0
        %1483 = vmatpush1.msra.mxu0 %v1205
        %1484 = vmatprep.subr.mxu0 0.0
        %1485 = vmatpush1.msra.mxu0 0.0
        %1486 = vmatprep.subr.mxu0 0.0
        %1487 = vmatpush1.msra.mxu0 0.0
        %1488 = vmatprep.subr.mxu0 0.0
        %1489 = vmatpush1.msra.mxu0 0.0
        %1490 = vmatprep.subr.mxu0 0.0
        %1491 = vmatpush1.msra.mxu0 0.0
        %1492 = vmatprep.subr.mxu0 0.0
        %1493 = vmatpush1.msra.mxu0 0.0
        %1494 = vmatprep.subr.mxu0 0.0
        %1495 = vmatpush1.msra.mxu0 0.0
        %1496 = vmatprep.subr.mxu0 0.0
        %1497 = vmatpush1.msra.mxu0 0.0
        %1498 = vmatprep.subr.mxu0 0.0
        %1499 = vmatpush1.msra.mxu0 0.0
        %1500 = vmatprep.subr.mxu0 0.0
        %1501 = vmatpush1.msra.mxu0 0.0
        %1502 = vmatprep.subr.mxu0 0.0
        %1503 = vmatpush1.msra.mxu0 0.0
        %1504 = vmatprep.subr.mxu0 0.0
        %1505 = vmatpush1.msra.mxu0 0.0
        %1506 = vmatprep.subr.mxu0 0.0
        %1507 = vmatpush1.msra.mxu0 0.0
        %1508 = vmatprep.subr.mxu0 0.0
        %1509 = vmatpush1.msra.mxu0 0.0
        %1510 = vmatprep.subr.mxu0 0.0
        %1511 = vmatpush1.msra.mxu0 0.0
        %1512 = vmatprep.subr.mxu0 0.0
        %1513 = vmatpush1.msra.mxu0 0.0
        %1514 = vmatprep.subr.mxu0 0.0
        %1515 = vmatpush1.msra.mxu0 0.0
        %1516 = vmatprep.subr.mxu0 0.0
        %1517 = vmatpush1.msra.mxu0 0.0
        %1518 = vmatprep.subr.mxu0 0.0
        %1519 = vmatpush1.msra.mxu0 0.0
        %1520 = vmatprep.subr.mxu0 0.0
        %1521 = vmatpush1.msra.mxu0 0.0
        %1522 = vmatprep.subr.mxu0 0.0
        %1523 = vmatpush1.msra.mxu0 0.0
        %1524 = vmatprep.subr.mxu0 0.0
        %1525 = vmatpush1.msra.mxu0 0.0
        %1526 = vmatprep.subr.mxu0 0.0
        %1527 = vmatpush1.msra.mxu0 0.0
        %1528 = vmatprep.subr.mxu0 0.0
        %1529 = vmatpush1.msra.mxu0 0.0
        %1530 = vmatprep.subr.mxu0 0.0
        %1531 = vmatpush1.msra.mxu0 0.0
        %1532 = vmatprep.subr.mxu0 0.0
        %1533 = vmatpush1.msra.mxu0 0.0
        %1534 = vmatprep.subr.mxu0 0.0
        %1535 = vmatpush1.msra.mxu0 0.0
        %1536 = vmatprep.subr.mxu0 0.0
        %1537 = vmatpush1.msra.mxu0 0.0
        %1538 = vmatprep.subr.mxu0 0.0
        %1539 = vmatpush1.msra.mxu0 0.0
        %1540 = vmatprep.subr.mxu0 0.0
        %1541 = vmatpush1.msra.mxu0 0.0
        %1542 = vmatprep.subr.mxu0 0.0
        %1543 = vmatpush1.msra.mxu0 0.0
        %1544 = vmatprep.subr.mxu0 0.0
        %1545 = vmatpush1.msra.mxu0 0.0
        %1546 = vmatprep.mubr.f32.mxu0 0.0
        %1547 = vmatmul.mubr.f32.gmra.mrb[0].mxu0 %v1480
        %v1548 = vpop.f32.mrb[0].mxu0
        %v1549 = vadd.f32 %v1201, %v1548
        %v1550 = vpop.f32.mrb[0].mxu0
        %1551 = vdwg.mxu0
        %v1552 = vmax.f32 %v1549, 0.0
        %v1554 = vsel %vm954, %v1552, 0
        %1556 = vmatprep.subr.mxu0 0.0
        %1557 = vmatpush1.msra.mxu0 %v1206
        %1558 = vmatprep.subr.mxu0 0.0
        %1559 = vmatpush1.msra.mxu0 %v1207
        %1560 = vmatprep.subr.mxu0 0.0
        %1561 = vmatpush1.msra.mxu0 %v1208
        %1562 = vmatprep.subr.mxu0 0.0
        %1563 = vmatpush1.msra.mxu0 %v1209
        %1564 = vmatprep.subr.mxu0 0.0
        %1565 = vmatpush1.msra.mxu0 0.0
        %1566 = vmatprep.subr.mxu0 0.0
        %1567 = vmatpush1.msra.mxu0 0.0
        %1568 = vmatprep.subr.mxu0 0.0
        %1569 = vmatpush1.msra.mxu0 0.0
        %1570 = vmatprep.subr.mxu0 0.0
        %1571 = vmatpush1.msra.mxu0 0.0
        %1572 = vmatprep.subr.mxu0 0.0
        %1573 = vmatpush1.msra.mxu0 0.0
        %1574 = vmatprep.subr.mxu0 0.0
        %1575 = vmatpush1.msra.mxu0 0.0
        %1576 = vmatprep.subr.mxu0 0.0
        %1577 = vmatpush1.msra.mxu0 0.0
        %1578 = vmatprep.subr.mxu0 0.0
        %1579 = vmatpush1.msra.mxu0 0.0
        %1580 = vmatprep.subr.mxu0 0.0
        %1581 = vmatpush1.msra.mxu0 0.0
        %1582 = vmatprep.subr.mxu0 0.0
        %1583 = vmatpush1.msra.mxu0 0.0
        %1584 = vmatprep.subr.mxu0 0.0
        %1585 = vmatpush1.msra.mxu0 0.0
        %1586 = vmatprep.subr.mxu0 0.0
        %1587 = vmatpush1.msra.mxu0 0.0
        %1588 = vmatprep.subr.mxu0 0.0
        %1589 = vmatpush1.msra.mxu0 0.0
        %1590 = vmatprep.subr.mxu0 0.0
        %1591 = vmatpush1.msra.mxu0 0.0
        %1592 = vmatprep.subr.mxu0 0.0
        %1593 = vmatpush1.msra.mxu0 0.0
        %1594 = vmatprep.subr.mxu0 0.0
        %1595 = vmatpush1.msra.mxu0 0.0
        %1596 = vmatprep.subr.mxu0 0.0
        %1597 = vmatpush1.msra.mxu0 0.0
        %1598 = vmatprep.subr.mxu0 0.0
        %1599 = vmatpush1.msra.mxu0 0.0
        %1600 = vmatprep.subr.mxu0 0.0
        %1601 = vmatpush1.msra.mxu0 0.0
        %1602 = vmatprep.subr.mxu0 0.0
        %1603 = vmatpush1.msra.mxu0 0.0
        %1604 = vmatprep.subr.mxu0 0.0
        %1605 = vmatpush1.msra.mxu0 0.0
        %1606 = vmatprep.subr.mxu0 0.0
        %1607 = vmatpush1.msra.mxu0 0.0
        %1608 = vmatprep.subr.mxu0 0.0
        %1609 = vmatpush1.msra.mxu0 0.0
        %1610 = vmatprep.subr.mxu0 0.0
        %1611 = vmatpush1.msra.mxu0 0.0
        %1612 = vmatprep.subr.mxu0 0.0
        %1613 = vmatpush1.msra.mxu0 0.0
        %1614 = vmatprep.subr.mxu0 0.0
        %1615 = vmatpush1.msra.mxu0 0.0
        %1616 = vmatprep.subr.mxu0 0.0
        %1617 = vmatpush1.msra.mxu0 0.0
        %1618 = vmatprep.subr.mxu0 0.0
        %1619 = vmatpush1.msra.mxu0 0.0
        %1620 = vmatprep.mubr.f32.mxu0 0.0
        %1621 = vmatmul.mubr.f32.gmra.mrb[0].mxu0 %v1554
        %v1622 = vpop.f32.mrb[0].mxu0
        %v1623 = vadd.f32 %v1306, %v1622
        %v1624 = vpop.f32.mrb[0].mxu0
        %1625 = vdwg.mxu0
        %v1626 = vmax.f32 %v1623, 0.0
        %v1628 = vsel %vm954, %v1626, 0
        %1630 = vmatprep.subr.mxu0 0.0
        %1631 = vmatpush1.msra.mxu0 %v1211
        %1632 = vmatprep.subr.mxu0 0.0
        %1633 = vmatpush1.msra.mxu0 %v1212
        %1634 = vmatprep.subr.mxu0 0.0
        %1635 = vmatpush1.msra.mxu0 %v1213
        %1636 = vmatprep.subr.mxu0 0.0
        %1637 = vmatpush1.msra.mxu0 %v1214
        %1638 = vmatprep.subr.mxu0 0.0
        %1639 = vmatpush1.msra.mxu0 0.0
        %1640 = vmatprep.subr.mxu0 0.0
        %1641 = vmatpush1.msra.mxu0 0.0
        %1642 = vmatprep.subr.mxu0 0.0
        %1643 = vmatpush1.msra.mxu0 0.0
        %1644 = vmatprep.subr.mxu0 0.0
        %1645 = vmatpush1.msra.mxu0 0.0
        %1646 = vmatprep.subr.mxu0 0.0
        %1647 = vmatpush1.msra.mxu0 0.0
        %1648 = vmatprep.subr.mxu0 0.0
        %1649 = vmatpush1.msra.mxu0 0.0
        %1650 = vmatprep.subr.mxu0 0.0
        %1651 = vmatpush1.msra.mxu0 0.0
        %1652 = vmatprep.subr.mxu0 0.0
        %1653 = vmatpush1.msra.mxu0 0.0
        %1654 = vmatprep.subr.mxu0 0.0
        %1655 = vmatpush1.msra.mxu0 0.0
        %1656 = vmatprep.subr.mxu0 0.0
        %1657 = vmatpush1.msra.mxu0 0.0
        %1658 = vmatprep.subr.mxu0 0.0
        %1659 = vmatpush1.msra.mxu0 0.0
        %1660 = vmatprep.subr.mxu0 0.0
        %1661 = vmatpush1.msra.mxu0 0.0
        %1662 = vmatprep.subr.mxu0 0.0
        %1663 = vmatpush1.msra.mxu0 0.0
        %1664 = vmatprep.subr.mxu0 0.0
        %1665 = vmatpush1.msra.mxu0 0.0
        %1666 = vmatprep.subr.mxu0 0.0
        %1667 = vmatpush1.msra.mxu0 0.0
        %1668 = vmatprep.subr.mxu0 0.0
        %1669 = vmatpush1.msra.mxu0 0.0
        %1670 = vmatprep.subr.mxu0 0.0
        %1671 = vmatpush1.msra.mxu0 0.0
        %1672 = vmatprep.subr.mxu0 0.0
        %1673 = vmatpush1.msra.mxu0 0.0
        %1674 = vmatprep.subr.mxu0 0.0
        %1675 = vmatpush1.msra.mxu0 0.0
        %1676 = vmatprep.subr.mxu0 0.0
        %1677 = vmatpush1.msra.mxu0 0.0
        %1678 = vmatprep.subr.mxu0 0.0
        %1679 = vmatpush1.msra.mxu0 0.0
        %1680 = vmatprep.subr.mxu0 0.0
        %1681 = vmatpush1.msra.mxu0 0.0
        %1682 = vmatprep.subr.mxu0 0.0
        %1683 = vmatpush1.msra.mxu0 0.0
        %1684 = vmatprep.subr.mxu0 0.0
        %1685 = vmatpush1.msra.mxu0 0.0
        %1686 = vmatprep.subr.mxu0 0.0
        %1687 = vmatpush1.msra.mxu0 0.0
        %1688 = vmatprep.subr.mxu0 0.0
        %1689 = vmatpush1.msra.mxu0 0.0
        %1690 = vmatprep.subr.mxu0 0.0
        %1691 = vmatpush1.msra.mxu0 0.0
        %1692 = vmatprep.subr.mxu0 0.0
        %1693 = vmatpush1.msra.mxu0 0.0
        %1694 = vmatprep.mubr.f32.mxu0 0.0
        %1695 = vmatmul.mubr.f32.gmra.mrb[0].mxu0 %v1628
        %v1696 = vpop.f32.mrb[0].mxu0
        %v1697 = vadd.f32 %v1386, %v1696
        %v1698 = vpop.f32.mrb[0].mxu0
        %1699 = vdwg.mxu0
        %v1700 = vsub.f32 0.0, %v1697
        %v1701 = vmul.f32 %v1700, 1.442695
        %v1702 = vpow.pop %v1701
        %v1703 = vadd.f32 %v1702, 1.0
        %v1704 = vrcp.pop %v1703
        %v1705 = vmul.f32 1.0, %v1704
        %1707 = vrot.lane.b32.xlu0 %v1705, 16
        %v1708 = vpop.permute.xlu0 %1707
        %vm1710 = vcmask 261248
        %1711 = vst.msk [vmem:[%s838] sm:$0xff] %vm1710, %v1708
        %1712 = vrot.lane.b32.xlu0 %v1204, 120
        %v1713 = vpop.permute.xlu0 %1712
        %v1715 = vmul.f32 %v1117, %v1713
        %1717 = vrot.lane.b32.xlu0 %v1715, 120
        %v1718 = vpop.permute.xlu0 %1717
        %v1720 = vadd.f32 %v1110, %v1718
        %1722 = vrot.lane.b32.xlu0 %v1720, 16
        %v1723 = vpop.permute.xlu0 %1722
        %vm1725 = vcmask 195712
        %1726 = vst.msk [vmem:[%s852] sm:$0xff] %vm1725, %v1723
        %v1727 = vsel %vm1226, %v1720, 0
        %1729 = vmatprep.subr.mxu0 0.0
        %1730 = vmatpush1.msra.mxu0 %v1205
        %1731 = vmatprep.subr.mxu0 0.0
        %1732 = vmatpush1.msra.mxu0 0.0
        %1733 = vmatprep.subr.mxu0 0.0
        %1734 = vmatpush1.msra.mxu0 0.0
        %1735 = vmatprep.subr.mxu0 0.0
        %1736 = vmatpush1.msra.mxu0 0.0
        %1737 = vmatprep.subr.mxu0 0.0
        %1738 = vmatpush1.msra.mxu0 0.0
        %1739 = vmatprep.subr.mxu0 0.0
        %1740 = vmatpush1.msra.mxu0 0.0
        %1741 = vmatprep.subr.mxu0 0.0
        %1742 = vmatpush1.msra.mxu0 0.0
        %1743 = vmatprep.subr.mxu0 0.0
        %1744 = vmatpush1.msra.mxu0 0.0
        %1745 = vmatprep.subr.mxu0 0.0
        %1746 = vmatpush1.msra.mxu0 0.0
        %1747 = vmatprep.subr.mxu0 0.0
        %1748 = vmatpush1.msra.mxu0 0.0
        %1749 = vmatprep.subr.mxu0 0.0
        %1750 = vmatpush1.msra.mxu0 0.0
        %1751 = vmatprep.subr.mxu0 0.0
        %1752 = vmatpush1.msra.mxu0 0.0
        %1753 = vmatprep.subr.mxu0 0.0
        %1754 = vmatpush1.msra.mxu0 0.0
        %1755 = vmatprep.subr.mxu0 0.0
        %1756 = vmatpush1.msra.mxu0 0.0
        %1757 = vmatprep.subr.mxu0 0.0
        %1758 = vmatpush1.msra.mxu0 0.0
        %1759 = vmatprep.subr.mxu0 0.0
        %1760 = vmatpush1.msra.mxu0 0.0
        %1761 = vmatprep.subr.mxu0 0.0
        %1762 = vmatpush1.msra.mxu0 0.0
        %1763 = vmatprep.subr.mxu0 0.0
        %1764 = vmatpush1.msra.mxu0 0.0
        %1765 = vmatprep.subr.mxu0 0.0
        %1766 = vmatpush1.msra.mxu0 0.0
        %1767 = vmatprep.subr.mxu0 0.0
        %1768 = vmatpush1.msra.mxu0 0.0
        %1769 = vmatprep.subr.mxu0 0.0
        %1770 = vmatpush1.msra.mxu0 0.0
        %1771 = vmatprep.subr.mxu0 0.0
        %1772 = vmatpush1.msra.mxu0 0.0
        %1773 = vmatprep.subr.mxu0 0.0
        %1774 = vmatpush1.msra.mxu0 0.0
        %1775 = vmatprep.subr.mxu0 0.0
        %1776 = vmatpush1.msra.mxu0 0.0
        %1777 = vmatprep.subr.mxu0 0.0
        %1778 = vmatpush1.msra.mxu0 0.0
        %1779 = vmatprep.subr.mxu0 0.0
        %1780 = vmatpush1.msra.mxu0 0.0
        %1781 = vmatprep.subr.mxu0 0.0
        %1782 = vmatpush1.msra.mxu0 0.0
        %1783 = vmatprep.subr.mxu0 0.0
        %1784 = vmatpush1.msra.mxu0 0.0
        %1785 = vmatprep.subr.mxu0 0.0
        %1786 = vmatpush1.msra.mxu0 0.0
        %1787 = vmatprep.subr.mxu0 0.0
        %1788 = vmatpush1.msra.mxu0 0.0
        %1789 = vmatprep.subr.mxu0 0.0
        %1790 = vmatpush1.msra.mxu0 0.0
        %1791 = vmatprep.subr.mxu0 0.0
        %1792 = vmatpush1.msra.mxu0 0.0
        %1793 = vmatprep.mubr.f32.mxu0 0.0
        %1794 = vmatmul.mubr.f32.gmra.mrb[0].mxu0 %v1727
        %v1795 = vpop.f32.mrb[0].mxu0
        %v1796 = vadd.f32 %v1201, %v1795
        %v1797 = vpop.f32.mrb[0].mxu0
        %1798 = vdwg.mxu0
        %v1799 = vmax.f32 %v1796, 0.0
        %v1801 = vsel %vm954, %v1799, 0
        %1803 = vmatprep.subr.mxu0 0.0
        %1804 = vmatpush1.msra.mxu0 %v1206
        %1805 = vmatprep.subr.mxu0 0.0
        %1806 = vmatpush1.msra.mxu0 %v1207
        %1807 = vmatprep.subr.mxu0 0.0
        %1808 = vmatpush1.msra.mxu0 %v1208
        %1809 = vmatprep.subr.mxu0 0.0
        %1810 = vmatpush1.msra.mxu0 %v1209
        %1811 = vmatprep.subr.mxu0 0.0
        %1812 = vmatpush1.msra.mxu0 0.0
        %1813 = vmatprep.subr.mxu0 0.0
        %1814 = vmatpush1.msra.mxu0 0.0
        %1815 = vmatprep.subr.mxu0 0.0
        %1816 = vmatpush1.msra.mxu0 0.0
        %1817 = vmatprep.subr.mxu0 0.0
        %1818 = vmatpush1.msra.mxu0 0.0
        %1819 = vmatprep.subr.mxu0 0.0
        %1820 = vmatpush1.msra.mxu0 0.0
        %1821 = vmatprep.subr.mxu0 0.0
        %1822 = vmatpush1.msra.mxu0 0.0
        %1823 = vmatprep.subr.mxu0 0.0
        %1824 = vmatpush1.msra.mxu0 0.0
        %1825 = vmatprep.subr.mxu0 0.0
        %1826 = vmatpush1.msra.mxu0 0.0
        %1827 = vmatprep.subr.mxu0 0.0
        %1828 = vmatpush1.msra.mxu0 0.0
        %1829 = vmatprep.subr.mxu0 0.0
        %1830 = vmatpush1.msra.mxu0 0.0
        %1831 = vmatprep.subr.mxu0 0.0
        %1832 = vmatpush1.msra.mxu0 0.0
        %1833 = vmatprep.subr.mxu0 0.0
        %1834 = vmatpush1.msra.mxu0 0.0
        %1835 = vmatprep.subr.mxu0 0.0
        %1836 = vmatpush1.msra.mxu0 0.0
        %1837 = vmatprep.subr.mxu0 0.0
        %1838 = vmatpush1.msra.mxu0 0.0
        %1839 = vmatprep.subr.mxu0 0.0
        %1840 = vmatpush1.msra.mxu0 0.0
        %1841 = vmatprep.subr.mxu0 0.0
        %1842 = vmatpush1.msra.mxu0 0.0
        %1843 = vmatprep.subr.mxu0 0.0
        %1844 = vmatpush1.msra.mxu0 0.0
        %1845 = vmatprep.subr.mxu0 0.0
        %1846 = vmatpush1.msra.mxu0 0.0
        %1847 = vmatprep.subr.mxu0 0.0
        %1848 = vmatpush1.msra.mxu0 0.0
        %1849 = vmatprep.subr.mxu0 0.0
        %1850 = vmatpush1.msra.mxu0 0.0
        %1851 = vmatprep.subr.mxu0 0.0
        %1852 = vmatpush1.msra.mxu0 0.0
        %1853 = vmatprep.subr.mxu0 0.0
        %1854 = vmatpush1.msra.mxu0 0.0
        %1855 = vmatprep.subr.mxu0 0.0
        %1856 = vmatpush1.msra.mxu0 0.0
        %1857 = vmatprep.subr.mxu0 0.0
        %1858 = vmatpush1.msra.mxu0 0.0
        %1859 = vmatprep.subr.mxu0 0.0
        %1860 = vmatpush1.msra.mxu0 0.0
        %1861 = vmatprep.subr.mxu0 0.0
        %1862 = vmatpush1.msra.mxu0 0.0
        %1863 = vmatprep.subr.mxu0 0.0
        %1864 = vmatpush1.msra.mxu0 0.0
        %1865 = vmatprep.subr.mxu0 0.0
        %1866 = vmatpush1.msra.mxu0 0.0
        %1867 = vmatprep.mubr.f32.mxu0 0.0
        %1868 = vmatmul.mubr.f32.gmra.mrb[0].mxu0 %v1801
        %v1869 = vpop.f32.mrb[0].mxu0
        %v1870 = vadd.f32 %v1306, %v1869
        %v1871 = vpop.f32.mrb[0].mxu0
        %1872 = vdwg.mxu0
        %v1873 = vmax.f32 %v1870, 0.0
        %v1875 = vsel %vm954, %v1873, 0
        %1877 = vmatprep.subr.mxu0 0.0
        %1878 = vmatpush1.msra.mxu0 %v1211
        %1879 = vmatprep.subr.mxu0 0.0
        %1880 = vmatpush1.msra.mxu0 %v1212
        %1881 = vmatprep.subr.mxu0 0.0
        %1882 = vmatpush1.msra.mxu0 %v1213
        %1883 = vmatprep.subr.mxu0 0.0
        %1884 = vmatpush1.msra.mxu0 %v1214
        %1885 = vmatprep.subr.mxu0 0.0
        %1886 = vmatpush1.msra.mxu0 0.0
        %1887 = vmatprep.subr.mxu0 0.0
        %1888 = vmatpush1.msra.mxu0 0.0
        %1889 = vmatprep.subr.mxu0 0.0
        %1890 = vmatpush1.msra.mxu0 0.0
        %1891 = vmatprep.subr.mxu0 0.0
        %1892 = vmatpush1.msra.mxu0 0.0
        %1893 = vmatprep.subr.mxu0 0.0
        %1894 = vmatpush1.msra.mxu0 0.0
        %1895 = vmatprep.subr.mxu0 0.0
        %1896 = vmatpush1.msra.mxu0 0.0
        %1897 = vmatprep.subr.mxu0 0.0
        %1898 = vmatpush1.msra.mxu0 0.0
        %1899 = vmatprep.subr.mxu0 0.0
        %1900 = vmatpush1.msra.mxu0 0.0
        %1901 = vmatprep.subr.mxu0 0.0
        %1902 = vmatpush1.msra.mxu0 0.0
        %1903 = vmatprep.subr.mxu0 0.0
        %1904 = vmatpush1.msra.mxu0 0.0
        %1905 = vmatprep.subr.mxu0 0.0
        %1906 = vmatpush1.msra.mxu0 0.0
        %1907 = vmatprep.subr.mxu0 0.0
        %1908 = vmatpush1.msra.mxu0 0.0
        %1909 = vmatprep.subr.mxu0 0.0
        %1910 = vmatpush1.msra.mxu0 0.0
        %1911 = vmatprep.subr.mxu0 0.0
        %1912 = vmatpush1.msra.mxu0 0.0
        %1913 = vmatprep.subr.mxu0 0.0
        %1914 = vmatpush1.msra.mxu0 0.0
        %1915 = vmatprep.subr.mxu0 0.0
        %1916 = vmatpush1.msra.mxu0 0.0
        %1917 = vmatprep.subr.mxu0 0.0
        %1918 = vmatpush1.msra.mxu0 0.0
        %1919 = vmatprep.subr.mxu0 0.0
        %1920 = vmatpush1.msra.mxu0 0.0
        %1921 = vmatprep.subr.mxu0 0.0
        %1922 = vmatpush1.msra.mxu0 0.0
        %1923 = vmatprep.subr.mxu0 0.0
        %1924 = vmatpush1.msra.mxu0 0.0
        %1925 = vmatprep.subr.mxu0 0.0
        %1926 = vmatpush1.msra.mxu0 0.0
        %1927 = vmatprep.subr.mxu0 0.0
        %1928 = vmatpush1.msra.mxu0 0.0
        %1929 = vmatprep.subr.mxu0 0.0
        %1930 = vmatpush1.msra.mxu0 0.0
        %1931 = vmatprep.subr.mxu0 0.0
        %1932 = vmatpush1.msra.mxu0 0.0
        %1933 = vmatprep.subr.mxu0 0.0
        %1934 = vmatpush1.msra.mxu0 0.0
        %1935 = vmatprep.subr.mxu0 0.0
        %1936 = vmatpush1.msra.mxu0 0.0
        %1937 = vmatprep.subr.mxu0 0.0
        %1938 = vmatpush1.msra.mxu0 0.0
        %1939 = vmatprep.subr.mxu0 0.0
        %1940 = vmatpush1.msra.mxu0 0.0
        %1941 = vmatprep.mubr.f32.mxu0 0.0
        %1942 = vmatmul.mubr.f32.gmra.mrb[0].mxu0 %v1875
        %v1943 = vpop.f32.mrb[0].mxu0
        %v1944 = vadd.f32 %v1386, %v1943
        %v1945 = vpop.f32.mrb[0].mxu0
        %1946 = vdwg.mxu0
        %v1947 = vsub.f32 0.0, %v1944
        %v1948 = vmul.f32 %v1947, 1.442695
        %v1949 = vpow.pop %v1948
        %v1950 = vadd.f32 %v1949, 1.0
        %v1951 = vrcp.pop %v1950
        %v1952 = vmul.f32 1.0, %v1951
        %1954 = vrot.lane.b32.xlu0 %v1952, 32
        %v1955 = vpop.permute.xlu0 %1954
        %vm1957 = vcmask 392448
        %1958 = vst.msk [vmem:[%s838] sm:$0xff] %vm1957, %v1955
        %1959 = vrot.lane.b32.xlu0 %v1204, 112
        %v1960 = vpop.permute.xlu0 %1959
        %v1962 = vmul.f32 %v1117, %v1960
        %1964 = vrot.lane.b32.xlu0 %v1962, 120
        %v1965 = vpop.permute.xlu0 %1964
        %v1967 = vadd.f32 %v1110, %v1965
        %1969 = vrot.lane.b32.xlu0 %v1967, 24
        %v1970 = vpop.permute.xlu0 %1969
        %vm1972 = vcmask 261312
        %1973 = vst.msk [vmem:[%s852] sm:$0xff] %vm1972, %v1970
        %v1974 = vsel %vm1226, %v1967, 0
        %1976 = vmatprep.subr.mxu0 0.0
        %1977 = vmatpush1.msra.mxu0 %v1205
        %1978 = vmatprep.subr.mxu0 0.0
        %1979 = vmatpush1.msra.mxu0 0.0
        %1980 = vmatprep.subr.mxu0 0.0
        %1981 = vmatpush1.msra.mxu0 0.0
        %1982 = vmatprep.subr.mxu0 0.0
        %1983 = vmatpush1.msra.mxu0 0.0
        %1984 = vmatprep.subr.mxu0 0.0
        %1985 = vmatpush1.msra.mxu0 0.0
        %1986 = vmatprep.subr.mxu0 0.0
        %1987 = vmatpush1.msra.mxu0 0.0
        %1988 = vmatprep.subr.mxu0 0.0
        %1989 = vmatpush1.msra.mxu0 0.0
        %1990 = vmatprep.subr.mxu0 0.0
        %1991 = vmatpush1.msra.mxu0 0.0
        %1992 = vmatprep.subr.mxu0 0.0
        %1993 = vmatpush1.msra.mxu0 0.0
        %1994 = vmatprep.subr.mxu0 0.0
        %1995 = vmatpush1.msra.mxu0 0.0
        %1996 = vmatprep.subr.mxu0 0.0
        %1997 = vmatpush1.msra.mxu0 0.0
        %1998 = vmatprep.subr.mxu0 0.0
        %1999 = vmatpush1.msra.mxu0 0.0
        %2000 = vmatprep.subr.mxu0 0.0
        %2001 = vmatpush1.msra.mxu0 0.0
        %2002 = vmatprep.subr.mxu0 0.0
        %2003 = vmatpush1.msra.mxu0 0.0
        %2004 = vmatprep.subr.mxu0 0.0
        %2005 = vmatpush1.msra.mxu0 0.0
        %2006 = vmatprep.subr.mxu0 0.0
        %2007 = vmatpush1.msra.mxu0 0.0
        %2008 = vmatprep.subr.mxu0 0.0
        %2009 = vmatpush1.msra.mxu0 0.0
        %2010 = vmatprep.subr.mxu0 0.0
        %2011 = vmatpush1.msra.mxu0 0.0
        %2012 = vmatprep.subr.mxu0 0.0
        %2013 = vmatpush1.msra.mxu0 0.0
        %2014 = vmatprep.subr.mxu0 0.0
        %2015 = vmatpush1.msra.mxu0 0.0
        %2016 = vmatprep.subr.mxu0 0.0
        %2017 = vmatpush1.msra.mxu0 0.0
        %2018 = vmatprep.subr.mxu0 0.0
        %2019 = vmatpush1.msra.mxu0 0.0
        %2020 = vmatprep.subr.mxu0 0.0
        %2021 = vmatpush1.msra.mxu0 0.0
        %2022 = vmatprep.subr.mxu0 0.0
        %2023 = vmatpush1.msra.mxu0 0.0
        %2024 = vmatprep.subr.mxu0 0.0
        %2025 = vmatpush1.msra.mxu0 0.0
        %2026 = vmatprep.subr.mxu0 0.0
        %2027 = vmatpush1.msra.mxu0 0.0
        %2028 = vmatprep.subr.mxu0 0.0
        %2029 = vmatpush1.msra.mxu0 0.0
        %2030 = vmatprep.subr.mxu0 0.0
        %2031 = vmatpush1.msra.mxu0 0.0
        %2032 = vmatprep.subr.mxu0 0.0
        %2033 = vmatpush1.msra.mxu0 0.0
        %2034 = vmatprep.subr.mxu0 0.0
        %2035 = vmatpush1.msra.mxu0 0.0
        %2036 = vmatprep.subr.mxu0 0.0
        %2037 = vmatpush1.msra.mxu0 0.0
        %2038 = vmatprep.subr.mxu0 0.0
        %2039 = vmatpush1.msra.mxu0 0.0
        %2040 = vmatprep.mubr.f32.mxu0 0.0
        %2041 = vmatmul.mubr.f32.gmra.mrb[0].mxu0 %v1974
        %v2042 = vpop.f32.mrb[0].mxu0
        %v2043 = vadd.f32 %v1201, %v2042
        %v2044 = vpop.f32.mrb[0].mxu0
        %2045 = vdwg.mxu0
        %v2046 = vmax.f32 %v2043, 0.0
        %v2048 = vsel %vm954, %v2046, 0
        %2050 = vmatprep.subr.mxu0 0.0
        %2051 = vmatpush1.msra.mxu0 %v1206
        %2052 = vmatprep.subr.mxu0 0.0
        %2053 = vmatpush1.msra.mxu0 %v1207
        %2054 = vmatprep.subr.mxu0 0.0
        %2055 = vmatpush1.msra.mxu0 %v1208
        %2056 = vmatprep.subr.mxu0 0.0
        %2057 = vmatpush1.msra.mxu0 %v1209
        %2058 = vmatprep.subr.mxu0 0.0
        %2059 = vmatpush1.msra.mxu0 0.0
        %2060 = vmatprep.subr.mxu0 0.0
        %2061 = vmatpush1.msra.mxu0 0.0
        %2062 = vmatprep.subr.mxu0 0.0
        %2063 = vmatpush1.msra.mxu0 0.0
        %2064 = vmatprep.subr.mxu0 0.0
        %2065 = vmatpush1.msra.mxu0 0.0
        %2066 = vmatprep.subr.mxu0 0.0
        %2067 = vmatpush1.msra.mxu0 0.0
        %2068 = vmatprep.subr.mxu0 0.0
        %2069 = vmatpush1.msra.mxu0 0.0
        %2070 = vmatprep.subr.mxu0 0.0
        %2071 = vmatpush1.msra.mxu0 0.0
        %2072 = vmatprep.subr.mxu0 0.0
        %2073 = vmatpush1.msra.mxu0 0.0
        %2074 = vmatprep.subr.mxu0 0.0
        %2075 = vmatpush1.msra.mxu0 0.0
        %2076 = vmatprep.subr.mxu0 0.0
        %2077 = vmatpush1.msra.mxu0 0.0
        %2078 = vmatprep.subr.mxu0 0.0
        %2079 = vmatpush1.msra.mxu0 0.0
        %2080 = vmatprep.subr.mxu0 0.0
        %2081 = vmatpush1.msra.mxu0 0.0
        %2082 = vmatprep.subr.mxu0 0.0
        %2083 = vmatpush1.msra.mxu0 0.0
        %2084 = vmatprep.subr.mxu0 0.0
        %2085 = vmatpush1.msra.mxu0 0.0
        %2086 = vmatprep.subr.mxu0 0.0
        %2087 = vmatpush1.msra.mxu0 0.0
        %2088 = vmatprep.subr.mxu0 0.0
        %2089 = vmatpush1.msra.mxu0 0.0
        %2090 = vmatprep.subr.mxu0 0.0
        %2091 = vmatpush1.msra.mxu0 0.0
        %2092 = vmatprep.subr.mxu0 0.0
        %2093 = vmatpush1.msra.mxu0 0.0
        %2094 = vmatprep.subr.mxu0 0.0
        %2095 = vmatpush1.msra.mxu0 0.0
        %2096 = vmatprep.subr.mxu0 0.0
        %2097 = vmatpush1.msra.mxu0 0.0
        %2098 = vmatprep.subr.mxu0 0.0
        %2099 = vmatpush1.msra.mxu0 0.0
        %2100 = vmatprep.subr.mxu0 0.0
        %2101 = vmatpush1.msra.mxu0 0.0
        %2102 = vmatprep.subr.mxu0 0.0
        %2103 = vmatpush1.msra.mxu0 0.0
        %2104 = vmatprep.subr.mxu0 0.0
        %2105 = vmatpush1.msra.mxu0 0.0
        %2106 = vmatprep.subr.mxu0 0.0
        %2107 = vmatpush1.msra.mxu0 0.0
        %2108 = vmatprep.subr.mxu0 0.0
        %2109 = vmatpush1.msra.mxu0 0.0
        %2110 = vmatprep.subr.mxu0 0.0
        %2111 = vmatpush1.msra.mxu0 0.0
        %2112 = vmatprep.subr.mxu0 0.0
        %2113 = vmatpush1.msra.mxu0 0.0
        %2114 = vmatprep.mubr.f32.mxu0 0.0
        %2115 = vmatmul.mubr.f32.gmra.mrb[0].mxu0 %v2048
        %v2116 = vpop.f32.mrb[0].mxu0
        %v2117 = vadd.f32 %v1306, %v2116
        %v2118 = vpop.f32.mrb[0].mxu0
        %2119 = vdwg.mxu0
        %v2120 = vmax.f32 %v2117, 0.0
        %v2122 = vsel %vm954, %v2120, 0
        %2124 = vmatprep.subr.mxu0 0.0
        %2125 = vmatpush1.msra.mxu0 %v1211
        %2126 = vmatprep.subr.mxu0 0.0
        %2127 = vmatpush1.msra.mxu0 %v1212
        %2128 = vmatprep.subr.mxu0 0.0
        %2129 = vmatpush1.msra.mxu0 %v1213
        %2130 = vmatprep.subr.mxu0 0.0
        %2131 = vmatpush1.msra.mxu0 %v1214
        %2132 = vmatprep.subr.mxu0 0.0
        %2133 = vmatpush1.msra.mxu0 0.0
        %2134 = vmatprep.subr.mxu0 0.0
        %2135 = vmatpush1.msra.mxu0 0.0
        %2136 = vmatprep.subr.mxu0 0.0
        %2137 = vmatpush1.msra.mxu0 0.0
        %2138 = vmatprep.subr.mxu0 0.0
        %2139 = vmatpush1.msra.mxu0 0.0
        %2140 = vmatprep.subr.mxu0 0.0
        %2141 = vmatpush1.msra.mxu0 0.0
        %2142 = vmatprep.subr.mxu0 0.0
        %2143 = vmatpush1.msra.mxu0 0.0
        %2144 = vmatprep.subr.mxu0 0.0
        %2145 = vmatpush1.msra.mxu0 0.0
        %2146 = vmatprep.subr.mxu0 0.0
        %2147 = vmatpush1.msra.mxu0 0.0
        %2148 = vmatprep.subr.mxu0 0.0
        %2149 = vmatpush1.msra.mxu0 0.0
        %2150 = vmatprep.subr.mxu0 0.0
        %2151 = vmatpush1.msra.mxu0 0.0
        %2152 = vmatprep.subr.mxu0 0.0
        %2153 = vmatpush1.msra.mxu0 0.0
        %2154 = vmatprep.subr.mxu0 0.0
        %2155 = vmatpush1.msra.mxu0 0.0
        %2156 = vmatprep.subr.mxu0 0.0
        %2157 = vmatpush1.msra.mxu0 0.0
        %2158 = vmatprep.subr.mxu0 0.0
        %2159 = vmatpush1.msra.mxu0 0.0
        %2160 = vmatprep.subr.mxu0 0.0
        %2161 = vmatpush1.msra.mxu0 0.0
        %2162 = vmatprep.subr.mxu0 0.0
        %2163 = vmatpush1.msra.mxu0 0.0
        %2164 = vmatprep.subr.mxu0 0.0
        %2165 = vmatpush1.msra.mxu0 0.0
        %2166 = vmatprep.subr.mxu0 0.0
        %2167 = vmatpush1.msra.mxu0 0.0
        %2168 = vmatprep.subr.mxu0 0.0
        %2169 = vmatpush1.msra.mxu0 0.0
        %2170 = vmatprep.subr.mxu0 0.0
        %2171 = vmatpush1.msra.mxu0 0.0
        %2172 = vmatprep.subr.mxu0 0.0
        %2173 = vmatpush1.msra.mxu0 0.0
        %2174 = vmatprep.subr.mxu0 0.0
        %2175 = vmatpush1.msra.mxu0 0.0
        %2176 = vmatprep.subr.mxu0 0.0
        %2177 = vmatpush1.msra.mxu0 0.0
        %2178 = vmatprep.subr.mxu0 0.0
        %2179 = vmatpush1.msra.mxu0 0.0
        %2180 = vmatprep.subr.mxu0 0.0
        %2181 = vmatpush1.msra.mxu0 0.0
        %2182 = vmatprep.subr.mxu0 0.0
        %2183 = vmatpush1.msra.mxu0 0.0
        %2184 = vmatprep.subr.mxu0 0.0
        %2185 = vmatpush1.msra.mxu0 0.0
        %2186 = vmatprep.subr.mxu0 0.0
        %2187 = vmatpush1.msra.mxu0 0.0
        %2188 = vmatprep.mubr.f32.mxu0 0.0
        %2189 = vmatmul.mubr.f32.gmra.mrb[0].mxu0 %v2122
        %v2190 = vpop.f32.mrb[0].mxu0
        %v2191 = vadd.f32 %v1386, %v2190
        %v2192 = vpop.f32.mrb[0].mxu0
        %2193 = vdwg.mxu0
        %v2194 = vsub.f32 0.0, %v2191
        %v2195 = vmul.f32 %v2194, 1.442695
        %v2196 = vpow.pop %v2195
        %v2197 = vadd.f32 %v2196, 1.0
        %v2198 = vrcp.pop %v2197
        %v2199 = vmul.f32 1.0, %v2198
        %2201 = vrot.lane.b32.xlu0 %v2199, 48
        %v2202 = vpop.permute.xlu0 %2201
        %vm2204 = vcmask 523648
        %2205 = vst.msk [vmem:[%s838] sm:$0xff] %vm2204, %v2202
        %2206 = vrot.lane.b32.xlu0 %v1204, 104
        %v2207 = vpop.permute.xlu0 %2206
        %v2209 = vmul.f32 %v1117, %v2207
        %2211 = vrot.lane.b32.xlu0 %v2209, 120
        %v2212 = vpop.permute.xlu0 %2211
        %v2214 = vadd.f32 %v1110, %v2212
        %2216 = vrot.lane.b32.xlu0 %v2214, 32
        %v2217 = vpop.permute.xlu0 %2216
        %vm2219 = vcmask 326912
        %2220 = vst.msk [vmem:[%s852] sm:$0xff] %vm2219, %v2217
        %v2221 = vsel %vm1226, %v2214, 0
        %2223 = vmatprep.subr.mxu0 0.0
        %2224 = vmatpush1.msra.mxu0 %v1205
        %2225 = vmatprep.subr.mxu0 0.0
        %2226 = vmatpush1.msra.mxu0 0.0
        %2227 = vmatprep.subr.mxu0 0.0
        %2228 = vmatpush1.msra.mxu0 0.0
        %2229 = vmatprep.subr.mxu0 0.0
        %2230 = vmatpush1.msra.mxu0 0.0
        %2231 = vmatprep.subr.mxu0 0.0
        %2232 = vmatpush1.msra.mxu0 0.0
        %2233 = vmatprep.subr.mxu0 0.0
        %2234 = vmatpush1.msra.mxu0 0.0
        %2235 = vmatprep.subr.mxu0 0.0
        %2236 = vmatpush1.msra.mxu0 0.0
        %2237 = vmatprep.subr.mxu0 0.0
        %2238 = vmatpush1.msra.mxu0 0.0
        %2239 = vmatprep.subr.mxu0 0.0
        %2240 = vmatpush1.msra.mxu0 0.0
        %2241 = vmatprep.subr.mxu0 0.0
        %2242 = vmatpush1.msra.mxu0 0.0
        %2243 = vmatprep.subr.mxu0 0.0
        %2244 = vmatpush1.msra.mxu0 0.0
        %2245 = vmatprep.subr.mxu0 0.0
        %2246 = vmatpush1.msra.mxu0 0.0
        %2247 = vmatprep.subr.mxu0 0.0
        %2248 = vmatpush1.msra.mxu0 0.0
        %2249 = vmatprep.subr.mxu0 0.0
        %2250 = vmatpush1.msra.mxu0 0.0
        %2251 = vmatprep.subr.mxu0 0.0
        %2252 = vmatpush1.msra.mxu0 0.0
        %2253 = vmatprep.subr.mxu0 0.0
        %2254 = vmatpush1.msra.mxu0 0.0
        %2255 = vmatprep.subr.mxu0 0.0
        %2256 = vmatpush1.msra.mxu0 0.0
        %2257 = vmatprep.subr.mxu0 0.0
        %2258 = vmatpush1.msra.mxu0 0.0
        %2259 = vmatprep.subr.mxu0 0.0
        %2260 = vmatpush1.msra.mxu0 0.0
        %2261 = vmatprep.subr.mxu0 0.0
        %2262 = vmatpush1.msra.mxu0 0.0
        %2263 = vmatprep.subr.mxu0 0.0
        %2264 = vmatpush1.msra.mxu0 0.0
        %2265 = vmatprep.subr.mxu0 0.0
        %2266 = vmatpush1.msra.mxu0 0.0
        %2267 = vmatprep.subr.mxu0 0.0
        %2268 = vmatpush1.msra.mxu0 0.0
        %2269 = vmatprep.subr.mxu0 0.0
        %2270 = vmatpush1.msra.mxu0 0.0
        %2271 = vmatprep.subr.mxu0 0.0
        %2272 = vmatpush1.msra.mxu0 0.0
        %2273 = vmatprep.subr.mxu0 0.0
        %2274 = vmatpush1.msra.mxu0 0.0
        %2275 = vmatprep.subr.mxu0 0.0
        %2276 = vmatpush1.msra.mxu0 0.0
        %2277 = vmatprep.subr.mxu0 0.0
        %2278 = vmatpush1.msra.mxu0 0.0
        %2279 = vmatprep.subr.mxu0 0.0
        %2280 = vmatpush1.msra.mxu0 0.0
        %2281 = vmatprep.subr.mxu0 0.0
        %2282 = vmatpush1.msra.mxu0 0.0
        %2283 = vmatprep.subr.mxu0 0.0
        %2284 = vmatpush1.msra.mxu0 0.0
        %2285 = vmatprep.subr.mxu0 0.0
        %2286 = vmatpush1.msra.mxu0 0.0
        %2287 = vmatprep.mubr.f32.mxu0 0.0
        %2288 = vmatmul.mubr.f32.gmra.mrb[0].mxu0 %v2221
        %v2289 = vpop.f32.mrb[0].mxu0
        %v2290 = vadd.f32 %v1201, %v2289
        %v2291 = vpop.f32.mrb[0].mxu0
        %2292 = vdwg.mxu0
        %v2293 = vmax.f32 %v2290, 0.0
        %v2295 = vsel %vm954, %v2293, 0
        %2297 = vmatprep.subr.mxu0 0.0
        %2298 = vmatpush1.msra.mxu0 %v1206
        %2299 = vmatprep.subr.mxu0 0.0
        %2300 = vmatpush1.msra.mxu0 %v1207
        %2301 = vmatprep.subr.mxu0 0.0
        %2302 = vmatpush1.msra.mxu0 %v1208
        %2303 = vmatprep.subr.mxu0 0.0
        %2304 = vmatpush1.msra.mxu0 %v1209
        %2305 = vmatprep.subr.mxu0 0.0
        %2306 = vmatpush1.msra.mxu0 0.0
        %2307 = vmatprep.subr.mxu0 0.0
        %2308 = vmatpush1.msra.mxu0 0.0
        %2309 = vmatprep.subr.mxu0 0.0
        %2310 = vmatpush1.msra.mxu0 0.0
        %2311 = vmatprep.subr.mxu0 0.0
        %2312 = vmatpush1.msra.mxu0 0.0
        %2313 = vmatprep.subr.mxu0 0.0
        %2314 = vmatpush1.msra.mxu0 0.0
        %2315 = vmatprep.subr.mxu0 0.0
        %2316 = vmatpush1.msra.mxu0 0.0
        %2317 = vmatprep.subr.mxu0 0.0
        %2318 = vmatpush1.msra.mxu0 0.0
        %2319 = vmatprep.subr.mxu0 0.0
        %2320 = vmatpush1.msra.mxu0 0.0
        %2321 = vmatprep.subr.mxu0 0.0
        %2322 = vmatpush1.msra.mxu0 0.0
        %2323 = vmatprep.subr.mxu0 0.0
        %2324 = vmatpush1.msra.mxu0 0.0
        %2325 = vmatprep.subr.mxu0 0.0
        %2326 = vmatpush1.msra.mxu0 0.0
        %2327 = vmatprep.subr.mxu0 0.0
        %2328 = vmatpush1.msra.mxu0 0.0
        %2329 = vmatprep.subr.mxu0 0.0
        %2330 = vmatpush1.msra.mxu0 0.0
        %2331 = vmatprep.subr.mxu0 0.0
        %2332 = vmatpush1.msra.mxu0 0.0
        %2333 = vmatprep.subr.mxu0 0.0
        %2334 = vmatpush1.msra.mxu0 0.0
        %2335 = vmatprep.subr.mxu0 0.0
        %2336 = vmatpush1.msra.mxu0 0.0
        %2337 = vmatprep.subr.mxu0 0.0
        %2338 = vmatpush1.msra.mxu0 0.0
        %2339 = vmatprep.subr.mxu0 0.0
        %2340 = vmatpush1.msra.mxu0 0.0
        %2341 = vmatprep.subr.mxu0 0.0
        %2342 = vmatpush1.msra.mxu0 0.0
        %2343 = vmatprep.subr.mxu0 0.0
        %2344 = vmatpush1.msra.mxu0 0.0
        %2345 = vmatprep.subr.mxu0 0.0
        %2346 = vmatpush1.msra.mxu0 0.0
        %2347 = vmatprep.subr.mxu0 0.0
        %2348 = vmatpush1.msra.mxu0 0.0
        %2349 = vmatprep.subr.mxu0 0.0
        %2350 = vmatpush1.msra.mxu0 0.0
        %2351 = vmatprep.subr.mxu0 0.0
        %2352 = vmatpush1.msra.mxu0 0.0
        %2353 = vmatprep.subr.mxu0 0.0
        %2354 = vmatpush1.msra.mxu0 0.0
        %2355 = vmatprep.subr.mxu0 0.0
        %2356 = vmatpush1.msra.mxu0 0.0
        %2357 = vmatprep.subr.mxu0 0.0
        %2358 = vmatpush1.msra.mxu0 0.0
        %2359 = vmatprep.subr.mxu0 0.0
        %2360 = vmatpush1.msra.mxu0 0.0
        %2361 = vmatprep.mubr.f32.mxu0 0.0
        %2362 = vmatmul.mubr.f32.gmra.mrb[0].mxu0 %v2295
        %v2363 = vpop.f32.mrb[0].mxu0
        %v2364 = vadd.f32 %v1306, %v2363
        %v2365 = vpop.f32.mrb[0].mxu0
        %2366 = vdwg.mxu0
        %v2367 = vmax.f32 %v2364, 0.0
        %v2369 = vsel %vm954, %v2367, 0
        %2371 = vmatprep.subr.mxu0 0.0
        %2372 = vmatpush1.msra.mxu0 %v1211
        %2373 = vmatprep.subr.mxu0 0.0
        %2374 = vmatpush1.msra.mxu0 %v1212
        %2375 = vmatprep.subr.mxu0 0.0
        %2376 = vmatpush1.msra.mxu0 %v1213
        %2377 = vmatprep.subr.mxu0 0.0
        %2378 = vmatpush1.msra.mxu0 %v1214
        %2379 = vmatprep.subr.mxu0 0.0
        %2380 = vmatpush1.msra.mxu0 0.0
        %2381 = vmatprep.subr.mxu0 0.0
        %2382 = vmatpush1.msra.mxu0 0.0
        %2383 = vmatprep.subr.mxu0 0.0
        %2384 = vmatpush1.msra.mxu0 0.0
        %2385 = vmatprep.subr.mxu0 0.0
        %2386 = vmatpush1.msra.mxu0 0.0
        %2387 = vmatprep.subr.mxu0 0.0
        %2388 = vmatpush1.msra.mxu0 0.0
        %2389 = vmatprep.subr.mxu0 0.0
        %2390 = vmatpush1.msra.mxu0 0.0
        %2391 = vmatprep.subr.mxu0 0.0
        %2392 = vmatpush1.msra.mxu0 0.0
        %2393 = vmatprep.subr.mxu0 0.0
        %2394 = vmatpush1.msra.mxu0 0.0
        %2395 = vmatprep.subr.mxu0 0.0
        %2396 = vmatpush1.msra.mxu0 0.0
        %2397 = vmatprep.subr.mxu0 0.0
        %2398 = vmatpush1.msra.mxu0 0.0
        %2399 = vmatprep.subr.mxu0 0.0
        %2400 = vmatpush1.msra.mxu0 0.0
        %2401 = vmatprep.subr.mxu0 0.0
        %2402 = vmatpush1.msra.mxu0 0.0
        %2403 = vmatprep.subr.mxu0 0.0
        %2404 = vmatpush1.msra.mxu0 0.0
        %2405 = vmatprep.subr.mxu0 0.0
        %2406 = vmatpush1.msra.mxu0 0.0
        %2407 = vmatprep.subr.mxu0 0.0
        %2408 = vmatpush1.msra.mxu0 0.0
        %2409 = vmatprep.subr.mxu0 0.0
        %2410 = vmatpush1.msra.mxu0 0.0
        %2411 = vmatprep.subr.mxu0 0.0
        %2412 = vmatpush1.msra.mxu0 0.0
        %2413 = vmatprep.subr.mxu0 0.0
        %2414 = vmatpush1.msra.mxu0 0.0
        %2415 = vmatprep.subr.mxu0 0.0
        %2416 = vmatpush1.msra.mxu0 0.0
        %2417 = vmatprep.subr.mxu0 0.0
        %2418 = vmatpush1.msra.mxu0 0.0
        %2419 = vmatprep.subr.mxu0 0.0
        %2420 = vmatpush1.msra.mxu0 0.0
        %2421 = vmatprep.subr.mxu0 0.0
        %2422 = vmatpush1.msra.mxu0 0.0
        %2423 = vmatprep.subr.mxu0 0.0
        %2424 = vmatpush1.msra.mxu0 0.0
        %2425 = vmatprep.subr.mxu0 0.0
        %2426 = vmatpush1.msra.mxu0 0.0
        %2427 = vmatprep.subr.mxu0 0.0
        %2428 = vmatpush1.msra.mxu0 0.0
        %2429 = vmatprep.subr.mxu0 0.0
        %2430 = vmatpush1.msra.mxu0 0.0
        %2431 = vmatprep.subr.mxu0 0.0
        %2432 = vmatpush1.msra.mxu0 0.0
        %2433 = vmatprep.subr.mxu0 0.0
        %2434 = vmatpush1.msra.mxu0 0.0
        %2435 = vmatprep.mubr.f32.mxu0 0.0
        %2436 = vmatmul.mubr.f32.gmra.mrb[0].mxu0 %v2369
        %v2437 = vpop.f32.mrb[0].mxu0
        %v2438 = vadd.f32 %v1386, %v2437
        %v2439 = vpop.f32.mrb[0].mxu0
        %2440 = vdwg.mxu0
        %v2441 = vsub.f32 0.0, %v2438
        %v2442 = vmul.f32 %v2441, 1.442695
        %v2443 = vpow.pop %v2442
        %v2444 = vadd.f32 %v2443, 1.0
        %v2445 = vrcp.pop %v2444
        %v2446 = vmul.f32 1.0, %v2445
        %2448 = vrot.lane.b32.xlu0 %v2446, 64
        %v2449 = vpop.permute.xlu0 %2448
        %vm2451 = vcmask 654848
        %2452 = vst.msk [vmem:[%s838] sm:$0xff] %vm2451, %v2449
        %2453 = vrot.lane.b32.xlu0 %v1204, 96
        %v2454 = vpop.permute.xlu0 %2453
        %v2456 = vmul.f32 %v1117, %v2454
        %2458 = vrot.lane.b32.xlu0 %v2456, 120
        %v2459 = vpop.permute.xlu0 %2458
        %v2461 = vadd.f32 %v1110, %v2459
        %2463 = vrot.lane.b32.xlu0 %v2461, 40
        %v2464 = vpop.permute.xlu0 %2463
        %vm2466 = vcmask 392512
        %2467 = vst.msk [vmem:[%s852] sm:$0xff] %vm2466, %v2464
        %v2468 = vsel %vm1226, %v2461, 0
        %2470 = vmatprep.subr.mxu0 0.0
        %2471 = vmatpush1.msra.mxu0 %v1205
        %2472 = vmatprep.subr.mxu0 0.0
        %2473 = vmatpush1.msra.mxu0 0.0
        %2474 = vmatprep.subr.mxu0 0.0
        %2475 = vmatpush1.msra.mxu0 0.0
        %2476 = vmatprep.subr.mxu0 0.0
        %2477 = vmatpush1.msra.mxu0 0.0
        %2478 = vmatprep.subr.mxu0 0.0
        %2479 = vmatpush1.msra.mxu0 0.0
        %2480 = vmatprep.subr.mxu0 0.0
        %2481 = vmatpush1.msra.mxu0 0.0
        %2482 = vmatprep.subr.mxu0 0.0
        %2483 = vmatpush1.msra.mxu0 0.0
        %2484 = vmatprep.subr.mxu0 0.0
        %2485 = vmatpush1.msra.mxu0 0.0
        %2486 = vmatprep.subr.mxu0 0.0
        %2487 = vmatpush1.msra.mxu0 0.0
        %2488 = vmatprep.subr.mxu0 0.0
        %2489 = vmatpush1.msra.mxu0 0.0
        %2490 = vmatprep.subr.mxu0 0.0
        %2491 = vmatpush1.msra.mxu0 0.0
        %2492 = vmatprep.subr.mxu0 0.0
        %2493 = vmatpush1.msra.mxu0 0.0
        %2494 = vmatprep.subr.mxu0 0.0
        %2495 = vmatpush1.msra.mxu0 0.0
        %2496 = vmatprep.subr.mxu0 0.0
        %2497 = vmatpush1.msra.mxu0 0.0
        %2498 = vmatprep.subr.mxu0 0.0
        %2499 = vmatpush1.msra.mxu0 0.0
        %2500 = vmatprep.subr.mxu0 0.0
        %2501 = vmatpush1.msra.mxu0 0.0
        %2502 = vmatprep.subr.mxu0 0.0
        %2503 = vmatpush1.msra.mxu0 0.0
        %2504 = vmatprep.subr.mxu0 0.0
        %2505 = vmatpush1.msra.mxu0 0.0
        %2506 = vmatprep.subr.mxu0 0.0
        %2507 = vmatpush1.msra.mxu0 0.0
        %2508 = vmatprep.subr.mxu0 0.0
        %2509 = vmatpush1.msra.mxu0 0.0
        %2510 = vmatprep.subr.mxu0 0.0
        %2511 = vmatpush1.msra.mxu0 0.0
        %2512 = vmatprep.subr.mxu0 0.0
        %2513 = vmatpush1.msra.mxu0 0.0
        %2514 = vmatprep.subr.mxu0 0.0
        %2515 = vmatpush1.msra.mxu0 0.0
        %2516 = vmatprep.subr.mxu0 0.0
        %2517 = vmatpush1.msra.mxu0 0.0
        %2518 = vmatprep.subr.mxu0 0.0
        %2519 = vmatpush1.msra.mxu0 0.0
        %2520 = vmatprep.subr.mxu0 0.0
        %2521 = vmatpush1.msra.mxu0 0.0
        %2522 = vmatprep.subr.mxu0 0.0
        %2523 = vmatpush1.msra.mxu0 0.0
        %2524 = vmatprep.subr.mxu0 0.0
        %2525 = vmatpush1.msra.mxu0 0.0
        %2526 = vmatprep.subr.mxu0 0.0
        %2527 = vmatpush1.msra.mxu0 0.0
        %2528 = vmatprep.subr.mxu0 0.0
        %2529 = vmatpush1.msra.mxu0 0.0
        %2530 = vmatprep.subr.mxu0 0.0
        %2531 = vmatpush1.msra.mxu0 0.0
        %2532 = vmatprep.subr.mxu0 0.0
        %2533 = vmatpush1.msra.mxu0 0.0
        %2534 = vmatprep.mubr.f32.mxu0 0.0
        %2535 = vmatmul.mubr.f32.gmra.mrb[0].mxu0 %v2468
        %v2536 = vpop.f32.mrb[0].mxu0
        %v2537 = vadd.f32 %v1201, %v2536
        %v2538 = vpop.f32.mrb[0].mxu0
        %2539 = vdwg.mxu0
        %v2540 = vmax.f32 %v2537, 0.0
        %v2542 = vsel %vm954, %v2540, 0
        %2544 = vmatprep.subr.mxu0 0.0
        %2545 = vmatpush1.msra.mxu0 %v1206
        %2546 = vmatprep.subr.mxu0 0.0
        %2547 = vmatpush1.msra.mxu0 %v1207
        %2548 = vmatprep.subr.mxu0 0.0
        %2549 = vmatpush1.msra.mxu0 %v1208
        %2550 = vmatprep.subr.mxu0 0.0
        %2551 = vmatpush1.msra.mxu0 %v1209
        %2552 = vmatprep.subr.mxu0 0.0
        %2553 = vmatpush1.msra.mxu0 0.0
        %2554 = vmatprep.subr.mxu0 0.0
        %2555 = vmatpush1.msra.mxu0 0.0
        %2556 = vmatprep.subr.mxu0 0.0
        %2557 = vmatpush1.msra.mxu0 0.0
        %2558 = vmatprep.subr.mxu0 0.0
        %2559 = vmatpush1.msra.mxu0 0.0
        %2560 = vmatprep.subr.mxu0 0.0
        %2561 = vmatpush1.msra.mxu0 0.0
        %2562 = vmatprep.subr.mxu0 0.0
        %2563 = vmatpush1.msra.mxu0 0.0
        %2564 = vmatprep.subr.mxu0 0.0
        %2565 = vmatpush1.msra.mxu0 0.0
        %2566 = vmatprep.subr.mxu0 0.0
        %2567 = vmatpush1.msra.mxu0 0.0
        %2568 = vmatprep.subr.mxu0 0.0
        %2569 = vmatpush1.msra.mxu0 0.0
        %2570 = vmatprep.subr.mxu0 0.0
        %2571 = vmatpush1.msra.mxu0 0.0
        %2572 = vmatprep.subr.mxu0 0.0
        %2573 = vmatpush1.msra.mxu0 0.0
        %2574 = vmatprep.subr.mxu0 0.0
        %2575 = vmatpush1.msra.mxu0 0.0
        %2576 = vmatprep.subr.mxu0 0.0
        %2577 = vmatpush1.msra.mxu0 0.0
        %2578 = vmatprep.subr.mxu0 0.0
        %2579 = vmatpush1.msra.mxu0 0.0
        %2580 = vmatprep.subr.mxu0 0.0
        %2581 = vmatpush1.msra.mxu0 0.0
        %2582 = vmatprep.subr.mxu0 0.0
        %2583 = vmatpush1.msra.mxu0 0.0
        %2584 = vmatprep.subr.mxu0 0.0
        %2585 = vmatpush1.msra.mxu0 0.0
        %2586 = vmatprep.subr.mxu0 0.0
        %2587 = vmatpush1.msra.mxu0 0.0
        %2588 = vmatprep.subr.mxu0 0.0
        %2589 = vmatpush1.msra.mxu0 0.0
        %2590 = vmatprep.subr.mxu0 0.0
        %2591 = vmatpush1.msra.mxu0 0.0
        %2592 = vmatprep.subr.mxu0 0.0
        %2593 = vmatpush1.msra.mxu0 0.0
        %2594 = vmatprep.subr.mxu0 0.0
        %2595 = vmatpush1.msra.mxu0 0.0
        %2596 = vmatprep.subr.mxu0 0.0
        %2597 = vmatpush1.msra.mxu0 0.0
        %2598 = vmatprep.subr.mxu0 0.0
        %2599 = vmatpush1.msra.mxu0 0.0
        %2600 = vmatprep.subr.mxu0 0.0
        %2601 = vmatpush1.msra.mxu0 0.0
        %2602 = vmatprep.subr.mxu0 0.0
        %2603 = vmatpush1.msra.mxu0 0.0
        %2604 = vmatprep.subr.mxu0 0.0
        %2605 = vmatpush1.msra.mxu0 0.0
        %2606 = vmatprep.subr.mxu0 0.0
        %2607 = vmatpush1.msra.mxu0 0.0
        %2608 = vmatprep.mubr.f32.mxu0 0.0
        %2609 = vmatmul.mubr.f32.gmra.mrb[0].mxu0 %v2542
        %v2610 = vpop.f32.mrb[0].mxu0
        %v2611 = vadd.f32 %v1306, %v2610
        %v2612 = vpop.f32.mrb[0].mxu0
        %2613 = vdwg.mxu0
        %v2614 = vmax.f32 %v2611, 0.0
        %v2616 = vsel %vm954, %v2614, 0
        %2618 = vmatprep.subr.mxu0 0.0
        %2619 = vmatpush1.msra.mxu0 %v1211
        %2620 = vmatprep.subr.mxu0 0.0
        %2621 = vmatpush1.msra.mxu0 %v1212
        %2622 = vmatprep.subr.mxu0 0.0
        %2623 = vmatpush1.msra.mxu0 %v1213
        %2624 = vmatprep.subr.mxu0 0.0
        %2625 = vmatpush1.msra.mxu0 %v1214
        %2626 = vmatprep.subr.mxu0 0.0
        %2627 = vmatpush1.msra.mxu0 0.0
        %2628 = vmatprep.subr.mxu0 0.0
        %2629 = vmatpush1.msra.mxu0 0.0
        %2630 = vmatprep.subr.mxu0 0.0
        %2631 = vmatpush1.msra.mxu0 0.0
        %2632 = vmatprep.subr.mxu0 0.0
        %2633 = vmatpush1.msra.mxu0 0.0
        %2634 = vmatprep.subr.mxu0 0.0
        %2635 = vmatpush1.msra.mxu0 0.0
        %2636 = vmatprep.subr.mxu0 0.0
        %2637 = vmatpush1.msra.mxu0 0.0
        %2638 = vmatprep.subr.mxu0 0.0
        %2639 = vmatpush1.msra.mxu0 0.0
        %2640 = vmatprep.subr.mxu0 0.0
        %2641 = vmatpush1.msra.mxu0 0.0
        %2642 = vmatprep.subr.mxu0 0.0
        %2643 = vmatpush1.msra.mxu0 0.0
        %2644 = vmatprep.subr.mxu0 0.0
        %2645 = vmatpush1.msra.mxu0 0.0
        %2646 = vmatprep.subr.mxu0 0.0
        %2647 = vmatpush1.msra.mxu0 0.0
        %2648 = vmatprep.subr.mxu0 0.0
        %2649 = vmatpush1.msra.mxu0 0.0
        %2650 = vmatprep.subr.mxu0 0.0
        %2651 = vmatpush1.msra.mxu0 0.0
        %2652 = vmatprep.subr.mxu0 0.0
        %2653 = vmatpush1.msra.mxu0 0.0
        %2654 = vmatprep.subr.mxu0 0.0
        %2655 = vmatpush1.msra.mxu0 0.0
        %2656 = vmatprep.subr.mxu0 0.0
        %2657 = vmatpush1.msra.mxu0 0.0
        %2658 = vmatprep.subr.mxu0 0.0
        %2659 = vmatpush1.msra.mxu0 0.0
        %2660 = vmatprep.subr.mxu0 0.0
        %2661 = vmatpush1.msra.mxu0 0.0
        %2662 = vmatprep.subr.mxu0 0.0
        %2663 = vmatpush1.msra.mxu0 0.0
        %2664 = vmatprep.subr.mxu0 0.0
        %2665 = vmatpush1.msra.mxu0 0.0
        %2666 = vmatprep.subr.mxu0 0.0
        %2667 = vmatpush1.msra.mxu0 0.0
        %2668 = vmatprep.subr.mxu0 0.0
        %2669 = vmatpush1.msra.mxu0 0.0
        %2670 = vmatprep.subr.mxu0 0.0
        %2671 = vmatpush1.msra.mxu0 0.0
        %2672 = vmatprep.subr.mxu0 0.0
        %2673 = vmatpush1.msra.mxu0 0.0
        %2674 = vmatprep.subr.mxu0 0.0
        %2675 = vmatpush1.msra.mxu0 0.0
        %2676 = vmatprep.subr.mxu0 0.0
        %2677 = vmatpush1.msra.mxu0 0.0
        %2678 = vmatprep.subr.mxu0 0.0
        %2679 = vmatpush1.msra.mxu0 0.0
        %2680 = vmatprep.subr.mxu0 0.0
        %2681 = vmatpush1.msra.mxu0 0.0
        %2682 = vmatprep.mubr.f32.mxu0 0.0
        %2683 = vmatmul.mubr.f32.gmra.mrb[0].mxu0 %v2616
        %v2684 = vpop.f32.mrb[0].mxu0
        %v2685 = vadd.f32 %v1386, %v2684
        %v2686 = vpop.f32.mrb[0].mxu0
        %2687 = vdwg.mxu0
        %v2688 = vsub.f32 0.0, %v2685
        %v2689 = vmul.f32 %v2688, 1.442695
        %v2690 = vpow.pop %v2689
        %v2691 = vadd.f32 %v2690, 1.0
        %v2692 = vrcp.pop %v2691
        %v2693 = vmul.f32 1.0, %v2692
        %2695 = vrot.lane.b32.xlu0 %v2693, 80
        %v2696 = vpop.permute.xlu0 %2695
        %vm2698 = vcmask 786048
        %2699 = vst.msk [vmem:[%s838] sm:$0xff] %vm2698, %v2696
        %2700 = vrot.lane.b32.xlu0 %v1204, 88
        %v2701 = vpop.permute.xlu0 %2700
        %v2703 = vmul.f32 %v1117, %v2701
        %2705 = vrot.lane.b32.xlu0 %v2703, 120
        %v2706 = vpop.permute.xlu0 %2705
        %v2708 = vadd.f32 %v1110, %v2706
        %2710 = vrot.lane.b32.xlu0 %v2708, 48
        %v2711 = vpop.permute.xlu0 %2710
        %vm2713 = vcmask 458112
        %2714 = vst.msk [vmem:[%s852] sm:$0xff] %vm2713, %v2711
        %v2715 = vsel %vm1226, %v2708, 0
        %2717 = vmatprep.subr.mxu0 0.0
        %2718 = vmatpush1.msra.mxu0 %v1205
        %2719 = vmatprep.subr.mxu0 0.0
        %2720 = vmatpush1.msra.mxu0 0.0
        %2721 = vmatprep.subr.mxu0 0.0
        %2722 = vmatpush1.msra.mxu0 0.0
        %2723 = vmatprep.subr.mxu0 0.0
        %2724 = vmatpush1.msra.mxu0 0.0
        %2725 = vmatprep.subr.mxu0 0.0
        %2726 = vmatpush1.msra.mxu0 0.0
        %2727 = vmatprep.subr.mxu0 0.0
        %2728 = vmatpush1.msra.mxu0 0.0
        %2729 = vmatprep.subr.mxu0 0.0
        %2730 = vmatpush1.msra.mxu0 0.0
        %2731 = vmatprep.subr.mxu0 0.0
        %2732 = vmatpush1.msra.mxu0 0.0
        %2733 = vmatprep.subr.mxu0 0.0
        %2734 = vmatpush1.msra.mxu0 0.0
        %2735 = vmatprep.subr.mxu0 0.0
        %2736 = vmatpush1.msra.mxu0 0.0
        %2737 = vmatprep.subr.mxu0 0.0
        %2738 = vmatpush1.msra.mxu0 0.0
        %2739 = vmatprep.subr.mxu0 0.0
        %2740 = vmatpush1.msra.mxu0 0.0
        %2741 = vmatprep.subr.mxu0 0.0
        %2742 = vmatpush1.msra.mxu0 0.0
        %2743 = vmatprep.subr.mxu0 0.0
        %2744 = vmatpush1.msra.mxu0 0.0
        %2745 = vmatprep.subr.mxu0 0.0
        %2746 = vmatpush1.msra.mxu0 0.0
        %2747 = vmatprep.subr.mxu0 0.0
        %2748 = vmatpush1.msra.mxu0 0.0
        %2749 = vmatprep.subr.mxu0 0.0
        %2750 = vmatpush1.msra.mxu0 0.0
        %2751 = vmatprep.subr.mxu0 0.0
        %2752 = vmatpush1.msra.mxu0 0.0
        %2753 = vmatprep.subr.mxu0 0.0
        %2754 = vmatpush1.msra.mxu0 0.0
        %2755 = vmatprep.subr.mxu0 0.0
        %2756 = vmatpush1.msra.mxu0 0.0
        %2757 = vmatprep.subr.mxu0 0.0
        %2758 = vmatpush1.msra.mxu0 0.0
        %2759 = vmatprep.subr.mxu0 0.0
        %2760 = vmatpush1.msra.mxu0 0.0
        %2761 = vmatprep.subr.mxu0 0.0
        %2762 = vmatpush1.msra.mxu0 0.0
        %2763 = vmatprep.subr.mxu0 0.0
        %2764 = vmatpush1.msra.mxu0 0.0
        %2765 = vmatprep.subr.mxu0 0.0
        %2766 = vmatpush1.msra.mxu0 0.0
        %2767 = vmatprep.subr.mxu0 0.0
        %2768 = vmatpush1.msra.mxu0 0.0
        %2769 = vmatprep.subr.mxu0 0.0
        %2770 = vmatpush1.msra.mxu0 0.0
        %2771 = vmatprep.subr.mxu0 0.0
        %2772 = vmatpush1.msra.mxu0 0.0
        %2773 = vmatprep.subr.mxu0 0.0
        %2774 = vmatpush1.msra.mxu0 0.0
        %2775 = vmatprep.subr.mxu0 0.0
        %2776 = vmatpush1.msra.mxu0 0.0
        %2777 = vmatprep.subr.mxu0 0.0
        %2778 = vmatpush1.msra.mxu0 0.0
        %2779 = vmatprep.subr.mxu0 0.0
        %2780 = vmatpush1.msra.mxu0 0.0
        %2781 = vmatprep.mubr.f32.mxu0 0.0
        %2782 = vmatmul.mubr.f32.gmra.mrb[0].mxu0 %v2715
        %v2783 = vpop.f32.mrb[0].mxu0
        %v2784 = vadd.f32 %v1201, %v2783
        %v2785 = vpop.f32.mrb[0].mxu0
        %2786 = vdwg.mxu0
        %v2787 = vmax.f32 %v2784, 0.0
        %v2789 = vsel %vm954, %v2787, 0
        %2791 = vmatprep.subr.mxu0 0.0
        %2792 = vmatpush1.msra.mxu0 %v1206
        %2793 = vmatprep.subr.mxu0 0.0
        %2794 = vmatpush1.msra.mxu0 %v1207
        %2795 = vmatprep.subr.mxu0 0.0
        %2796 = vmatpush1.msra.mxu0 %v1208
        %2797 = vmatprep.subr.mxu0 0.0
        %2798 = vmatpush1.msra.mxu0 %v1209
        %2799 = vmatprep.subr.mxu0 0.0
        %2800 = vmatpush1.msra.mxu0 0.0
        %2801 = vmatprep.subr.mxu0 0.0
        %2802 = vmatpush1.msra.mxu0 0.0
        %2803 = vmatprep.subr.mxu0 0.0
        %2804 = vmatpush1.msra.mxu0 0.0
        %2805 = vmatprep.subr.mxu0 0.0
        %2806 = vmatpush1.msra.mxu0 0.0
        %2807 = vmatprep.subr.mxu0 0.0
        %2808 = vmatpush1.msra.mxu0 0.0
        %2809 = vmatprep.subr.mxu0 0.0
        %2810 = vmatpush1.msra.mxu0 0.0
        %2811 = vmatprep.subr.mxu0 0.0
        %2812 = vmatpush1.msra.mxu0 0.0
        %2813 = vmatprep.subr.mxu0 0.0
        %2814 = vmatpush1.msra.mxu0 0.0
        %2815 = vmatprep.subr.mxu0 0.0
        %2816 = vmatpush1.msra.mxu0 0.0
        %2817 = vmatprep.subr.mxu0 0.0
        %2818 = vmatpush1.msra.mxu0 0.0
        %2819 = vmatprep.subr.mxu0 0.0
        %2820 = vmatpush1.msra.mxu0 0.0
        %2821 = vmatprep.subr.mxu0 0.0
        %2822 = vmatpush1.msra.mxu0 0.0
        %2823 = vmatprep.subr.mxu0 0.0
        %2824 = vmatpush1.msra.mxu0 0.0
        %2825 = vmatprep.subr.mxu0 0.0
        %2826 = vmatpush1.msra.mxu0 0.0
        %2827 = vmatprep.subr.mxu0 0.0
        %2828 = vmatpush1.msra.mxu0 0.0
        %2829 = vmatprep.subr.mxu0 0.0
        %2830 = vmatpush1.msra.mxu0 0.0
        %2831 = vmatprep.subr.mxu0 0.0
        %2832 = vmatpush1.msra.mxu0 0.0
        %2833 = vmatprep.subr.mxu0 0.0
        %2834 = vmatpush1.msra.mxu0 0.0
        %2835 = vmatprep.subr.mxu0 0.0
        %2836 = vmatpush1.msra.mxu0 0.0
        %2837 = vmatprep.subr.mxu0 0.0
        %2838 = vmatpush1.msra.mxu0 0.0
        %2839 = vmatprep.subr.mxu0 0.0
        %2840 = vmatpush1.msra.mxu0 0.0
        %2841 = vmatprep.subr.mxu0 0.0
        %2842 = vmatpush1.msra.mxu0 0.0
        %2843 = vmatprep.subr.mxu0 0.0
        %2844 = vmatpush1.msra.mxu0 0.0
        %2845 = vmatprep.subr.mxu0 0.0
        %2846 = vmatpush1.msra.mxu0 0.0
        %2847 = vmatprep.subr.mxu0 0.0
        %2848 = vmatpush1.msra.mxu0 0.0
        %2849 = vmatprep.subr.mxu0 0.0
        %2850 = vmatpush1.msra.mxu0 0.0
        %2851 = vmatprep.subr.mxu0 0.0
        %2852 = vmatpush1.msra.mxu0 0.0
        %2853 = vmatprep.subr.mxu0 0.0
        %2854 = vmatpush1.msra.mxu0 0.0
        %2855 = vmatprep.mubr.f32.mxu0 0.0
        %2856 = vmatmul.mubr.f32.gmra.mrb[0].mxu0 %v2789
        %v2857 = vpop.f32.mrb[0].mxu0
        %v2858 = vadd.f32 %v1306, %v2857
        %v2859 = vpop.f32.mrb[0].mxu0
        %2860 = vdwg.mxu0
        %v2861 = vmax.f32 %v2858, 0.0
        %v2863 = vsel %vm954, %v2861, 0
        %2865 = vmatprep.subr.mxu0 0.0
        %2866 = vmatpush1.msra.mxu0 %v1211
        %2867 = vmatprep.subr.mxu0 0.0
        %2868 = vmatpush1.msra.mxu0 %v1212
        %2869 = vmatprep.subr.mxu0 0.0
        %2870 = vmatpush1.msra.mxu0 %v1213
        %2871 = vmatprep.subr.mxu0 0.0
        %2872 = vmatpush1.msra.mxu0 %v1214
        %2873 = vmatprep.subr.mxu0 0.0
        %2874 = vmatpush1.msra.mxu0 0.0
        %2875 = vmatprep.subr.mxu0 0.0
        %2876 = vmatpush1.msra.mxu0 0.0
        %2877 = vmatprep.subr.mxu0 0.0
        %2878 = vmatpush1.msra.mxu0 0.0
        %2879 = vmatprep.subr.mxu0 0.0
        %2880 = vmatpush1.msra.mxu0 0.0
        %2881 = vmatprep.subr.mxu0 0.0
        %2882 = vmatpush1.msra.mxu0 0.0
        %2883 = vmatprep.subr.mxu0 0.0
        %2884 = vmatpush1.msra.mxu0 0.0
        %2885 = vmatprep.subr.mxu0 0.0
        %2886 = vmatpush1.msra.mxu0 0.0
        %2887 = vmatprep.subr.mxu0 0.0
        %2888 = vmatpush1.msra.mxu0 0.0
        %2889 = vmatprep.subr.mxu0 0.0
        %2890 = vmatpush1.msra.mxu0 0.0
        %2891 = vmatprep.subr.mxu0 0.0
        %2892 = vmatpush1.msra.mxu0 0.0
        %2893 = vmatprep.subr.mxu0 0.0
        %2894 = vmatpush1.msra.mxu0 0.0
        %2895 = vmatprep.subr.mxu0 0.0
        %2896 = vmatpush1.msra.mxu0 0.0
        %2897 = vmatprep.subr.mxu0 0.0
        %2898 = vmatpush1.msra.mxu0 0.0
        %2899 = vmatprep.subr.mxu0 0.0
        %2900 = vmatpush1.msra.mxu0 0.0
        %2901 = vmatprep.subr.mxu0 0.0
        %2902 = vmatpush1.msra.mxu0 0.0
        %2903 = vmatprep.subr.mxu0 0.0
        %2904 = vmatpush1.msra.mxu0 0.0
        %2905 = vmatprep.subr.mxu0 0.0
        %2906 = vmatpush1.msra.mxu0 0.0
        %2907 = vmatprep.subr.mxu0 0.0
        %2908 = vmatpush1.msra.mxu0 0.0
        %2909 = vmatprep.subr.mxu0 0.0
        %2910 = vmatpush1.msra.mxu0 0.0
        %2911 = vmatprep.subr.mxu0 0.0
        %2912 = vmatpush1.msra.mxu0 0.0
        %2913 = vmatprep.subr.mxu0 0.0
        %2914 = vmatpush1.msra.mxu0 0.0
        %2915 = vmatprep.subr.mxu0 0.0
        %2916 = vmatpush1.msra.mxu0 0.0
        %2917 = vmatprep.subr.mxu0 0.0
        %2918 = vmatpush1.msra.mxu0 0.0
        %2919 = vmatprep.subr.mxu0 0.0
        %2920 = vmatpush1.msra.mxu0 0.0
        %2921 = vmatprep.subr.mxu0 0.0
        %2922 = vmatpush1.msra.mxu0 0.0
        %2923 = vmatprep.subr.mxu0 0.0
        %2924 = vmatpush1.msra.mxu0 0.0
        %2925 = vmatprep.subr.mxu0 0.0
        %2926 = vmatpush1.msra.mxu0 0.0
        %2927 = vmatprep.subr.mxu0 0.0
        %2928 = vmatpush1.msra.mxu0 0.0
        %2929 = vmatprep.mubr.f32.mxu0 0.0
        %2930 = vmatmul.mubr.f32.gmra.mrb[0].mxu0 %v2863
        %v2931 = vpop.f32.mrb[0].mxu0
        %v2932 = vadd.f32 %v1386, %v2931
        %v2933 = vpop.f32.mrb[0].mxu0
        %2934 = vdwg.mxu0
        %v2935 = vsub.f32 0.0, %v2932
        %v2936 = vmul.f32 %v2935, 1.442695
        %v2937 = vpow.pop %v2936
        %v2938 = vadd.f32 %v2937, 1.0
        %v2939 = vrcp.pop %v2938
        %v2940 = vmul.f32 1.0, %v2939
        %2942 = vrot.lane.b32.xlu0 %v2940, 96
        %v2943 = vpop.permute.xlu0 %2942
        %vm2945 = vcmask 917248
        %2946 = vst.msk [vmem:[%s838] sm:$0xff] %vm2945, %v2943
        %2947 = vrot.lane.b32.xlu0 %v1204, 80
        %v2948 = vpop.permute.xlu0 %2947
        %v2950 = vmul.f32 %v1117, %v2948
        %2952 = vrot.lane.b32.xlu0 %v2950, 120
        %v2953 = vpop.permute.xlu0 %2952
        %v2955 = vadd.f32 %v1110, %v2953
        %2957 = vrot.lane.b32.xlu0 %v2955, 56
        %v2958 = vpop.permute.xlu0 %2957
        %vm2960 = vcmask 523712
        %2961 = vst.msk [vmem:[%s852] sm:$0xff] %vm2960, %v2958
        %v2962 = vsel %vm1226, %v2955, 0
        %2964 = vmatprep.subr.mxu0 0.0
        %2965 = vmatpush1.msra.mxu0 %v1205
        %2966 = vmatprep.subr.mxu0 0.0
        %2967 = vmatpush1.msra.mxu0 0.0
        %2968 = vmatprep.subr.mxu0 0.0
        %2969 = vmatpush1.msra.mxu0 0.0
        %2970 = vmatprep.subr.mxu0 0.0
        %2971 = vmatpush1.msra.mxu0 0.0
        %2972 = vmatprep.subr.mxu0 0.0
        %2973 = vmatpush1.msra.mxu0 0.0
        %2974 = vmatprep.subr.mxu0 0.0
        %2975 = vmatpush1.msra.mxu0 0.0
        %2976 = vmatprep.subr.mxu0 0.0
        %2977 = vmatpush1.msra.mxu0 0.0
        %2978 = vmatprep.subr.mxu0 0.0
        %2979 = vmatpush1.msra.mxu0 0.0
        %2980 = vmatprep.subr.mxu0 0.0
        %2981 = vmatpush1.msra.mxu0 0.0
        %2982 = vmatprep.subr.mxu0 0.0
        %2983 = vmatpush1.msra.mxu0 0.0
        %2984 = vmatprep.subr.mxu0 0.0
        %2985 = vmatpush1.msra.mxu0 0.0
        %2986 = vmatprep.subr.mxu0 0.0
        %2987 = vmatpush1.msra.mxu0 0.0
        %2988 = vmatprep.subr.mxu0 0.0
        %2989 = vmatpush1.msra.mxu0 0.0
        %2990 = vmatprep.subr.mxu0 0.0
        %2991 = vmatpush1.msra.mxu0 0.0
        %2992 = vmatprep.subr.mxu0 0.0
        %2993 = vmatpush1.msra.mxu0 0.0
        %2994 = vmatprep.subr.mxu0 0.0
        %2995 = vmatpush1.msra.mxu0 0.0
        %2996 = vmatprep.subr.mxu0 0.0
        %2997 = vmatpush1.msra.mxu0 0.0
        %2998 = vmatprep.subr.mxu0 0.0
        %2999 = vmatpush1.msra.mxu0 0.0
        %3000 = vmatprep.subr.mxu0 0.0
        %3001 = vmatpush1.msra.mxu0 0.0
        %3002 = vmatprep.subr.mxu0 0.0
        %3003 = vmatpush1.msra.mxu0 0.0
        %3004 = vmatprep.subr.mxu0 0.0
        %3005 = vmatpush1.msra.mxu0 0.0
        %3006 = vmatprep.subr.mxu0 0.0
        %3007 = vmatpush1.msra.mxu0 0.0
        %3008 = vmatprep.subr.mxu0 0.0
        %3009 = vmatpush1.msra.mxu0 0.0
        %3010 = vmatprep.subr.mxu0 0.0
        %3011 = vmatpush1.msra.mxu0 0.0
        %3012 = vmatprep.subr.mxu0 0.0
        %3013 = vmatpush1.msra.mxu0 0.0
        %3014 = vmatprep.subr.mxu0 0.0
        %3015 = vmatpush1.msra.mxu0 0.0
        %3016 = vmatprep.subr.mxu0 0.0
        %3017 = vmatpush1.msra.mxu0 0.0
        %3018 = vmatprep.subr.mxu0 0.0
        %3019 = vmatpush1.msra.mxu0 0.0
        %3020 = vmatprep.subr.mxu0 0.0
        %3021 = vmatpush1.msra.mxu0 0.0
        %3022 = vmatprep.subr.mxu0 0.0
        %3023 = vmatpush1.msra.mxu0 0.0
        %3024 = vmatprep.subr.mxu0 0.0
        %3025 = vmatpush1.msra.mxu0 0.0
        %3026 = vmatprep.subr.mxu0 0.0
        %3027 = vmatpush1.msra.mxu0 0.0
        %3028 = vmatprep.mubr.f32.mxu0 0.0
        %3029 = vmatmul.mubr.f32.gmra.mrb[0].mxu0 %v2962
        %v3030 = vpop.f32.mrb[0].mxu0
        %v3031 = vadd.f32 %v1201, %v3030
        %v3032 = vpop.f32.mrb[0].mxu0
        %3033 = vdwg.mxu0
        %v3034 = vmax.f32 %v3031, 0.0
        %v3036 = vsel %vm954, %v3034, 0
        %3038 = vmatprep.subr.mxu0 0.0
        %3039 = vmatpush1.msra.mxu0 %v1206
        %3040 = vmatprep.subr.mxu0 0.0
        %3041 = vmatpush1.msra.mxu0 %v1207
        %3042 = vmatprep.subr.mxu0 0.0
        %3043 = vmatpush1.msra.mxu0 %v1208
        %3044 = vmatprep.subr.mxu0 0.0
        %3045 = vmatpush1.msra.mxu0 %v1209
        %3046 = vmatprep.subr.mxu0 0.0
        %3047 = vmatpush1.msra.mxu0 0.0
        %3048 = vmatprep.subr.mxu0 0.0
        %3049 = vmatpush1.msra.mxu0 0.0
        %3050 = vmatprep.subr.mxu0 0.0
        %3051 = vmatpush1.msra.mxu0 0.0
        %3052 = vmatprep.subr.mxu0 0.0
        %3053 = vmatpush1.msra.mxu0 0.0
        %3054 = vmatprep.subr.mxu0 0.0
        %3055 = vmatpush1.msra.mxu0 0.0
        %3056 = vmatprep.subr.mxu0 0.0
        %3057 = vmatpush1.msra.mxu0 0.0
        %3058 = vmatprep.subr.mxu0 0.0
        %3059 = vmatpush1.msra.mxu0 0.0
        %3060 = vmatprep.subr.mxu0 0.0
        %3061 = vmatpush1.msra.mxu0 0.0
        %3062 = vmatprep.subr.mxu0 0.0
        %3063 = vmatpush1.msra.mxu0 0.0
        %3064 = vmatprep.subr.mxu0 0.0
        %3065 = vmatpush1.msra.mxu0 0.0
        %3066 = vmatprep.subr.mxu0 0.0
        %3067 = vmatpush1.msra.mxu0 0.0
        %3068 = vmatprep.subr.mxu0 0.0
        %3069 = vmatpush1.msra.mxu0 0.0
        %3070 = vmatprep.subr.mxu0 0.0
        %3071 = vmatpush1.msra.mxu0 0.0
        %3072 = vmatprep.subr.mxu0 0.0
        %3073 = vmatpush1.msra.mxu0 0.0
        %3074 = vmatprep.subr.mxu0 0.0
        %3075 = vmatpush1.msra.mxu0 0.0
        %3076 = vmatprep.subr.mxu0 0.0
        %3077 = vmatpush1.msra.mxu0 0.0
        %3078 = vmatprep.subr.mxu0 0.0
        %3079 = vmatpush1.msra.mxu0 0.0
        %3080 = vmatprep.subr.mxu0 0.0
        %3081 = vmatpush1.msra.mxu0 0.0
        %3082 = vmatprep.subr.mxu0 0.0
        %3083 = vmatpush1.msra.mxu0 0.0
        %3084 = vmatprep.subr.mxu0 0.0
        %3085 = vmatpush1.msra.mxu0 0.0
        %3086 = vmatprep.subr.mxu0 0.0
        %3087 = vmatpush1.msra.mxu0 0.0
        %3088 = vmatprep.subr.mxu0 0.0
        %3089 = vmatpush1.msra.mxu0 0.0
        %3090 = vmatprep.subr.mxu0 0.0
        %3091 = vmatpush1.msra.mxu0 0.0
        %3092 = vmatprep.subr.mxu0 0.0
        %3093 = vmatpush1.msra.mxu0 0.0
        %3094 = vmatprep.subr.mxu0 0.0
        %3095 = vmatpush1.msra.mxu0 0.0
        %3096 = vmatprep.subr.mxu0 0.0
        %3097 = vmatpush1.msra.mxu0 0.0
        %3098 = vmatprep.subr.mxu0 0.0
        %3099 = vmatpush1.msra.mxu0 0.0
        %3100 = vmatprep.subr.mxu0 0.0
        %3101 = vmatpush1.msra.mxu0 0.0
        %3102 = vmatprep.mubr.f32.mxu0 0.0
        %3103 = vmatmul.mubr.f32.gmra.mrb[0].mxu0 %v3036
        %v3104 = vpop.f32.mrb[0].mxu0
        %v3105 = vadd.f32 %v1306, %v3104
        %v3106 = vpop.f32.mrb[0].mxu0
        %3107 = vdwg.mxu0
        %v3108 = vmax.f32 %v3105, 0.0
        %v3110 = vsel %vm954, %v3108, 0
        %3112 = vmatprep.subr.mxu0 0.0
        %3113 = vmatpush1.msra.mxu0 %v1211
        %3114 = vmatprep.subr.mxu0 0.0
        %3115 = vmatpush1.msra.mxu0 %v1212
        %3116 = vmatprep.subr.mxu0 0.0
        %3117 = vmatpush1.msra.mxu0 %v1213
        %3118 = vmatprep.subr.mxu0 0.0
        %3119 = vmatpush1.msra.mxu0 %v1214
        %3120 = vmatprep.subr.mxu0 0.0
        %3121 = vmatpush1.msra.mxu0 0.0
        %3122 = vmatprep.subr.mxu0 0.0
        %3123 = vmatpush1.msra.mxu0 0.0
        %3124 = vmatprep.subr.mxu0 0.0
        %3125 = vmatpush1.msra.mxu0 0.0
        %3126 = vmatprep.subr.mxu0 0.0
        %3127 = vmatpush1.msra.mxu0 0.0
        %3128 = vmatprep.subr.mxu0 0.0
        %3129 = vmatpush1.msra.mxu0 0.0
        %3130 = vmatprep.subr.mxu0 0.0
        %3131 = vmatpush1.msra.mxu0 0.0
        %3132 = vmatprep.subr.mxu0 0.0
        %3133 = vmatpush1.msra.mxu0 0.0
        %3134 = vmatprep.subr.mxu0 0.0
        %3135 = vmatpush1.msra.mxu0 0.0
        %3136 = vmatprep.subr.mxu0 0.0
        %3137 = vmatpush1.msra.mxu0 0.0
        %3138 = vmatprep.subr.mxu0 0.0
        %3139 = vmatpush1.msra.mxu0 0.0
        %3140 = vmatprep.subr.mxu0 0.0
        %3141 = vmatpush1.msra.mxu0 0.0
        %3142 = vmatprep.subr.mxu0 0.0
        %3143 = vmatpush1.msra.mxu0 0.0
        %3144 = vmatprep.subr.mxu0 0.0
        %3145 = vmatpush1.msra.mxu0 0.0
        %3146 = vmatprep.subr.mxu0 0.0
        %3147 = vmatpush1.msra.mxu0 0.0
        %3148 = vmatprep.subr.mxu0 0.0
        %3149 = vmatpush1.msra.mxu0 0.0
        %3150 = vmatprep.subr.mxu0 0.0
        %3151 = vmatpush1.msra.mxu0 0.0
        %3152 = vmatprep.subr.mxu0 0.0
        %3153 = vmatpush1.msra.mxu0 0.0
        %3154 = vmatprep.subr.mxu0 0.0
        %3155 = vmatpush1.msra.mxu0 0.0
        %3156 = vmatprep.subr.mxu0 0.0
        %3157 = vmatpush1.msra.mxu0 0.0
        %3158 = vmatprep.subr.mxu0 0.0
        %3159 = vmatpush1.msra.mxu0 0.0
        %3160 = vmatprep.subr.mxu0 0.0
        %3161 = vmatpush1.msra.mxu0 0.0
        %3162 = vmatprep.subr.mxu0 0.0
        %3163 = vmatpush1.msra.mxu0 0.0
        %3164 = vmatprep.subr.mxu0 0.0
        %3165 = vmatpush1.msra.mxu0 0.0
        %3166 = vmatprep.subr.mxu0 0.0
        %3167 = vmatpush1.msra.mxu0 0.0
        %3168 = vmatprep.subr.mxu0 0.0
        %3169 = vmatpush1.msra.mxu0 0.0
        %3170 = vmatprep.subr.mxu0 0.0
        %3171 = vmatpush1.msra.mxu0 0.0
        %3172 = vmatprep.subr.mxu0 0.0
        %3173 = vmatpush1.msra.mxu0 0.0
        %3174 = vmatprep.subr.mxu0 0.0
        %3175 = vmatpush1.msra.mxu0 0.0
        %3176 = vmatprep.mubr.f32.mxu0 0.0
        %3177 = vmatmul.mubr.f32.gmra.mrb[0].mxu0 %v3110
        %v3178 = vpop.f32.mrb[0].mxu0
        %v3179 = vadd.f32 %v1386, %v3178
        %v3180 = vpop.f32.mrb[0].mxu0
        %3181 = vdwg.mxu0
        %v3182 = vsub.f32 0.0, %v3179
        %v3183 = vmul.f32 %v3182, 1.442695
        %v3184 = vpow.pop %v3183
        %v3185 = vadd.f32 %v3184, 1.0
        %v3186 = vrcp.pop %v3185
        %v3187 = vmul.f32 1.0, %v3186
        %3189 = vrot.lane.b32.xlu0 %v3187, 112
        %v3190 = vpop.permute.xlu0 %3189
        %vm3192 = vcmask 1048448
        %3193 = vst.msk [vmem:[%s838] sm:$0xff] %vm3192, %v3190
        %s3194 = sand.u32 %s408, 1
        %s3195 = scalar_lea.sflag [#allocation4], %s3194
        %s3196 = sand.u32 %s408, 1
        %s3197 = smul.addr %s3196, 8
        %s3198 = scalar_lea.vmem [#allocation28], %s3197
        %s3199 = sand.u32 %s49, 1
        %s3200 = scalar_lea.sflag [#allocation30], %s3199
        %s3201 = sand.u32 %s434, 1
        %s3202 = smul.addr %s3201, 8
        %s3203 = scalar_lea.vmem [#allocation29], %s3202
        %s3204 = sand.u32 %s49, 1
        %s3205 = scalar_lea.sflag [#allocation30], %s3204
        %s3206 = sand.u32 %s460, 1
        %s3207 = smul.addr %s3206, 8
        %s3208 = scalar_lea.vmem [#allocation31], %s3207
        // Predicated region
        $region149: #{tpu_custom_call.1} parent=83 // pred_check
          %p3209 = pneg %p418
        $region150: #{tpu_custom_call.1} parent=83 // pred_check_branch
          %3211 = sbr.rel (%p3209) target = $region152
        $region151: #{tpu_custom_call.1} parent=83 // pred_region
          %s3213 = ssub.s32 128, 128
          %3214 = vsyncadd %s3195, %s3213
          %s3215 = smul.addr %s49, 128
          %s3216 = scalar_lea.hbm %s16, %s3215
          %s3218 = sshll.u32 %s3198, 4
          %s3219 = int_to_ptr.vmem [resolvable:$true] %s3218
          %3221 = dma.vmem_to_hbm [thread:$0]  %s3219, 128, %s3216, %s3195
        $region152: #{tpu_custom_call.1} parent=83 // pred_fallthru
          _
        // Predicated region
        $region153: #{tpu_custom_call.1} parent=83 // pred_check
          %p3222 = pneg %p444
        $region154: #{tpu_custom_call.1} parent=83 // pred_check_branch
          %3224 = sbr.rel (%p3222) target = $region156
        $region155: #{tpu_custom_call.1} parent=83 // pred_region
          %s3226 = ssub.s32 128, 128
          %3227 = vsyncadd %s3200, %s3226
          %s3228 = smul.addr %s49, 128
          %s3229 = scalar_lea.hbm %s17, %s3228
          %s3231 = sshll.u32 %s3203, 4
          %s3232 = int_to_ptr.vmem [resolvable:$true] %s3231
          %3234 = dma.vmem_to_hbm [thread:$0]  %s3232, 128, %s3229, %s3200
        $region156: #{tpu_custom_call.1} parent=83 // pred_fallthru
          _
        // Predicated region
        $region157: #{tpu_custom_call.1} parent=83 // pred_check
          %p3235 = pneg %p470
        $region158: #{tpu_custom_call.1} parent=83 // pred_check_branch
          %3237 = sbr.rel (%p3235) target = $region160
        $region159: #{tpu_custom_call.1} parent=83 // pred_region
          %s3239 = ssub.s32 128, 128
          %3240 = vsyncadd %s3205, %s3239
          %s3241 = smul.addr %s49, 128
          %s3242 = scalar_lea.hbm %s18, %s3241
          %s3244 = sshll.u32 %s3208, 4
          %s3245 = int_to_ptr.vmem [resolvable:$true] %s3244
          %3247 = dma.vmem_to_hbm [thread:$0]  %s3245, 128, %s3242, %s3205
        $region160: #{tpu_custom_call.1} parent=83 // pred_fallthru
          _
      $region84: #{tpu_custom_call.1} parent=5 // pred_fallthru
        _
      %p3248 = scmp.le.s32.totalorder 2, %s44
      // Predicated region
      $region161: #{tpu_custom_call.1} parent=5 // pred_check
        %p3249 = pneg %p3248
      $region162: #{tpu_custom_call.1} parent=5 // pred_check_branch
        %3251 = sbr.rel (%p3249) target = $region164
      $region163: #{tpu_custom_call.1} parent=5 // pred_region
        %s3252 = ssub.s32 %s44, 2
        // Predicated region
        $region165: #{tpu_custom_call.1} parent=163 // pred_check
          %p3253 = pneg %p424
        $region166: #{tpu_custom_call.1} parent=163 // pred_check_branch
          %3255 = sbr.rel (%p3253) target = $region168
        $region167: #{tpu_custom_call.1} parent=163 // pred_region
          %s3256 = sand.u32 %s409, 1
          %s3257 = scalar_lea.sflag [#allocation4], %s3256
          %s3258 = sand.u32 %s409, 1
          %s3259 = smul.addr %s3258, 8
          %s3260 = scalar_lea.vmem [#allocation28], %s3259
          %3261 = dma.done %s3257, 128
        $region168: #{tpu_custom_call.1} parent=163 // pred_fallthru
          _
        // Predicated region
        $region169: #{tpu_custom_call.1} parent=163 // pred_check
          %p3262 = pneg %p450
        $region170: #{tpu_custom_call.1} parent=163 // pred_check_branch
          %3264 = sbr.rel (%p3262) target = $region172
        $region171: #{tpu_custom_call.1} parent=163 // pred_region
          %s3265 = sand.u32 %s50, 1
          %s3266 = scalar_lea.sflag [#allocation30], %s3265
          %s3267 = sand.u32 %s435, 1
          %s3268 = smul.addr %s3267, 8
          %s3269 = scalar_lea.vmem [#allocation29], %s3268
          %3270 = dma.done %s3266, 128
        $region172: #{tpu_custom_call.1} parent=163 // pred_fallthru
          _
        // Predicated region
        $region173: #{tpu_custom_call.1} parent=163 // pred_check
          %p3271 = pneg %p476
        $region174: #{tpu_custom_call.1} parent=163 // pred_check_branch
          %3273 = sbr.rel (%p3271) target = $region176
        $region175: #{tpu_custom_call.1} parent=163 // pred_region
          %s3274 = sand.u32 %s50, 1
          %s3275 = scalar_lea.sflag [#allocation30], %s3274
          %s3276 = sand.u32 %s461, 1
          %s3277 = smul.addr %s3276, 8
          %s3278 = scalar_lea.vmem [#allocation31], %s3277
          %3279 = dma.done %s3275, 128
        $region176: #{tpu_custom_call.1} parent=163 // pred_fallthru
          _
      $region164: #{tpu_custom_call.1} parent=5 // pred_fallthru
        _
    $region6: #{tpu_custom_call.1} parent=1 // loop_footer
      %s48 = sadd.s32 1, %s44
    $region7: #{tpu_custom_call.1} parent=1 // loop_footer_branch
      %43 = sbr.rel target = $region3
    $region8: #{tpu_custom_call.1} parent=1 // loop_exit
      _
    %3280 = vsyncpa [#allocation3], 1
    %s3281 = scalar_lea.sflag [#allocation3], 1
    %3282 = vsyncpa %s3281, 1
    %3283 = vsyncpa [#allocation6], 1
    %s3284 = scalar_lea.sflag [#allocation6], 1
    %3285 = vsyncpa %s3284, 1
    %3286 = vsyncpa [#allocation9], 1
    %3287 = vsyncpa [#allocation12], 1
    %3288 = vsyncpa [#allocation15], 1
    %3289 = vsyncpa [#allocation18], 1
    %3290 = vsyncpa [#allocation21], 1
    %3291 = vsyncpa [#allocation24], 1
    %3292 = vsyncpa [#allocation27], 1
    %3293 = vsyncpa [#allocation4], 1
    %s3294 = scalar_lea.sflag [#allocation4], 1
    %3295 = vsyncpa %s3294, 1
    %3296 = vsyncpa [#allocation30], 1
    %s3297 = scalar_lea.sflag [#allocation30], 1
    %3298 = vsyncpa %s3297, 1

</llo_original>
